<compile_context>
chip_gen: v5e
topology: v5e:2x2
jax: 0.10.0
libtpu: 0.0.40
codegen_flags: <defaults>
</compile_context>

<pallas_src>
import functools
import math

import jax
import jax.numpy as jnp
from jax.experimental import pallas as pl
from jax.experimental.pallas import tpu as pltpu

LANE = 128
SUBLANE = 8


def _round_up(v, m):
    return -(-v // m) * m


# --------------------------------------------------------------------------
# Fully fused forward kernel: all TemporalBlocks + composite MLP in one call.
# --------------------------------------------------------------------------
def _tcn_fused_kernel(*refs, block_has_ds):
    x_ref = refs[0]
    o_ref = refs[-1]
    params = iter(refs[1:-1])

    def shift_rows(v, d):
        # v: [T, N] f32.  Returns w with w[t] = v[t-d] for t >= d, else 0.
        rows, cols = v.shape
        rolled = pltpu.roll(v, shift=d, axis=0)            # rolled[t] = v[(t-d) % T]
        row_idx = jax.lax.broadcasted_iota(jnp.int32, (rows, cols), 0)
        return jnp.where(row_idx >= d, rolled, jnp.zeros_like(rolled))

    def dilated_conv(h, wa_ref, wb_ref, b_ref, d):
        # y[t] = Wa^T h[t-d] + Wb^T h[t] + b  (causal, zero history).
        # Conv is linear, so the temporal shift is applied to the f32 matmul
        # result instead of materializing a shifted copy of h (no im2col).
        ua = jnp.dot(h, wa_ref[...], preferred_element_type=jnp.float32)
        ub = jnp.dot(h, wb_ref[...], preferred_element_type=jnp.float32)
        return shift_rows(ua, d) + ub + b_ref[...]

    h = x_ref[0]                                            # [Tp, C0p] bf16

    for i, has_ds in enumerate(block_has_ds):
        d = 2 ** i                                          # dilation of level i
        w1a, w1b, b1 = next(params), next(params), next(params)
        w2a, w2b, b2 = next(params), next(params), next(params)
        h_in = h
        # conv1 -> chomp -> ReLU      (dropout = identity at inference)
        h1 = jnp.maximum(dilated_conv(h, w1a, w1b, b1, d), 0.0).astype(jnp.bfloat16)
        # conv2 -> chomp -> ReLU      (dropout = identity at inference)
        out = jnp.maximum(dilated_conv(h1, w2a, w2b, b2, d), 0.0)
        # residual (identity or 1x1 downsample conv), then final ReLU
        if has_ds:
            wd, bd = next(params), next(params)
            res = jnp.dot(h_in, wd[...], preferred_element_type=jnp.float32) + bd[...]
        else:
            res = h_in.astype(jnp.float32)
        h = jnp.maximum(out + res, 0.0).astype(jnp.bfloat16)

    # composite head: Linear+ReLU, Linear+ReLU, Linear(->1)   (dropout = id)
    cw1, cb1 = next(params), next(params)
    cw2, cb2 = next(params), next(params)
    cw3, cb3 = next(params), next(params)
    hf = jnp.maximum(
        jnp.dot(h, cw1[...], preferred_element_type=jnp.float32) + cb1[...], 0.0
    ).astype(jnp.bfloat16)
    hf = jnp.maximum(
        jnp.dot(hf, cw2[...], preferred_element_type=jnp.float32) + cb2[...], 0.0
    ).astype(jnp.bfloat16)
    y = jnp.dot(hf, cw3[...], preferred_element_type=jnp.float32) + cb3[...]
    o_ref[0] = y.astype(o_ref.dtype)


# --------------------------------------------------------------------------
# Parameter init: weights stored pre-padded / pre-cast in GEMM layout.
#   conv taps: [Cin_pad, Cout_pad] bf16 (tap 'a' hits x[t-d], tap 'b' hits x[t])
#   biases   : [1, Cout_pad] f32
# TODO(synk): weight_norm (g * v/||v||) is folded into these effective weights
# for inference; the g/v decomposition itself is not represented.
# --------------------------------------------------------------------------
def init_params(key, num_inputs, num_channels, c_param, *, dtype=jnp.bfloat16):
    def pad_w(w, kp, np_):
        k, n = w.shape
        return jnp.pad(w, ((0, kp - k), (0, np_ - n))).astype(dtype)

    def pad_b(b, np_):
        return jnp.pad(b, (0, np_ - b.shape[0])).reshape(1, np_).astype(jnp.float32)

    keys = jax.random.split(key, len(num_channels) + 3)
    blocks = []
    c_prev = num_inputs
    for i, c_out in enumerate(num_channels):
        bk = jax.random.split(keys[i], 3)
        kp_in, np_out = _round_up(c_prev, LANE), _round_up(c_out, LANE)
        # PyTorch Conv1d weight is [out, in, k]; after the causal chomp,
        # tap 0 multiplies x[t-d] and tap 1 multiplies x[t].
        w1 = 0.01 * jax.random.normal(bk[0], (2, c_prev, c_out), jnp.float32)
        w2 = 0.01 * jax.random.normal(bk[1], (2, c_out, c_out), jnp.float32)
        blk = {
            "w1a": pad_w(w1[0], kp_in, np_out),
            "w1b": pad_w(w1[1], kp_in, np_out),
            "b1": pad_b(jnp.zeros((c_out,), jnp.float32), np_out),
            "w2a": pad_w(w2[0], np_out, np_out),
            "w2b": pad_w(w2[1], np_out, np_out),
            "b2": pad_b(jnp.zeros((c_out,), jnp.float32), np_out),
        }
        if c_prev != c_out:
            wd = 0.01 * jax.random.normal(bk[2], (c_prev, c_out), jnp.float32)
            blk["wd"] = pad_w(wd, kp_in, np_out)
            blk["bd"] = pad_b(jnp.zeros((c_out,), jnp.float32), np_out)
        blocks.append(blk)
        c_prev = c_out

    def lin_init(k, fan_in, fan_out):
        lim = 1.0 / math.sqrt(fan_in)
        kk = jax.random.split(k, 2)
        w = jax.random.uniform(kk[0], (fan_in, fan_out), jnp.float32, -lim, lim)
        b = jax.random.uniform(kk[1], (fan_out,), jnp.float32, -lim, lim)
        return (pad_w(w, _round_up(fan_in, LANE), _round_up(fan_out, LANE)),
                pad_b(b, _round_up(fan_out, LANE)))

    c_w1, c_b1 = lin_init(keys[-3], num_channels[-1], c_param[0])
    c_w2, c_b2 = lin_init(keys[-2], c_param[0], c_param[1])
    c_w3, c_b3 = lin_init(keys[-1], c_param[1], 1)
    return dict(blocks=blocks, c_w1=c_w1, c_b1=c_b1,
                c_w2=c_w2, c_b2=c_b2, c_w3=c_w3, c_b3=c_b3)


# --------------------------------------------------------------------------
# Forward pass: one pallas_call for the whole network.
# --------------------------------------------------------------------------
def temporal_conv_static_e_forward(params, x, s):
    """x: [B, C_x, T] temporal features; s: [B, num_static] static features."""
    B, cx, T = x.shape
    ns = s.shape[-1]
    tp = _round_up(T, SUBLANE)

    blocks = params["blocks"]
    c0p = blocks[0]["w1a"].shape[0]          # padded input-channel width
    nout_p = params["c_w3"].shape[1]         # padded (lane-dense) output width
    assert cx + ns <= c0p

    # s.unsqueeze(-1).repeat(1, 1, T); cat((x, s), dim=1)  -- done time-major.
    h = jnp.transpose(x, (0, 2, 1))                                   # [B, T, Cx]
    s_rep = jnp.broadcast_to(s[:, None, :], (B, T, ns))
    h = jnp.concatenate([h, s_rep], axis=-1)
    h = jnp.pad(h, ((0, 0), (0, tp - T), (0, c0p - (cx + ns)))).astype(jnp.bfloat16)

    # Flatten parameters in the exact order the kernel consumes them.
    flat, has_ds = [], []
    for blk in blocks:
        flat += [blk["w1a"], blk["w1b"], blk["b1"],
                 blk["w2a"], blk["w2b"], blk["b2"]]
        ds = "wd" in blk
        has_ds.append(ds)
        if ds:
            flat += [blk["wd"], blk["bd"]]
    flat += [params["c_w1"], params["c_b1"], params["c_w2"], params["c_b2"],
             params["c_w3"], params["c_b3"]]

    in_specs = [pl.BlockSpec((1, tp, c0p), lambda b: (b, 0, 0))]
    for p in flat:
        # full-array blocks, same block every grid step -> stay VMEM-resident
        in_specs.append(pl.BlockSpec(p.shape, lambda b: (0, 0)))

    # Advisory cost: every 2-D weight with >1 rows feeds exactly one MXU dot.
    flops = B * sum(2 * tp * p.shape[0] * p.shape[1]
                    for p in flat if p.shape[0] > 1)
    bytes_params = sum(p.size * p.dtype.itemsize for p in flat)
    bytes_acc = int(h.size * h.dtype.itemsize + B * tp * nout_p * 4 + bytes_params)
    cost = pl.CostEstimate(flops=int(flops), transcendentals=0,
                           bytes_accessed=bytes_acc)

    out = pl.pallas_call(
        functools.partial(_tcn_fused_kernel, block_has_ds=tuple(has_ds)),
        out_shape=jax.ShapeDtypeStruct((B, tp, nout_p), jnp.float32),
        grid=(B,),
        in_specs=in_specs,
        out_specs=pl.BlockSpec((1, tp, nout_p), lambda b: (b, 0, 0)),
        compiler_params=pltpu.CompilerParams(
            dimension_semantics=("parallel",)),
        cost_estimate=cost,
    )(h, *flat)

    # The only wrapper-side slice: drop time padding and keep lane 0.
    return out[:, :T, :1]


# --------------------------------------------------------------------------
if __name__ == "__main__":
    B, T = 2, 16
    num_static = 4
    cx = 12
    num_inputs = cx + num_static          # channels after cat((x, s), dim=1)
    num_channels = [32, 32, 32, 32]       # 4 levels -> dilations 1, 2, 4, 8
    c_param = [32, 32, 0.2]

    key = jax.random.PRNGKey(0)
    k_x, k_s, k_p = jax.random.split(key, 3)
    x = jax.random.normal(k_x, (B, cx, T), jnp.float32)
    s = jax.random.normal(k_s, (B, num_static), jnp.float32)
    params = init_params(k_p, num_inputs, num_channels, c_param)

    forward = jax.jit(temporal_conv_static_e_forward)
    out = forward(params, x, s)
    out = jax.block_until_ready(out)

    assert out.shape == (B, T, 1), out.shape
    assert bool(jnp.all(jnp.isfinite(out)))
    print("KERNEL_OK")
</pallas_src>

<mosaic_0001>
module attributes {stable_mosaic.version = 11 : i64} {
  func.func @_tcn_fused_kernel(%arg0: i32, %arg1: memref<1x16x128xbf16, #tpu.memory_space<vmem>>, %arg2: memref<128x128xbf16, #tpu.memory_space<vmem>>, %arg3: memref<128x128xbf16, #tpu.memory_space<vmem>>, %arg4: memref<1x128xf32, #tpu.memory_space<vmem>>, %arg5: memref<128x128xbf16, #tpu.memory_space<vmem>>, %arg6: memref<128x128xbf16, #tpu.memory_space<vmem>>, %arg7: memref<1x128xf32, #tpu.memory_space<vmem>>, %arg8: memref<128x128xbf16, #tpu.memory_space<vmem>>, %arg9: memref<1x128xf32, #tpu.memory_space<vmem>>, %arg10: memref<128x128xbf16, #tpu.memory_space<vmem>>, %arg11: memref<128x128xbf16, #tpu.memory_space<vmem>>, %arg12: memref<1x128xf32, #tpu.memory_space<vmem>>, %arg13: memref<128x128xbf16, #tpu.memory_space<vmem>>, %arg14: memref<128x128xbf16, #tpu.memory_space<vmem>>, %arg15: memref<1x128xf32, #tpu.memory_space<vmem>>, %arg16: memref<128x128xbf16, #tpu.memory_space<vmem>>, %arg17: memref<128x128xbf16, #tpu.memory_space<vmem>>, %arg18: memref<1x128xf32, #tpu.memory_space<vmem>>, %arg19: memref<128x128xbf16, #tpu.memory_space<vmem>>, %arg20: memref<128x128xbf16, #tpu.memory_space<vmem>>, %arg21: memref<1x128xf32, #tpu.memory_space<vmem>>, %arg22: memref<128x128xbf16, #tpu.memory_space<vmem>>, %arg23: memref<128x128xbf16, #tpu.memory_space<vmem>>, %arg24: memref<1x128xf32, #tpu.memory_space<vmem>>, %arg25: memref<128x128xbf16, #tpu.memory_space<vmem>>, %arg26: memref<128x128xbf16, #tpu.memory_space<vmem>>, %arg27: memref<1x128xf32, #tpu.memory_space<vmem>>, %arg28: memref<128x128xbf16, #tpu.memory_space<vmem>>, %arg29: memref<1x128xf32, #tpu.memory_space<vmem>>, %arg30: memref<128x128xbf16, #tpu.memory_space<vmem>>, %arg31: memref<1x128xf32, #tpu.memory_space<vmem>>, %arg32: memref<128x128xbf16, #tpu.memory_space<vmem>>, %arg33: memref<1x128xf32, #tpu.memory_space<vmem>>, %arg34: memref<1x16x128xf32, #tpu.memory_space<vmem>>) attributes {dimension_semantics = [#tpu.dimension_semantics<parallel>], iteration_bounds = array<i64: 2>, scalar_prefetch = 0 : i64, scratch_operands = 0 : i64, tpu.core_type = #tpu.core_type<tc>, window_params = [{transform_indices = @transform_0, window_bounds = array<i64: 1, 16, 128>}, {pipeline_mode = #tpu.pipeline_mode<synchronous>, transform_indices = @transform_1, window_bounds = array<i64: 128, 128>}, {pipeline_mode = #tpu.pipeline_mode<synchronous>, transform_indices = @transform_2, window_bounds = array<i64: 128, 128>}, {pipeline_mode = #tpu.pipeline_mode<synchronous>, transform_indices = @transform_3, window_bounds = array<i64: 1, 128>}, {pipeline_mode = #tpu.pipeline_mode<synchronous>, transform_indices = @transform_4, window_bounds = array<i64: 128, 128>}, {pipeline_mode = #tpu.pipeline_mode<synchronous>, transform_indices = @transform_5, window_bounds = array<i64: 128, 128>}, {pipeline_mode = #tpu.pipeline_mode<synchronous>, transform_indices = @transform_6, window_bounds = array<i64: 1, 128>}, {pipeline_mode = #tpu.pipeline_mode<synchronous>, transform_indices = @transform_7, window_bounds = array<i64: 128, 128>}, {pipeline_mode = #tpu.pipeline_mode<synchronous>, transform_indices = @transform_8, window_bounds = array<i64: 1, 128>}, {pipeline_mode = #tpu.pipeline_mode<synchronous>, transform_indices = @transform_9, window_bounds = array<i64: 128, 128>}, {pipeline_mode = #tpu.pipeline_mode<synchronous>, transform_indices = @transform_10, window_bounds = array<i64: 128, 128>}, {pipeline_mode = #tpu.pipeline_mode<synchronous>, transform_indices = @transform_11, window_bounds = array<i64: 1, 128>}, {pipeline_mode = #tpu.pipeline_mode<synchronous>, transform_indices = @transform_12, window_bounds = array<i64: 128, 128>}, {pipeline_mode = #tpu.pipeline_mode<synchronous>, transform_indices = @transform_13, window_bounds = array<i64: 128, 128>}, {pipeline_mode = #tpu.pipeline_mode<synchronous>, transform_indices = @transform_14, window_bounds = array<i64: 1, 128>}, {pipeline_mode = #tpu.pipeline_mode<synchronous>, transform_indices = @transform_15, window_bounds = array<i64: 128, 128>}, {pipeline_mode = #tpu.pipeline_mode<synchronous>, transform_indices = @transform_16, window_bounds = array<i64: 128, 128>}, {pipeline_mode = #tpu.pipeline_mode<synchronous>, transform_indices = @transform_17, window_bounds = array<i64: 1, 128>}, {pipeline_mode = #tpu.pipeline_mode<synchronous>, transform_indices = @transform_18, window_bounds = array<i64: 128, 128>}, {pipeline_mode = #tpu.pipeline_mode<synchronous>, transform_indices = @transform_19, window_bounds = array<i64: 128, 128>}, {pipeline_mode = #tpu.pipeline_mode<synchronous>, transform_indices = @transform_20, window_bounds = array<i64: 1, 128>}, {pipeline_mode = #tpu.pipeline_mode<synchronous>, transform_indices = @transform_21, window_bounds = array<i64: 128, 128>}, {pipeline_mode = #tpu.pipeline_mode<synchronous>, transform_indices = @transform_22, window_bounds = array<i64: 128, 128>}, {pipeline_mode = #tpu.pipeline_mode<synchronous>, transform_indices = @transform_23, window_bounds = array<i64: 1, 128>}, {pipeline_mode = #tpu.pipeline_mode<synchronous>, transform_indices = @transform_24, window_bounds = array<i64: 128, 128>}, {pipeline_mode = #tpu.pipeline_mode<synchronous>, transform_indices = @transform_25, window_bounds = array<i64: 128, 128>}, {pipeline_mode = #tpu.pipeline_mode<synchronous>, transform_indices = @transform_26, window_bounds = array<i64: 1, 128>}, {pipeline_mode = #tpu.pipeline_mode<synchronous>, transform_indices = @transform_27, window_bounds = array<i64: 128, 128>}, {pipeline_mode = #tpu.pipeline_mode<synchronous>, transform_indices = @transform_28, window_bounds = array<i64: 1, 128>}, {pipeline_mode = #tpu.pipeline_mode<synchronous>, transform_indices = @transform_29, window_bounds = array<i64: 128, 128>}, {pipeline_mode = #tpu.pipeline_mode<synchronous>, transform_indices = @transform_30, window_bounds = array<i64: 1, 128>}, {pipeline_mode = #tpu.pipeline_mode<synchronous>, transform_indices = @transform_31, window_bounds = array<i64: 128, 128>}, {pipeline_mode = #tpu.pipeline_mode<synchronous>, transform_indices = @transform_32, window_bounds = array<i64: 1, 128>}, {transform_indices = @transform_33, window_bounds = array<i64: 1, 16, 128>}]} {
    %c0 = arith.constant 0 : index
    %c0_0 = arith.constant 0 : index
    %c0_1 = arith.constant 0 : index
    %0 = vector.load %arg1[%c0, %c0_0, %c0_1] : memref<1x16x128xbf16, #tpu.memory_space<vmem>>, vector<1x16x128xbf16>
    %1 = vector.shape_cast %0 : vector<1x16x128xbf16> to vector<16x128xbf16>
    %c0_2 = arith.constant 0 : index
    %c0_3 = arith.constant 0 : index
    %2 = vector.load %arg2[%c0_2, %c0_3] : memref<128x128xbf16, #tpu.memory_space<vmem>>, vector<128x128xbf16>
    %cst = arith.constant dense<0.000000e+00> : vector<16x128xf32>
    %3 = tpu.matmul %1, %2, %cst {dimension_numbers = #tpu.dot_dimension_numbers<[1], [0], [0], [1], [0, 0, 1, 1], [], []>} : vector<16x128xbf16>, vector<128x128xbf16>, vector<16x128xf32> -> vector<16x128xf32>
    %c0_4 = arith.constant 0 : index
    %c0_5 = arith.constant 0 : index
    %4 = vector.load %arg3[%c0_4, %c0_5] : memref<128x128xbf16, #tpu.memory_space<vmem>>, vector<128x128xbf16>
    %cst_6 = arith.constant dense<0.000000e+00> : vector<16x128xf32>
    %5 = tpu.matmul %1, %4, %cst_6 {dimension_numbers = #tpu.dot_dimension_numbers<[1], [0], [0], [1], [0, 0, 1, 1], [], []>} : vector<16x128xbf16>, vector<128x128xbf16>, vector<16x128xf32> -> vector<16x128xf32>
    %c1_i32 = arith.constant 1 : i32
    %6 = tpu.dynamic_rotate %3 by %c1_i32 dim 0 : vector<16x128xf32>, i32 -> vector<16x128xf32>
    %7 = tpu.iota {dimensions = array<i32: 0>} : vector<16x128xi32>
    %c1_i32_7 = arith.constant 1 : i32
    %8 = vector.broadcast %c1_i32_7 : i32 to vector<16x128xi32>
    %9 = arith.cmpi sge, %7, %8 : vector<16x128xi32>
    %cst_8 = arith.constant 0.000000e+00 : f32
    %10 = vector.broadcast %cst_8 : f32 to vector<16x128xf32>
    %11 = arith.select %9, %6, %10 : vector<16x128xi1>, vector<16x128xf32>
    %12 = arith.addf %11, %5 : vector<16x128xf32>
    %c0_9 = arith.constant 0 : index
    %c0_10 = arith.constant 0 : index
    %13 = vector.load %arg4[%c0_9, %c0_10] : memref<1x128xf32, #tpu.memory_space<vmem>>, vector<1x128xf32>
    %14 = vector.broadcast %13 : vector<1x128xf32> to vector<16x128xf32>
    %15 = arith.addf %12, %14 : vector<16x128xf32>
    %cst_11 = arith.constant 0.000000e+00 : f32
    %16 = vector.broadcast %cst_11 : f32 to vector<16x128xf32>
    %17 = arith.maximumf %15, %16 : vector<16x128xf32>
    %18 = arith.truncf %17 : vector<16x128xf32> to vector<16x128xbf16>
    %c0_12 = arith.constant 0 : index
    %c0_13 = arith.constant 0 : index
    %19 = vector.load %arg5[%c0_12, %c0_13] : memref<128x128xbf16, #tpu.memory_space<vmem>>, vector<128x128xbf16>
    %cst_14 = arith.constant dense<0.000000e+00> : vector<16x128xf32>
    %20 = tpu.matmul %18, %19, %cst_14 {dimension_numbers = #tpu.dot_dimension_numbers<[1], [0], [0], [1], [0, 0, 1, 1], [], []>} : vector<16x128xbf16>, vector<128x128xbf16>, vector<16x128xf32> -> vector<16x128xf32>
    %c0_15 = arith.constant 0 : index
    %c0_16 = arith.constant 0 : index
    %21 = vector.load %arg6[%c0_15, %c0_16] : memref<128x128xbf16, #tpu.memory_space<vmem>>, vector<128x128xbf16>
    %cst_17 = arith.constant dense<0.000000e+00> : vector<16x128xf32>
    %22 = tpu.matmul %18, %21, %cst_17 {dimension_numbers = #tpu.dot_dimension_numbers<[1], [0], [0], [1], [0, 0, 1, 1], [], []>} : vector<16x128xbf16>, vector<128x128xbf16>, vector<16x128xf32> -> vector<16x128xf32>
    %c1_i32_18 = arith.constant 1 : i32
    %23 = tpu.dynamic_rotate %20 by %c1_i32_18 dim 0 : vector<16x128xf32>, i32 -> vector<16x128xf32>
    %24 = tpu.iota {dimensions = array<i32: 0>} : vector<16x128xi32>
    %c1_i32_19 = arith.constant 1 : i32
    %25 = vector.broadcast %c1_i32_19 : i32 to vector<16x128xi32>
    %26 = arith.cmpi sge, %24, %25 : vector<16x128xi32>
    %cst_20 = arith.constant 0.000000e+00 : f32
    %27 = vector.broadcast %cst_20 : f32 to vector<16x128xf32>
    %28 = arith.select %26, %23, %27 : vector<16x128xi1>, vector<16x128xf32>
    %29 = arith.addf %28, %22 : vector<16x128xf32>
    %c0_21 = arith.constant 0 : index
    %c0_22 = arith.constant 0 : index
    %30 = vector.load %arg7[%c0_21, %c0_22] : memref<1x128xf32, #tpu.memory_space<vmem>>, vector<1x128xf32>
    %31 = vector.broadcast %30 : vector<1x128xf32> to vector<16x128xf32>
    %32 = arith.addf %29, %31 : vector<16x128xf32>
    %cst_23 = arith.constant 0.000000e+00 : f32
    %33 = vector.broadcast %cst_23 : f32 to vector<16x128xf32>
    %34 = arith.maximumf %32, %33 : vector<16x128xf32>
    %c0_24 = arith.constant 0 : index
    %c0_25 = arith.constant 0 : index
    %35 = vector.load %arg8[%c0_24, %c0_25] : memref<128x128xbf16, #tpu.memory_space<vmem>>, vector<128x128xbf16>
    %cst_26 = arith.constant dense<0.000000e+00> : vector<16x128xf32>
    %36 = tpu.matmul %1, %35, %cst_26 {dimension_numbers = #tpu.dot_dimension_numbers<[1], [0], [0], [1], [0, 0, 1, 1], [], []>} : vector<16x128xbf16>, vector<128x128xbf16>, vector<16x128xf32> -> vector<16x128xf32>
    %c0_27 = arith.constant 0 : index
    %c0_28 = arith.constant 0 : index
    %37 = vector.load %arg9[%c0_27, %c0_28] : memref<1x128xf32, #tpu.memory_space<vmem>>, vector<1x128xf32>
    %38 = vector.broadcast %37 : vector<1x128xf32> to vector<16x128xf32>
    %39 = arith.addf %36, %38 : vector<16x128xf32>
    %40 = arith.addf %34, %39 : vector<16x128xf32>
    %cst_29 = arith.constant 0.000000e+00 : f32
    %41 = vector.broadcast %cst_29 : f32 to vector<16x128xf32>
    %42 = arith.maximumf %40, %41 : vector<16x128xf32>
    %43 = arith.truncf %42 : vector<16x128xf32> to vector<16x128xbf16>
    %c0_30 = arith.constant 0 : index
    %c0_31 = arith.constant 0 : index
    %44 = vector.load %arg10[%c0_30, %c0_31] : memref<128x128xbf16, #tpu.memory_space<vmem>>, vector<128x128xbf16>
    %cst_32 = arith.constant dense<0.000000e+00> : vector<16x128xf32>
    %45 = tpu.matmul %43, %44, %cst_32 {dimension_numbers = #tpu.dot_dimension_numbers<[1], [0], [0], [1], [0, 0, 1, 1], [], []>} : vector<16x128xbf16>, vector<128x128xbf16>, vector<16x128xf32> -> vector<16x128xf32>
    %c0_33 = arith.constant 0 : index
    %c0_34 = arith.constant 0 : index
    %46 = vector.load %arg11[%c0_33, %c0_34] : memref<128x128xbf16, #tpu.memory_space<vmem>>, vector<128x128xbf16>
    %cst_35 = arith.constant dense<0.000000e+00> : vector<16x128xf32>
    %47 = tpu.matmul %43, %46, %cst_35 {dimension_numbers = #tpu.dot_dimension_numbers<[1], [0], [0], [1], [0, 0, 1, 1], [], []>} : vector<16x128xbf16>, vector<128x128xbf16>, vector<16x128xf32> -> vector<16x128xf32>
    %c2_i32 = arith.constant 2 : i32
    %48 = tpu.dynamic_rotate %45 by %c2_i32 dim 0 : vector<16x128xf32>, i32 -> vector<16x128xf32>
    %49 = tpu.iota {dimensions = array<i32: 0>} : vector<16x128xi32>
    %c2_i32_36 = arith.constant 2 : i32
    %50 = vector.broadcast %c2_i32_36 : i32 to vector<16x128xi32>
    %51 = arith.cmpi sge, %49, %50 : vector<16x128xi32>
    %cst_37 = arith.constant 0.000000e+00 : f32
    %52 = vector.broadcast %cst_37 : f32 to vector<16x128xf32>
    %53 = arith.select %51, %48, %52 : vector<16x128xi1>, vector<16x128xf32>
    %54 = arith.addf %53, %47 : vector<16x128xf32>
    %c0_38 = arith.constant 0 : index
    %c0_39 = arith.constant 0 : index
    %55 = vector.load %arg12[%c0_38, %c0_39] : memref<1x128xf32, #tpu.memory_space<vmem>>, vector<1x128xf32>
    %56 = vector.broadcast %55 : vector<1x128xf32> to vector<16x128xf32>
    %57 = arith.addf %54, %56 : vector<16x128xf32>
    %cst_40 = arith.constant 0.000000e+00 : f32
    %58 = vector.broadcast %cst_40 : f32 to vector<16x128xf32>
    %59 = arith.maximumf %57, %58 : vector<16x128xf32>
    %60 = arith.truncf %59 : vector<16x128xf32> to vector<16x128xbf16>
    %c0_41 = arith.constant 0 : index
    %c0_42 = arith.constant 0 : index
    %61 = vector.load %arg13[%c0_41, %c0_42] : memref<128x128xbf16, #tpu.memory_space<vmem>>, vector<128x128xbf16>
    %cst_43 = arith.constant dense<0.000000e+00> : vector<16x128xf32>
    %62 = tpu.matmul %60, %61, %cst_43 {dimension_numbers = #tpu.dot_dimension_numbers<[1], [0], [0], [1], [0, 0, 1, 1], [], []>} : vector<16x128xbf16>, vector<128x128xbf16>, vector<16x128xf32> -> vector<16x128xf32>
    %c0_44 = arith.constant 0 : index
    %c0_45 = arith.constant 0 : index
    %63 = vector.load %arg14[%c0_44, %c0_45] : memref<128x128xbf16, #tpu.memory_space<vmem>>, vector<128x128xbf16>
    %cst_46 = arith.constant dense<0.000000e+00> : vector<16x128xf32>
    %64 = tpu.matmul %60, %63, %cst_46 {dimension_numbers = #tpu.dot_dimension_numbers<[1], [0], [0], [1], [0, 0, 1, 1], [], []>} : vector<16x128xbf16>, vector<128x128xbf16>, vector<16x128xf32> -> vector<16x128xf32>
    %c2_i32_47 = arith.constant 2 : i32
    %65 = tpu.dynamic_rotate %62 by %c2_i32_47 dim 0 : vector<16x128xf32>, i32 -> vector<16x128xf32>
    %66 = tpu.iota {dimensions = array<i32: 0>} : vector<16x128xi32>
    %c2_i32_48 = arith.constant 2 : i32
    %67 = vector.broadcast %c2_i32_48 : i32 to vector<16x128xi32>
    %68 = arith.cmpi sge, %66, %67 : vector<16x128xi32>
    %cst_49 = arith.constant 0.000000e+00 : f32
    %69 = vector.broadcast %cst_49 : f32 to vector<16x128xf32>
    %70 = arith.select %68, %65, %69 : vector<16x128xi1>, vector<16x128xf32>
    %71 = arith.addf %70, %64 : vector<16x128xf32>
    %c0_50 = arith.constant 0 : index
    %c0_51 = arith.constant 0 : index
    %72 = vector.load %arg15[%c0_50, %c0_51] : memref<1x128xf32, #tpu.memory_space<vmem>>, vector<1x128xf32>
    %73 = vector.broadcast %72 : vector<1x128xf32> to vector<16x128xf32>
    %74 = arith.addf %71, %73 : vector<16x128xf32>
    %cst_52 = arith.constant 0.000000e+00 : f32
    %75 = vector.broadcast %cst_52 : f32 to vector<16x128xf32>
    %76 = arith.maximumf %74, %75 : vector<16x128xf32>
    %77 = arith.extf %43 : vector<16x128xbf16> to vector<16x128xf32>
    %78 = arith.addf %76, %77 : vector<16x128xf32>
    %cst_53 = arith.constant 0.000000e+00 : f32
    %79 = vector.broadcast %cst_53 : f32 to vector<16x128xf32>
    %80 = arith.maximumf %78, %79 : vector<16x128xf32>
    %81 = arith.truncf %80 : vector<16x128xf32> to vector<16x128xbf16>
    %c0_54 = arith.constant 0 : index
    %c0_55 = arith.constant 0 : index
    %82 = vector.load %arg16[%c0_54, %c0_55] : memref<128x128xbf16, #tpu.memory_space<vmem>>, vector<128x128xbf16>
    %cst_56 = arith.constant dense<0.000000e+00> : vector<16x128xf32>
    %83 = tpu.matmul %81, %82, %cst_56 {dimension_numbers = #tpu.dot_dimension_numbers<[1], [0], [0], [1], [0, 0, 1, 1], [], []>} : vector<16x128xbf16>, vector<128x128xbf16>, vector<16x128xf32> -> vector<16x128xf32>
    %c0_57 = arith.constant 0 : index
    %c0_58 = arith.constant 0 : index
    %84 = vector.load %arg17[%c0_57, %c0_58] : memref<128x128xbf16, #tpu.memory_space<vmem>>, vector<128x128xbf16>
    %cst_59 = arith.constant dense<0.000000e+00> : vector<16x128xf32>
    %85 = tpu.matmul %81, %84, %cst_59 {dimension_numbers = #tpu.dot_dimension_numbers<[1], [0], [0], [1], [0, 0, 1, 1], [], []>} : vector<16x128xbf16>, vector<128x128xbf16>, vector<16x128xf32> -> vector<16x128xf32>
    %c4_i32 = arith.constant 4 : i32
    %86 = tpu.dynamic_rotate %83 by %c4_i32 dim 0 : vector<16x128xf32>, i32 -> vector<16x128xf32>
    %87 = tpu.iota {dimensions = array<i32: 0>} : vector<16x128xi32>
    %c4_i32_60 = arith.constant 4 : i32
    %88 = vector.broadcast %c4_i32_60 : i32 to vector<16x128xi32>
    %89 = arith.cmpi sge, %87, %88 : vector<16x128xi32>
    %cst_61 = arith.constant 0.000000e+00 : f32
    %90 = vector.broadcast %cst_61 : f32 to vector<16x128xf32>
    %91 = arith.select %89, %86, %90 : vector<16x128xi1>, vector<16x128xf32>
    %92 = arith.addf %91, %85 : vector<16x128xf32>
    %c0_62 = arith.constant 0 : index
    %c0_63 = arith.constant 0 : index
    %93 = vector.load %arg18[%c0_62, %c0_63] : memref<1x128xf32, #tpu.memory_space<vmem>>, vector<1x128xf32>
    %94 = vector.broadcast %93 : vector<1x128xf32> to vector<16x128xf32>
    %95 = arith.addf %92, %94 : vector<16x128xf32>
    %cst_64 = arith.constant 0.000000e+00 : f32
    %96 = vector.broadcast %cst_64 : f32 to vector<16x128xf32>
    %97 = arith.maximumf %95, %96 : vector<16x128xf32>
    %98 = arith.truncf %97 : vector<16x128xf32> to vector<16x128xbf16>
    %c0_65 = arith.constant 0 : index
    %c0_66 = arith.constant 0 : index
    %99 = vector.load %arg19[%c0_65, %c0_66] : memref<128x128xbf16, #tpu.memory_space<vmem>>, vector<128x128xbf16>
    %cst_67 = arith.constant dense<0.000000e+00> : vector<16x128xf32>
    %100 = tpu.matmul %98, %99, %cst_67 {dimension_numbers = #tpu.dot_dimension_numbers<[1], [0], [0], [1], [0, 0, 1, 1], [], []>} : vector<16x128xbf16>, vector<128x128xbf16>, vector<16x128xf32> -> vector<16x128xf32>
    %c0_68 = arith.constant 0 : index
    %c0_69 = arith.constant 0 : index
    %101 = vector.load %arg20[%c0_68, %c0_69] : memref<128x128xbf16, #tpu.memory_space<vmem>>, vector<128x128xbf16>
    %cst_70 = arith.constant dense<0.000000e+00> : vector<16x128xf32>
    %102 = tpu.matmul %98, %101, %cst_70 {dimension_numbers = #tpu.dot_dimension_numbers<[1], [0], [0], [1], [0, 0, 1, 1], [], []>} : vector<16x128xbf16>, vector<128x128xbf16>, vector<16x128xf32> -> vector<16x128xf32>
    %c4_i32_71 = arith.constant 4 : i32
    %103 = tpu.dynamic_rotate %100 by %c4_i32_71 dim 0 : vector<16x128xf32>, i32 -> vector<16x128xf32>
    %104 = tpu.iota {dimensions = array<i32: 0>} : vector<16x128xi32>
    %c4_i32_72 = arith.constant 4 : i32
    %105 = vector.broadcast %c4_i32_72 : i32 to vector<16x128xi32>
    %106 = arith.cmpi sge, %104, %105 : vector<16x128xi32>
    %cst_73 = arith.constant 0.000000e+00 : f32
    %107 = vector.broadcast %cst_73 : f32 to vector<16x128xf32>
    %108 = arith.select %106, %103, %107 : vector<16x128xi1>, vector<16x128xf32>
    %109 = arith.addf %108, %102 : vector<16x128xf32>
    %c0_74 = arith.constant 0 : index
    %c0_75 = arith.constant 0 : index
    %110 = vector.load %arg21[%c0_74, %c0_75] : memref<1x128xf32, #tpu.memory_space<vmem>>, vector<1x128xf32>
    %111 = vector.broadcast %110 : vector<1x128xf32> to vector<16x128xf32>
    %112 = arith.addf %109, %111 : vector<16x128xf32>
    %cst_76 = arith.constant 0.000000e+00 : f32
    %113 = vector.broadcast %cst_76 : f32 to vector<16x128xf32>
    %114 = arith.maximumf %112, %113 : vector<16x128xf32>
    %115 = arith.extf %81 : vector<16x128xbf16> to vector<16x128xf32>
    %116 = arith.addf %114, %115 : vector<16x128xf32>
    %cst_77 = arith.constant 0.000000e+00 : f32
    %117 = vector.broadcast %cst_77 : f32 to vector<16x128xf32>
    %118 = arith.maximumf %116, %117 : vector<16x128xf32>
    %119 = arith.truncf %118 : vector<16x128xf32> to vector<16x128xbf16>
    %c0_78 = arith.constant 0 : index
    %c0_79 = arith.constant 0 : index
    %120 = vector.load %arg22[%c0_78, %c0_79] : memref<128x128xbf16, #tpu.memory_space<vmem>>, vector<128x128xbf16>
    %cst_80 = arith.constant dense<0.000000e+00> : vector<16x128xf32>
    %121 = tpu.matmul %119, %120, %cst_80 {dimension_numbers = #tpu.dot_dimension_numbers<[1], [0], [0], [1], [0, 0, 1, 1], [], []>} : vector<16x128xbf16>, vector<128x128xbf16>, vector<16x128xf32> -> vector<16x128xf32>
    %c0_81 = arith.constant 0 : index
    %c0_82 = arith.constant 0 : index
    %122 = vector.load %arg23[%c0_81, %c0_82] : memref<128x128xbf16, #tpu.memory_space<vmem>>, vector<128x128xbf16>
    %cst_83 = arith.constant dense<0.000000e+00> : vector<16x128xf32>
    %123 = tpu.matmul %119, %122, %cst_83 {dimension_numbers = #tpu.dot_dimension_numbers<[1], [0], [0], [1], [0, 0, 1, 1], [], []>} : vector<16x128xbf16>, vector<128x128xbf16>, vector<16x128xf32> -> vector<16x128xf32>
    %c8_i32 = arith.constant 8 : i32
    %124 = tpu.dynamic_rotate %121 by %c8_i32 dim 0 : vector<16x128xf32>, i32 -> vector<16x128xf32>
    %125 = tpu.iota {dimensions = array<i32: 0>} : vector<16x128xi32>
    %c8_i32_84 = arith.constant 8 : i32
    %126 = vector.broadcast %c8_i32_84 : i32 to vector<16x128xi32>
    %127 = arith.cmpi sge, %125, %126 : vector<16x128xi32>
    %cst_85 = arith.constant 0.000000e+00 : f32
    %128 = vector.broadcast %cst_85 : f32 to vector<16x128xf32>
    %129 = arith.select %127, %124, %128 : vector<16x128xi1>, vector<16x128xf32>
    %130 = arith.addf %129, %123 : vector<16x128xf32>
    %c0_86 = arith.constant 0 : index
    %c0_87 = arith.constant 0 : index
    %131 = vector.load %arg24[%c0_86, %c0_87] : memref<1x128xf32, #tpu.memory_space<vmem>>, vector<1x128xf32>
    %132 = vector.broadcast %131 : vector<1x128xf32> to vector<16x128xf32>
    %133 = arith.addf %130, %132 : vector<16x128xf32>
    %cst_88 = arith.constant 0.000000e+00 : f32
    %134 = vector.broadcast %cst_88 : f32 to vector<16x128xf32>
    %135 = arith.maximumf %133, %134 : vector<16x128xf32>
    %136 = arith.truncf %135 : vector<16x128xf32> to vector<16x128xbf16>
    %c0_89 = arith.constant 0 : index
    %c0_90 = arith.constant 0 : index
    %137 = vector.load %arg25[%c0_89, %c0_90] : memref<128x128xbf16, #tpu.memory_space<vmem>>, vector<128x128xbf16>
    %cst_91 = arith.constant dense<0.000000e+00> : vector<16x128xf32>
    %138 = tpu.matmul %136, %137, %cst_91 {dimension_numbers = #tpu.dot_dimension_numbers<[1], [0], [0], [1], [0, 0, 1, 1], [], []>} : vector<16x128xbf16>, vector<128x128xbf16>, vector<16x128xf32> -> vector<16x128xf32>
    %c0_92 = arith.constant 0 : index
    %c0_93 = arith.constant 0 : index
    %139 = vector.load %arg26[%c0_92, %c0_93] : memref<128x128xbf16, #tpu.memory_space<vmem>>, vector<128x128xbf16>
    %cst_94 = arith.constant dense<0.000000e+00> : vector<16x128xf32>
    %140 = tpu.matmul %136, %139, %cst_94 {dimension_numbers = #tpu.dot_dimension_numbers<[1], [0], [0], [1], [0, 0, 1, 1], [], []>} : vector<16x128xbf16>, vector<128x128xbf16>, vector<16x128xf32> -> vector<16x128xf32>
    %c8_i32_95 = arith.constant 8 : i32
    %141 = tpu.dynamic_rotate %138 by %c8_i32_95 dim 0 : vector<16x128xf32>, i32 -> vector<16x128xf32>
    %142 = tpu.iota {dimensions = array<i32: 0>} : vector<16x128xi32>
    %c8_i32_96 = arith.constant 8 : i32
    %143 = vector.broadcast %c8_i32_96 : i32 to vector<16x128xi32>
    %144 = arith.cmpi sge, %142, %143 : vector<16x128xi32>
    %cst_97 = arith.constant 0.000000e+00 : f32
    %145 = vector.broadcast %cst_97 : f32 to vector<16x128xf32>
    %146 = arith.select %144, %141, %145 : vector<16x128xi1>, vector<16x128xf32>
    %147 = arith.addf %146, %140 : vector<16x128xf32>
    %c0_98 = arith.constant 0 : index
    %c0_99 = arith.constant 0 : index
    %148 = vector.load %arg27[%c0_98, %c0_99] : memref<1x128xf32, #tpu.memory_space<vmem>>, vector<1x128xf32>
    %149 = vector.broadcast %148 : vector<1x128xf32> to vector<16x128xf32>
    %150 = arith.addf %147, %149 : vector<16x128xf32>
    %cst_100 = arith.constant 0.000000e+00 : f32
    %151 = vector.broadcast %cst_100 : f32 to vector<16x128xf32>
    %152 = arith.maximumf %150, %151 : vector<16x128xf32>
    %153 = arith.extf %119 : vector<16x128xbf16> to vector<16x128xf32>
    %154 = arith.addf %152, %153 : vector<16x128xf32>
    %cst_101 = arith.constant 0.000000e+00 : f32
    %155 = vector.broadcast %cst_101 : f32 to vector<16x128xf32>
    %156 = arith.maximumf %154, %155 : vector<16x128xf32>
    %157 = arith.truncf %156 : vector<16x128xf32> to vector<16x128xbf16>
    %c0_102 = arith.constant 0 : index
    %c0_103 = arith.constant 0 : index
    %158 = vector.load %arg28[%c0_102, %c0_103] : memref<128x128xbf16, #tpu.memory_space<vmem>>, vector<128x128xbf16>
    %cst_104 = arith.constant dense<0.000000e+00> : vector<16x128xf32>
    %159 = tpu.matmul %157, %158, %cst_104 {dimension_numbers = #tpu.dot_dimension_numbers<[1], [0], [0], [1], [0, 0, 1, 1], [], []>} : vector<16x128xbf16>, vector<128x128xbf16>, vector<16x128xf32> -> vector<16x128xf32>
    %c0_105 = arith.constant 0 : index
    %c0_106 = arith.constant 0 : index
    %160 = vector.load %arg29[%c0_105, %c0_106] : memref<1x128xf32, #tpu.memory_space<vmem>>, vector<1x128xf32>
    %161 = vector.broadcast %160 : vector<1x128xf32> to vector<16x128xf32>
    %162 = arith.addf %159, %161 : vector<16x128xf32>
    %cst_107 = arith.constant 0.000000e+00 : f32
    %163 = vector.broadcast %cst_107 : f32 to vector<16x128xf32>
    %164 = arith.maximumf %162, %163 : vector<16x128xf32>
    %165 = arith.truncf %164 : vector<16x128xf32> to vector<16x128xbf16>
    %c0_108 = arith.constant 0 : index
    %c0_109 = arith.constant 0 : index
    %166 = vector.load %arg30[%c0_108, %c0_109] : memref<128x128xbf16, #tpu.memory_space<vmem>>, vector<128x128xbf16>
    %cst_110 = arith.constant dense<0.000000e+00> : vector<16x128xf32>
    %167 = tpu.matmul %165, %166, %cst_110 {dimension_numbers = #tpu.dot_dimension_numbers<[1], [0], [0], [1], [0, 0, 1, 1], [], []>} : vector<16x128xbf16>, vector<128x128xbf16>, vector<16x128xf32> -> vector<16x128xf32>
    %c0_111 = arith.constant 0 : index
    %c0_112 = arith.constant 0 : index
    %168 = vector.load %arg31[%c0_111, %c0_112] : memref<1x128xf32, #tpu.memory_space<vmem>>, vector<1x128xf32>
    %169 = vector.broadcast %168 : vector<1x128xf32> to vector<16x128xf32>
    %170 = arith.addf %167, %169 : vector<16x128xf32>
    %cst_113 = arith.constant 0.000000e+00 : f32
    %171 = vector.broadcast %cst_113 : f32 to vector<16x128xf32>
    %172 = arith.maximumf %170, %171 : vector<16x128xf32>
    %173 = arith.truncf %172 : vector<16x128xf32> to vector<16x128xbf16>
    %c0_114 = arith.constant 0 : index
    %c0_115 = arith.constant 0 : index
    %174 = vector.load %arg32[%c0_114, %c0_115] : memref<128x128xbf16, #tpu.memory_space<vmem>>, vector<128x128xbf16>
    %cst_116 = arith.constant dense<0.000000e+00> : vector<16x128xf32>
    %175 = tpu.matmul %173, %174, %cst_116 {dimension_numbers = #tpu.dot_dimension_numbers<[1], [0], [0], [1], [0, 0, 1, 1], [], []>} : vector<16x128xbf16>, vector<128x128xbf16>, vector<16x128xf32> -> vector<16x128xf32>
    %c0_117 = arith.constant 0 : index
    %c0_118 = arith.constant 0 : index
    %176 = vector.load %arg33[%c0_117, %c0_118] : memref<1x128xf32, #tpu.memory_space<vmem>>, vector<1x128xf32>
    %177 = vector.broadcast %176 : vector<1x128xf32> to vector<16x128xf32>
    %178 = arith.addf %175, %177 : vector<16x128xf32>
    %c0_119 = arith.constant 0 : index
    %c0_120 = arith.constant 0 : index
    %c0_121 = arith.constant 0 : index
    %179 = vector.load %arg34[%c0_119, %c0_120, %c0_121] : memref<1x16x128xf32, #tpu.memory_space<vmem>>, vector<1x16x128xf32>
    %180 = vector.shape_cast %179 : vector<1x16x128xf32> to vector<16x128xf32>
    %181 = vector.shape_cast %178 : vector<16x128xf32> to vector<1x16x128xf32>
    tpu.vector_store %arg34[%c0_119, %c0_120, %c0_121], %181 {strides = array<i32>} : memref<1x16x128xf32, #tpu.memory_space<vmem>>, vector<1x16x128xf32>,
    return
  }
  func.func @transform_0(%arg0: i32) -> (i32, i32, i32) {
    %c0_i32 = arith.constant 0 : i32
    %c0_i32_0 = arith.constant 0 : i32
    %c0_i32_1 = arith.constant 0 : i32
    return %arg0, %c0_i32, %c0_i32_0 : i32, i32, i32
  }
  func.func @transform_1(%arg0: i32) -> (i32, i32) {
    %c0_i32 = arith.constant 0 : i32
    %c0_i32_0 = arith.constant 0 : i32
    %c0_i32_1 = arith.constant 0 : i32
    return %c0_i32, %c0_i32_0 : i32, i32
  }
  func.func @transform_2(%arg0: i32) -> (i32, i32) {
    %c0_i32 = arith.constant 0 : i32
    %c0_i32_0 = arith.constant 0 : i32
    %c0_i32_1 = arith.constant 0 : i32
    return %c0_i32, %c0_i32_0 : i32, i32
  }
  func.func @transform_3(%arg0: i32) -> (i32, i32) {
    %c0_i32 = arith.constant 0 : i32
    %c0_i32_0 = arith.constant 0 : i32
    %c0_i32_1 = arith.constant 0 : i32
    return %c0_i32, %c0_i32_0 : i32, i32
  }
  func.func @transform_4(%arg0: i32) -> (i32, i32) {
    %c0_i32 = arith.constant 0 : i32
    %c0_i32_0 = arith.constant 0 : i32
    %c0_i32_1 = arith.constant 0 : i32
    return %c0_i32, %c0_i32_0 : i32, i32
  }
  func.func @transform_5(%arg0: i32) -> (i32, i32) {
    %c0_i32 = arith.constant 0 : i32
    %c0_i32_0 = arith.constant 0 : i32
    %c0_i32_1 = arith.constant 0 : i32
    return %c0_i32, %c0_i32_0 : i32, i32
  }
  func.func @transform_6(%arg0: i32) -> (i32, i32) {
    %c0_i32 = arith.constant 0 : i32
    %c0_i32_0 = arith.constant 0 : i32
    %c0_i32_1 = arith.constant 0 : i32
    return %c0_i32, %c0_i32_0 : i32, i32
  }
  func.func @transform_7(%arg0: i32) -> (i32, i32) {
    %c0_i32 = arith.constant 0 : i32
    %c0_i32_0 = arith.constant 0 : i32
    %c0_i32_1 = arith.constant 0 : i32
    return %c0_i32, %c0_i32_0 : i32, i32
  }
  func.func @transform_8(%arg0: i32) -> (i32, i32) {
    %c0_i32 = arith.constant 0 : i32
    %c0_i32_0 = arith.constant 0 : i32
    %c0_i32_1 = arith.constant 0 : i32
    return %c0_i32, %c0_i32_0 : i32, i32
  }
  func.func @transform_9(%arg0: i32) -> (i32, i32) {
    %c0_i32 = arith.constant 0 : i32
    %c0_i32_0 = arith.constant 0 : i32
    %c0_i32_1 = arith.constant 0 : i32
    return %c0_i32, %c0_i32_0 : i32, i32
  }
  func.func @transform_10(%arg0: i32) -> (i32, i32) {
    %c0_i32 = arith.constant 0 : i32
    %c0_i32_0 = arith.constant 0 : i32
    %c0_i32_1 = arith.constant 0 : i32
    return %c0_i32, %c0_i32_0 : i32, i32
  }
  func.func @transform_11(%arg0: i32) -> (i32, i32) {
    %c0_i32 = arith.constant 0 : i32
    %c0_i32_0 = arith.constant 0 : i32
    %c0_i32_1 = arith.constant 0 : i32
    return %c0_i32, %c0_i32_0 : i32, i32
  }
  func.func @transform_12(%arg0: i32) -> (i32, i32) {
    %c0_i32 = arith.constant 0 : i32
    %c0_i32_0 = arith.constant 0 : i32
    %c0_i32_1 = arith.constant 0 : i32
    return %c0_i32, %c0_i32_0 : i32, i32
  }
  func.func @transform_13(%arg0: i32) -> (i32, i32) {
    %c0_i32 = arith.constant 0 : i32
    %c0_i32_0 = arith.constant 0 : i32
    %c0_i32_1 = arith.constant 0 : i32
    return %c0_i32, %c0_i32_0 : i32, i32
  }
  func.func @transform_14(%arg0: i32) -> (i32, i32) {
    %c0_i32 = arith.constant 0 : i32
    %c0_i32_0 = arith.constant 0 : i32
    %c0_i32_1 = arith.constant 0 : i32
    return %c0_i32, %c0_i32_0 : i32, i32
  }
  func.func @transform_15(%arg0: i32) -> (i32, i32) {
    %c0_i32 = arith.constant 0 : i32
    %c0_i32_0 = arith.constant 0 : i32
    %c0_i32_1 = arith.constant 0 : i32
    return %c0_i32, %c0_i32_0 : i32, i32
  }
  func.func @transform_16(%arg0: i32) -> (i32, i32) {
    %c0_i32 = arith.constant 0 : i32
    %c0_i32_0 = arith.constant 0 : i32
    %c0_i32_1 = arith.constant 0 : i32
    return %c0_i32, %c0_i32_0 : i32, i32
  }
  func.func @transform_17(%arg0: i32) -> (i32, i32) {
    %c0_i32 = arith.constant 0 : i32
    %c0_i32_0 = arith.constant 0 : i32
    %c0_i32_1 = arith.constant 0 : i32
    return %c0_i32, %c0_i32_0 : i32, i32
  }
  func.func @transform_18(%arg0: i32) -> (i32, i32) {
    %c0_i32 = arith.constant 0 : i32
    %c0_i32_0 = arith.constant 0 : i32
    %c0_i32_1 = arith.constant 0 : i32
    return %c0_i32, %c0_i32_0 : i32, i32
  }
  func.func @transform_19(%arg0: i32) -> (i32, i32) {
    %c0_i32 = arith.constant 0 : i32
    %c0_i32_0 = arith.constant 0 : i32
    %c0_i32_1 = arith.constant 0 : i32
    return %c0_i32, %c0_i32_0 : i32, i32
  }
  func.func @transform_20(%arg0: i32) -> (i32, i32) {
    %c0_i32 = arith.constant 0 : i32
    %c0_i32_0 = arith.constant 0 : i32
    %c0_i32_1 = arith.constant 0 : i32
    return %c0_i32, %c0_i32_0 : i32, i32
  }
  func.func @transform_21(%arg0: i32) -> (i32, i32) {
    %c0_i32 = arith.constant 0 : i32
    %c0_i32_0 = arith.constant 0 : i32
    %c0_i32_1 = arith.constant 0 : i32
    return %c0_i32, %c0_i32_0 : i32, i32
  }
  func.func @transform_22(%arg0: i32) -> (i32, i32) {
    %c0_i32 = arith.constant 0 : i32
    %c0_i32_0 = arith.constant 0 : i32
    %c0_i32_1 = arith.constant 0 : i32
    return %c0_i32, %c0_i32_0 : i32, i32
  }
  func.func @transform_23(%arg0: i32) -> (i32, i32) {
    %c0_i32 = arith.constant 0 : i32
    %c0_i32_0 = arith.constant 0 : i32
    %c0_i32_1 = arith.constant 0 : i32
    return %c0_i32, %c0_i32_0 : i32, i32
  }
  func.func @transform_24(%arg0: i32) -> (i32, i32) {
    %c0_i32 = arith.constant 0 : i32
    %c0_i32_0 = arith.constant 0 : i32
    %c0_i32_1 = arith.constant 0 : i32
    return %c0_i32, %c0_i32_0 : i32, i32
  }
  func.func @transform_25(%arg0: i32) -> (i32, i32) {
    %c0_i32 = arith.constant 0 : i32
    %c0_i32_0 = arith.constant 0 : i32
    %c0_i32_1 = arith.constant 0 : i32
    return %c0_i32, %c0_i32_0 : i32, i32
  }
  func.func @transform_26(%arg0: i32) -> (i32, i32) {
    %c0_i32 = arith.constant 0 : i32
    %c0_i32_0 = arith.constant 0 : i32
    %c0_i32_1 = arith.constant 0 : i32
    return %c0_i32, %c0_i32_0 : i32, i32
  }
  func.func @transform_27(%arg0: i32) -> (i32, i32) {
    %c0_i32 = arith.constant 0 : i32
    %c0_i32_0 = arith.constant 0 : i32
    %c0_i32_1 = arith.constant 0 : i32
    return %c0_i32, %c0_i32_0 : i32, i32
  }
  func.func @transform_28(%arg0: i32) -> (i32, i32) {
    %c0_i32 = arith.constant 0 : i32
    %c0_i32_0 = arith.constant 0 : i32
    %c0_i32_1 = arith.constant 0 : i32
    return %c0_i32, %c0_i32_0 : i32, i32
  }
  func.func @transform_29(%arg0: i32) -> (i32, i32) {
    %c0_i32 = arith.constant 0 : i32
    %c0_i32_0 = arith.constant 0 : i32
    %c0_i32_1 = arith.constant 0 : i32
    return %c0_i32, %c0_i32_0 : i32, i32
  }
  func.func @transform_30(%arg0: i32) -> (i32, i32) {
    %c0_i32 = arith.constant 0 : i32
    %c0_i32_0 = arith.constant 0 : i32
    %c0_i32_1 = arith.constant 0 : i32
    return %c0_i32, %c0_i32_0 : i32, i32
  }
  func.func @transform_31(%arg0: i32) -> (i32, i32) {
    %c0_i32 = arith.constant 0 : i32
    %c0_i32_0 = arith.constant 0 : i32
    %c0_i32_1 = arith.constant 0 : i32
    return %c0_i32, %c0_i32_0 : i32, i32
  }
  func.func @transform_32(%arg0: i32) -> (i32, i32) {
    %c0_i32 = arith.constant 0 : i32
    %c0_i32_0 = arith.constant 0 : i32
    %c0_i32_1 = arith.constant 0 : i32
    return %c0_i32, %c0_i32_0 : i32, i32
  }
  func.func @transform_33(%arg0: i32) -> (i32, i32, i32) {
    %c0_i32 = arith.constant 0 : i32
    %c0_i32_0 = arith.constant 0 : i32
    %c0_i32_1 = arith.constant 0 : i32
    return %arg0, %c0_i32, %c0_i32_0 : i32, i32, i32
  }
}

</mosaic_0001>

<llo_original>
// kernel: temporal_conv_static_e_forward.1
$region0: #{temporal_conv_static_e_forward.1}
  #allocation0 [shape = 'u32[]', space=smem, size = 0x4, offset = 0x4, fixed_abs, tag = 'smem constant byte address 0x4 - core index']
  #allocation1 [shape = 'u32[72,128]{1,0:T(1,128)}', space=vmem, size = 0x9000, scoped, tag = 'internal scratch']
  %s0 = inlined_call_operand.smem [shape: u32[34], index: -1, kind: input, shape index: {}]
  %s1 = sld [smem:[%s0]]
  %s2 = scalar_lea.smem %s0, 1
  %s3 = sld [smem:[%s2]]
  %s4 = scalar_lea.smem %s0, 2
  %s5 = sld [smem:[%s4]]
  %s6 = scalar_lea.smem %s0, 3
  %s7 = sld [smem:[%s6]]
  %s8 = scalar_lea.smem %s0, 4
  %s9 = sld [smem:[%s8]]
  %s10 = scalar_lea.smem %s0, 5
  %s11 = sld [smem:[%s10]]
  %s12 = scalar_lea.smem %s0, 6
  %s13 = sld [smem:[%s12]]
  %s14 = scalar_lea.smem %s0, 7
  %s15 = sld [smem:[%s14]]
  %s16 = scalar_lea.smem %s0, 8
  %s17 = sld [smem:[%s16]]
  %s18 = scalar_lea.smem %s0, 9
  %s19 = sld [smem:[%s18]]
  %s20 = scalar_lea.smem %s0, 10
  %s21 = sld [smem:[%s20]]
  %s22 = scalar_lea.smem %s0, 11
  %s23 = sld [smem:[%s22]]
  %s24 = scalar_lea.smem %s0, 12
  %s25 = sld [smem:[%s24]]
  %s26 = scalar_lea.smem %s0, 13
  %s27 = sld [smem:[%s26]]
  %s28 = scalar_lea.smem %s0, 14
  %s29 = sld [smem:[%s28]]
  %s30 = scalar_lea.smem %s0, 15
  %s31 = sld [smem:[%s30]]
  %s32 = scalar_lea.smem %s0, 16
  %s33 = sld [smem:[%s32]]
  %s34 = scalar_lea.smem %s0, 17
  %s35 = sld [smem:[%s34]]
  %s36 = scalar_lea.smem %s0, 18
  %s37 = sld [smem:[%s36]]
  %s38 = scalar_lea.smem %s0, 19
  %s39 = sld [smem:[%s38]]
  %s40 = scalar_lea.smem %s0, 20
  %s41 = sld [smem:[%s40]]
  %s42 = scalar_lea.smem %s0, 21
  %s43 = sld [smem:[%s42]]
  %s44 = scalar_lea.smem %s0, 22
  %s45 = sld [smem:[%s44]]
  %s46 = scalar_lea.smem %s0, 23
  %s47 = sld [smem:[%s46]]
  %s48 = scalar_lea.smem %s0, 24
  %s49 = sld [smem:[%s48]]
  %s50 = scalar_lea.smem %s0, 25
  %s51 = sld [smem:[%s50]]
  %s52 = scalar_lea.smem %s0, 26
  %s53 = sld [smem:[%s52]]
  %s54 = scalar_lea.smem %s0, 27
  %s55 = sld [smem:[%s54]]
  %s56 = scalar_lea.smem %s0, 28
  %s57 = sld [smem:[%s56]]
  %s58 = scalar_lea.smem %s0, 29
  %s59 = sld [smem:[%s58]]
  %s60 = scalar_lea.smem %s0, 30
  %s61 = sld [smem:[%s60]]
  %s62 = scalar_lea.smem %s0, 31
  %s63 = sld [smem:[%s62]]
  %s64 = scalar_lea.smem %s0, 32
  %s65 = sld [smem:[%s64]]
  %s66 = scalar_lea.smem %s0, 33
  %s67 = sld [smem:[%s66]]
  %s68 = sld [smem:[#allocation0]]
  $region249: #{temporal_conv_static_e_forward.1} parent=0
    _
  %s70 = ssub.s32 1, %s68
  %s71 = scalar_select 0, %s70, %s68
  $region1: #{temporal_conv_static_e_forward.1} parent=0
    #allocation2 [shape = 'u8[32768]{0}', space=vmem, size = 0x8000, scoped, tag = 'input window, operand 4, single buffered']
    #allocation3 [shape = 's32[2]{0}', space=sflag, size = 0x8, scoped, tag = 'scoped memory for temporal_conv_static_e_forward.1']
    #allocation4 [shape = 'u8[32768]{0}', space=vmem, size = 0x8000, scoped, tag = 'input window, operand 5, single buffered']
    #allocation5 [shape = 's32[1]{0}', space=sflag, size = 0x4, scoped, tag = 'scoped memory for temporal_conv_static_e_forward.1']
    #allocation6 [shape = 'u8[32768]{0}', space=vmem, size = 0x8000, scoped, tag = 'input window, operand 7, single buffered']
    #allocation7 [shape = 'u8[32768]{0}', space=vmem, size = 0x8000, scoped, tag = 'input window, operand 9, single buffered']
    #allocation8 [shape = 's32[1]{0}', space=sflag, size = 0x4, scoped, tag = 'scoped memory for temporal_conv_static_e_forward.1']
    #allocation9 [shape = 'u8[32768]{0}', space=vmem, size = 0x8000, scoped, tag = 'input window, operand 10, single buffered']
    #allocation10 [shape = 'u8[32768]{0}', space=vmem, size = 0x8000, scoped, tag = 'input window, operand 12, single buffered']
    #allocation11 [shape = 's32[1]{0}', space=sflag, size = 0x4, scoped, tag = 'scoped memory for temporal_conv_static_e_forward.1']
    #allocation12 [shape = 'u8[32768]{0}', space=vmem, size = 0x8000, scoped, tag = 'input window, operand 13, single buffered']
    #allocation13 [shape = 'u8[32768]{0}', space=vmem, size = 0x8000, scoped, tag = 'input window, operand 15, single buffered']
    #allocation14 [shape = 's32[1]{0}', space=sflag, size = 0x4, scoped, tag = 'scoped memory for temporal_conv_static_e_forward.1']
    #allocation15 [shape = 'u8[32768]{0}', space=vmem, size = 0x8000, scoped, tag = 'input window, operand 16, single buffered']
    #allocation16 [shape = 'u8[32768]{0}', space=vmem, size = 0x8000, scoped, tag = 'input window, operand 18, single buffered']
    #allocation17 [shape = 's32[1]{0}', space=sflag, size = 0x4, scoped, tag = 'scoped memory for temporal_conv_static_e_forward.1']
    #allocation18 [shape = 'u8[32768]{0}', space=vmem, size = 0x8000, scoped, tag = 'input window, operand 19, single buffered']
    #allocation19 [shape = 'u8[32768]{0}', space=vmem, size = 0x8000, scoped, tag = 'input window, operand 21, single buffered']
    #allocation20 [shape = 's32[1]{0}', space=sflag, size = 0x4, scoped, tag = 'scoped memory for temporal_conv_static_e_forward.1']
    #allocation21 [shape = 'u8[32768]{0}', space=vmem, size = 0x8000, scoped, tag = 'input window, operand 22, single buffered']
    #allocation22 [shape = 'u8[32768]{0}', space=vmem, size = 0x8000, scoped, tag = 'input window, operand 24, single buffered']
    #allocation23 [shape = 's32[1]{0}', space=sflag, size = 0x4, scoped, tag = 'scoped memory for temporal_conv_static_e_forward.1']
    #allocation24 [shape = 'u8[32768]{0}', space=vmem, size = 0x8000, scoped, tag = 'input window, operand 25, single buffered']
    #allocation25 [shape = 'u8[32768]{0}', space=vmem, size = 0x8000, scoped, tag = 'input window, operand 27, single buffered']
    #allocation26 [shape = 's32[1]{0}', space=sflag, size = 0x4, scoped, tag = 'scoped memory for temporal_conv_static_e_forward.1']
    #allocation27 [shape = 'u8[512]{0}', space=vmem, size = 0x400, scoped, tag = 'input window, operand 28, single buffered']
    #allocation28 [shape = 'u8[32768]{0}', space=vmem, size = 0x8000, scoped, tag = 'input window, operand 29, single buffered']
    #allocation29 [shape = 's32[1]{0}', space=sflag, size = 0x4, scoped, tag = 'scoped memory for temporal_conv_static_e_forward.1']
    #allocation30 [shape = 'u8[512]{0}', space=vmem, size = 0x400, scoped, tag = 'input window, operand 30, single buffered']
    #allocation31 [shape = 'u8[32768]{0}', space=vmem, size = 0x8000, scoped, tag = 'input window, operand 31, single buffered']
    #allocation32 [shape = 's32[1]{0}', space=sflag, size = 0x4, scoped, tag = 'scoped memory for temporal_conv_static_e_forward.1']
    #allocation33 [shape = 'u8[512]{0}', space=vmem, size = 0x400, scoped, tag = 'input window, operand 32, single buffered']
    %72 = vsyncpa [#allocation3], 0
    %73 = vsyncpa [#allocation5], 0
    %74 = vsyncpa [#allocation8], 0
    %75 = vsyncpa [#allocation11], 0
    %76 = vsyncpa [#allocation14], 0
    %77 = vsyncpa [#allocation17], 0
    %78 = vsyncpa [#allocation20], 0
    %79 = vsyncpa [#allocation23], 0
    %80 = vsyncpa [#allocation26], 0
    %81 = vsyncpa [#allocation29], 0
    %82 = vsyncpa [#allocation32], 0
    loop: start=0, step=1, limit=4
    $region2: #{temporal_conv_static_e_forward.1} parent=1 // loop_pre_header
      _
    $region3: #{temporal_conv_static_e_forward.1} parent=1 // loop_header
      %s84 = sphi 0, %s88
      %p85 = scmp.ge.s32.totalorder %s84, 4
      %s94 = sphi 0, %s96
      %s97 = sphi 0, %s94
      %s98 = sphi 0, %s97
      %s114 = sphi 0, %s98
      %s118 = sphi 0, %s118
      %s120 = sphi 0, %s118
      %s121 = sphi 0, %s120
      %s135 = sphi 0, %s121
      %s139 = sphi 0, %s139
      %s141 = sphi 0, %s139
      %s142 = sphi 0, %s141
      %s156 = sphi 0, %s142
      %s160 = sphi 0, %s160
      %s162 = sphi 0, %s160
      %s163 = sphi 0, %s162
      %s177 = sphi 0, %s163
      %s181 = sphi 0, %s181
      %s183 = sphi 0, %s181
      %s184 = sphi 0, %s183
      %s198 = sphi 0, %s184
      %s202 = sphi 0, %s202
      %s204 = sphi 0, %s202
      %s205 = sphi 0, %s204
      %s219 = sphi 0, %s205
      %s223 = sphi 0, %s223
      %s225 = sphi 0, %s223
      %s226 = sphi 0, %s225
      %s240 = sphi 0, %s226
      %s244 = sphi 0, %s244
      %s246 = sphi 0, %s244
      %s247 = sphi 0, %s246
      %s261 = sphi 0, %s247
      %s265 = sphi 0, %s265
      %s267 = sphi 0, %s265
      %s268 = sphi 0, %s267
      %s282 = sphi 0, %s268
      %s286 = sphi 0, %s286
      %s288 = sphi 0, %s286
      %s289 = sphi 0, %s288
      %s303 = sphi 0, %s289
      %s307 = sphi 0, %s307
      %s309 = sphi 0, %s307
      %s310 = sphi 0, %s309
      %s324 = sphi 0, %s310
      %s328 = sphi 0, %s328
      %s330 = sphi 0, %s328
      %s331 = sphi 0, %s330
      %s345 = sphi 0, %s331
      %s349 = sphi 0, %s349
      %s351 = sphi 0, %s349
      %s352 = sphi 0, %s351
      %s366 = sphi 0, %s352
      %s370 = sphi 0, %s370
      %s372 = sphi 0, %s370
      %s373 = sphi 0, %s372
      %s387 = sphi 0, %s373
      %s391 = sphi 0, %s391
      %s393 = sphi 0, %s391
      %s394 = sphi 0, %s393
      %s408 = sphi 0, %s394
      %s412 = sphi 0, %s412
      %s414 = sphi 0, %s412
      %s415 = sphi 0, %s414
      %s429 = sphi 0, %s415
      %s433 = sphi 0, %s433
      %s435 = sphi 0, %s433
      %s436 = sphi 0, %s435
      %s450 = sphi 0, %s436
      %s454 = sphi 0, %s454
      %s456 = sphi 0, %s454
      %s457 = sphi 0, %s456
      %s471 = sphi 0, %s457
      %s475 = sphi 0, %s475
      %s477 = sphi 0, %s475
      %s478 = sphi 0, %s477
      %s492 = sphi 0, %s478
      %s496 = sphi 0, %s496
      %s498 = sphi 0, %s496
      %s499 = sphi 0, %s498
      %s513 = sphi 0, %s499
      %s517 = sphi 0, %s517
      %s519 = sphi 0, %s517
      %s520 = sphi 0, %s519
      %s534 = sphi 0, %s520
      %s538 = sphi 0, %s538
      %s540 = sphi 0, %s538
      %s541 = sphi 0, %s540
      %s555 = sphi 0, %s541
      %s559 = sphi 0, %s559
      %s561 = sphi 0, %s559
      %s562 = sphi 0, %s561
      %s576 = sphi 0, %s562
      %s580 = sphi 0, %s580
      %s582 = sphi 0, %s580
      %s583 = sphi 0, %s582
      %s597 = sphi 0, %s583
      %s601 = sphi 0, %s601
      %s603 = sphi 0, %s601
      %s604 = sphi 0, %s603
      %s618 = sphi 0, %s604
      %s622 = sphi 0, %s622
      %s624 = sphi 0, %s622
      %s625 = sphi 0, %s624
      %s639 = sphi 0, %s625
      %s643 = sphi 0, %s643
      %s645 = sphi 0, %s643
      %s646 = sphi 0, %s645
      %s660 = sphi 0, %s646
      %s664 = sphi 0, %s664
      %s666 = sphi 0, %s664
      %s667 = sphi 0, %s666
      %s681 = sphi 0, %s667
      %s685 = sphi 0, %s685
      %s687 = sphi 0, %s685
      %s688 = sphi 0, %s687
      %s702 = sphi 0, %s688
      %s706 = sphi 0, %s706
      %s708 = sphi 0, %s706
      %s709 = sphi 0, %s708
      %s723 = sphi 0, %s709
      %s727 = sphi 0, %s727
      %s729 = sphi 0, %s727
      %s730 = sphi 0, %s729
      %s744 = sphi 0, %s730
      %s748 = sphi 0, %s748
      %s750 = sphi 0, %s748
      %s751 = sphi 0, %s750
      %s765 = sphi 0, %s751
      %s769 = sphi 0, %s769
      %s771 = sphi 0, %s769
      %s772 = sphi 0, %s771
      %s786 = sphi 0, %s772
      %s792 = sphi 0, %s794
      %s795 = sphi 0, %s792
      %s796 = sphi 0, %s795
      %s812 = sphi 0, %s796
    $region4: #{temporal_conv_static_e_forward.1} parent=1 // loop_header_branch
      %87 = sbr.rel (%p85) target = $region8
    $region5: #{temporal_conv_static_e_forward.1} parent=1 // loop_body
      %s89 = ssub.s32 %s84, 1
      %s90 = ssub.s32 %s84, 2
      %s91 = sadd.s32 %s84, 1
      %s92 = ssub.s32 %s84, %s91
      %p93 = scmp.eq.s32.totalorder %s92, 0
      %s95 = sadd.s32 %s94, 1
      %s96 = scalar_select %p93, %s94, %s95
      %p99 = pneg %p93
      %p100 = scmp.eq.s32.totalorder %s84, 1
      %p101 = por %p99, %p100
      %p102 = scmp.ne.s32.totalorder %s94, %s97
      %p103 = scmp.eq.s32.totalorder %s84, 0
      %p104 = por %p102, %p103
      %p105 = scmp.ne.s32.totalorder %s94, %s97
      %p106 = scmp.eq.s32.totalorder %s89, 1
      %p107 = por %p105, %p106
      %p108 = scmp.ne.s32.totalorder %s97, %s98
      %p109 = scmp.eq.s32.totalorder %s89, 0
      %p110 = por %p108, %p109
      %p111 = scmp.ne.s32.totalorder %s97, %s98
      %p112 = scmp.eq.s32.totalorder %s90, 1
      %p113 = por %p111, %p112
      %p115 = scmp.ne.s32.totalorder %s98, %s114
      %p116 = scmp.eq.s32.totalorder %s90, 0
      %p117 = por %p115, %p116
      %s119 = sadd.s32 %s118, 1
      %p122 = scmp.eq.s32.totalorder %s84, 1
      %p123 = scmp.ne.s32.totalorder %s118, %s120
      %p124 = scmp.eq.s32.totalorder %s84, 0
      %p125 = por %p123, %p124
      %p126 = scmp.ne.s32.totalorder %s118, %s120
      %p127 = scmp.eq.s32.totalorder %s89, 1
      %p128 = por %p126, %p127
      %p129 = scmp.ne.s32.totalorder %s120, %s121
      %p130 = scmp.eq.s32.totalorder %s89, 0
      %p131 = por %p129, %p130
      %p132 = scmp.ne.s32.totalorder %s120, %s121
      %p133 = scmp.eq.s32.totalorder %s90, 1
      %p134 = por %p132, %p133
      %p136 = scmp.ne.s32.totalorder %s121, %s135
      %p137 = scmp.eq.s32.totalorder %s90, 0
      %p138 = por %p136, %p137
      %s140 = sadd.s32 %s139, 1
      %p143 = scmp.eq.s32.totalorder %s84, 1
      %p144 = scmp.ne.s32.totalorder %s139, %s141
      %p145 = scmp.eq.s32.totalorder %s84, 0
      %p146 = por %p144, %p145
      %p147 = scmp.ne.s32.totalorder %s139, %s141
      %p148 = scmp.eq.s32.totalorder %s89, 1
      %p149 = por %p147, %p148
      %p150 = scmp.ne.s32.totalorder %s141, %s142
      %p151 = scmp.eq.s32.totalorder %s89, 0
      %p152 = por %p150, %p151
      %p153 = scmp.ne.s32.totalorder %s141, %s142
      %p154 = scmp.eq.s32.totalorder %s90, 1
      %p155 = por %p153, %p154
      %p157 = scmp.ne.s32.totalorder %s142, %s156
      %p158 = scmp.eq.s32.totalorder %s90, 0
      %p159 = por %p157, %p158
      %s161 = sadd.s32 %s160, 1
      %p164 = scmp.eq.s32.totalorder %s84, 1
      %p165 = scmp.ne.s32.totalorder %s160, %s162
      %p166 = scmp.eq.s32.totalorder %s84, 0
      %p167 = por %p165, %p166
      %p168 = scmp.ne.s32.totalorder %s160, %s162
      %p169 = scmp.eq.s32.totalorder %s89, 1
      %p170 = por %p168, %p169
      %p171 = scmp.ne.s32.totalorder %s162, %s163
      %p172 = scmp.eq.s32.totalorder %s89, 0
      %p173 = por %p171, %p172
      %p174 = scmp.ne.s32.totalorder %s162, %s163
      %p175 = scmp.eq.s32.totalorder %s90, 1
      %p176 = por %p174, %p175
      %p178 = scmp.ne.s32.totalorder %s163, %s177
      %p179 = scmp.eq.s32.totalorder %s90, 0
      %p180 = por %p178, %p179
      %s182 = sadd.s32 %s181, 1
      %p185 = scmp.eq.s32.totalorder %s84, 1
      %p186 = scmp.ne.s32.totalorder %s181, %s183
      %p187 = scmp.eq.s32.totalorder %s84, 0
      %p188 = por %p186, %p187
      %p189 = scmp.ne.s32.totalorder %s181, %s183
      %p190 = scmp.eq.s32.totalorder %s89, 1
      %p191 = por %p189, %p190
      %p192 = scmp.ne.s32.totalorder %s183, %s184
      %p193 = scmp.eq.s32.totalorder %s89, 0
      %p194 = por %p192, %p193
      %p195 = scmp.ne.s32.totalorder %s183, %s184
      %p196 = scmp.eq.s32.totalorder %s90, 1
      %p197 = por %p195, %p196
      %p199 = scmp.ne.s32.totalorder %s184, %s198
      %p200 = scmp.eq.s32.totalorder %s90, 0
      %p201 = por %p199, %p200
      %s203 = sadd.s32 %s202, 1
      %p206 = scmp.eq.s32.totalorder %s84, 1
      %p207 = scmp.ne.s32.totalorder %s202, %s204
      %p208 = scmp.eq.s32.totalorder %s84, 0
      %p209 = por %p207, %p208
      %p210 = scmp.ne.s32.totalorder %s202, %s204
      %p211 = scmp.eq.s32.totalorder %s89, 1
      %p212 = por %p210, %p211
      %p213 = scmp.ne.s32.totalorder %s204, %s205
      %p214 = scmp.eq.s32.totalorder %s89, 0
      %p215 = por %p213, %p214
      %p216 = scmp.ne.s32.totalorder %s204, %s205
      %p217 = scmp.eq.s32.totalorder %s90, 1
      %p218 = por %p216, %p217
      %p220 = scmp.ne.s32.totalorder %s205, %s219
      %p221 = scmp.eq.s32.totalorder %s90, 0
      %p222 = por %p220, %p221
      %s224 = sadd.s32 %s223, 1
      %p227 = scmp.eq.s32.totalorder %s84, 1
      %p228 = scmp.ne.s32.totalorder %s223, %s225
      %p229 = scmp.eq.s32.totalorder %s84, 0
      %p230 = por %p228, %p229
      %p231 = scmp.ne.s32.totalorder %s223, %s225
      %p232 = scmp.eq.s32.totalorder %s89, 1
      %p233 = por %p231, %p232
      %p234 = scmp.ne.s32.totalorder %s225, %s226
      %p235 = scmp.eq.s32.totalorder %s89, 0
      %p236 = por %p234, %p235
      %p237 = scmp.ne.s32.totalorder %s225, %s226
      %p238 = scmp.eq.s32.totalorder %s90, 1
      %p239 = por %p237, %p238
      %p241 = scmp.ne.s32.totalorder %s226, %s240
      %p242 = scmp.eq.s32.totalorder %s90, 0
      %p243 = por %p241, %p242
      %s245 = sadd.s32 %s244, 1
      %p248 = scmp.eq.s32.totalorder %s84, 1
      %p249 = scmp.ne.s32.totalorder %s244, %s246
      %p250 = scmp.eq.s32.totalorder %s84, 0
      %p251 = por %p249, %p250
      %p252 = scmp.ne.s32.totalorder %s244, %s246
      %p253 = scmp.eq.s32.totalorder %s89, 1
      %p254 = por %p252, %p253
      %p255 = scmp.ne.s32.totalorder %s246, %s247
      %p256 = scmp.eq.s32.totalorder %s89, 0
      %p257 = por %p255, %p256
      %p258 = scmp.ne.s32.totalorder %s246, %s247
      %p259 = scmp.eq.s32.totalorder %s90, 1
      %p260 = por %p258, %p259
      %p262 = scmp.ne.s32.totalorder %s247, %s261
      %p263 = scmp.eq.s32.totalorder %s90, 0
      %p264 = por %p262, %p263
      %s266 = sadd.s32 %s265, 1
      %p269 = scmp.eq.s32.totalorder %s84, 1
      %p270 = scmp.ne.s32.totalorder %s265, %s267
      %p271 = scmp.eq.s32.totalorder %s84, 0
      %p272 = por %p270, %p271
      %p273 = scmp.ne.s32.totalorder %s265, %s267
      %p274 = scmp.eq.s32.totalorder %s89, 1
      %p275 = por %p273, %p274
      %p276 = scmp.ne.s32.totalorder %s267, %s268
      %p277 = scmp.eq.s32.totalorder %s89, 0
      %p278 = por %p276, %p277
      %p279 = scmp.ne.s32.totalorder %s267, %s268
      %p280 = scmp.eq.s32.totalorder %s90, 1
      %p281 = por %p279, %p280
      %p283 = scmp.ne.s32.totalorder %s268, %s282
      %p284 = scmp.eq.s32.totalorder %s90, 0
      %p285 = por %p283, %p284
      %s287 = sadd.s32 %s286, 1
      %p290 = scmp.eq.s32.totalorder %s84, 1
      %p291 = scmp.ne.s32.totalorder %s286, %s288
      %p292 = scmp.eq.s32.totalorder %s84, 0
      %p293 = por %p291, %p292
      %p294 = scmp.ne.s32.totalorder %s286, %s288
      %p295 = scmp.eq.s32.totalorder %s89, 1
      %p296 = por %p294, %p295
      %p297 = scmp.ne.s32.totalorder %s288, %s289
      %p298 = scmp.eq.s32.totalorder %s89, 0
      %p299 = por %p297, %p298
      %p300 = scmp.ne.s32.totalorder %s288, %s289
      %p301 = scmp.eq.s32.totalorder %s90, 1
      %p302 = por %p300, %p301
      %p304 = scmp.ne.s32.totalorder %s289, %s303
      %p305 = scmp.eq.s32.totalorder %s90, 0
      %p306 = por %p304, %p305
      %s308 = sadd.s32 %s307, 1
      %p311 = scmp.eq.s32.totalorder %s84, 1
      %p312 = scmp.ne.s32.totalorder %s307, %s309
      %p313 = scmp.eq.s32.totalorder %s84, 0
      %p314 = por %p312, %p313
      %p315 = scmp.ne.s32.totalorder %s307, %s309
      %p316 = scmp.eq.s32.totalorder %s89, 1
      %p317 = por %p315, %p316
      %p318 = scmp.ne.s32.totalorder %s309, %s310
      %p319 = scmp.eq.s32.totalorder %s89, 0
      %p320 = por %p318, %p319
      %p321 = scmp.ne.s32.totalorder %s309, %s310
      %p322 = scmp.eq.s32.totalorder %s90, 1
      %p323 = por %p321, %p322
      %p325 = scmp.ne.s32.totalorder %s310, %s324
      %p326 = scmp.eq.s32.totalorder %s90, 0
      %p327 = por %p325, %p326
      %s329 = sadd.s32 %s328, 1
      %p332 = scmp.eq.s32.totalorder %s84, 1
      %p333 = scmp.ne.s32.totalorder %s328, %s330
      %p334 = scmp.eq.s32.totalorder %s84, 0
      %p335 = por %p333, %p334
      %p336 = scmp.ne.s32.totalorder %s328, %s330
      %p337 = scmp.eq.s32.totalorder %s89, 1
      %p338 = por %p336, %p337
      %p339 = scmp.ne.s32.totalorder %s330, %s331
      %p340 = scmp.eq.s32.totalorder %s89, 0
      %p341 = por %p339, %p340
      %p342 = scmp.ne.s32.totalorder %s330, %s331
      %p343 = scmp.eq.s32.totalorder %s90, 1
      %p344 = por %p342, %p343
      %p346 = scmp.ne.s32.totalorder %s331, %s345
      %p347 = scmp.eq.s32.totalorder %s90, 0
      %p348 = por %p346, %p347
      %s350 = sadd.s32 %s349, 1
      %p353 = scmp.eq.s32.totalorder %s84, 1
      %p354 = scmp.ne.s32.totalorder %s349, %s351
      %p355 = scmp.eq.s32.totalorder %s84, 0
      %p356 = por %p354, %p355
      %p357 = scmp.ne.s32.totalorder %s349, %s351
      %p358 = scmp.eq.s32.totalorder %s89, 1
      %p359 = por %p357, %p358
      %p360 = scmp.ne.s32.totalorder %s351, %s352
      %p361 = scmp.eq.s32.totalorder %s89, 0
      %p362 = por %p360, %p361
      %p363 = scmp.ne.s32.totalorder %s351, %s352
      %p364 = scmp.eq.s32.totalorder %s90, 1
      %p365 = por %p363, %p364
      %p367 = scmp.ne.s32.totalorder %s352, %s366
      %p368 = scmp.eq.s32.totalorder %s90, 0
      %p369 = por %p367, %p368
      %s371 = sadd.s32 %s370, 1
      %p374 = scmp.eq.s32.totalorder %s84, 1
      %p375 = scmp.ne.s32.totalorder %s370, %s372
      %p376 = scmp.eq.s32.totalorder %s84, 0
      %p377 = por %p375, %p376
      %p378 = scmp.ne.s32.totalorder %s370, %s372
      %p379 = scmp.eq.s32.totalorder %s89, 1
      %p380 = por %p378, %p379
      %p381 = scmp.ne.s32.totalorder %s372, %s373
      %p382 = scmp.eq.s32.totalorder %s89, 0
      %p383 = por %p381, %p382
      %p384 = scmp.ne.s32.totalorder %s372, %s373
      %p385 = scmp.eq.s32.totalorder %s90, 1
      %p386 = por %p384, %p385
      %p388 = scmp.ne.s32.totalorder %s373, %s387
      %p389 = scmp.eq.s32.totalorder %s90, 0
      %p390 = por %p388, %p389
      %s392 = sadd.s32 %s391, 1
      %p395 = scmp.eq.s32.totalorder %s84, 1
      %p396 = scmp.ne.s32.totalorder %s391, %s393
      %p397 = scmp.eq.s32.totalorder %s84, 0
      %p398 = por %p396, %p397
      %p399 = scmp.ne.s32.totalorder %s391, %s393
      %p400 = scmp.eq.s32.totalorder %s89, 1
      %p401 = por %p399, %p400
      %p402 = scmp.ne.s32.totalorder %s393, %s394
      %p403 = scmp.eq.s32.totalorder %s89, 0
      %p404 = por %p402, %p403
      %p405 = scmp.ne.s32.totalorder %s393, %s394
      %p406 = scmp.eq.s32.totalorder %s90, 1
      %p407 = por %p405, %p406
      %p409 = scmp.ne.s32.totalorder %s394, %s408
      %p410 = scmp.eq.s32.totalorder %s90, 0
      %p411 = por %p409, %p410
      %s413 = sadd.s32 %s412, 1
      %p416 = scmp.eq.s32.totalorder %s84, 1
      %p417 = scmp.ne.s32.totalorder %s412, %s414
      %p418 = scmp.eq.s32.totalorder %s84, 0
      %p419 = por %p417, %p418
      %p420 = scmp.ne.s32.totalorder %s412, %s414
      %p421 = scmp.eq.s32.totalorder %s89, 1
      %p422 = por %p420, %p421
      %p423 = scmp.ne.s32.totalorder %s414, %s415
      %p424 = scmp.eq.s32.totalorder %s89, 0
      %p425 = por %p423, %p424
      %p426 = scmp.ne.s32.totalorder %s414, %s415
      %p427 = scmp.eq.s32.totalorder %s90, 1
      %p428 = por %p426, %p427
      %p430 = scmp.ne.s32.totalorder %s415, %s429
      %p431 = scmp.eq.s32.totalorder %s90, 0
      %p432 = por %p430, %p431
      %s434 = sadd.s32 %s433, 1
      %p437 = scmp.eq.s32.totalorder %s84, 1
      %p438 = scmp.ne.s32.totalorder %s433, %s435
      %p439 = scmp.eq.s32.totalorder %s84, 0
      %p440 = por %p438, %p439
      %p441 = scmp.ne.s32.totalorder %s433, %s435
      %p442 = scmp.eq.s32.totalorder %s89, 1
      %p443 = por %p441, %p442
      %p444 = scmp.ne.s32.totalorder %s435, %s436
      %p445 = scmp.eq.s32.totalorder %s89, 0
      %p446 = por %p444, %p445
      %p447 = scmp.ne.s32.totalorder %s435, %s436
      %p448 = scmp.eq.s32.totalorder %s90, 1
      %p449 = por %p447, %p448
      %p451 = scmp.ne.s32.totalorder %s436, %s450
      %p452 = scmp.eq.s32.totalorder %s90, 0
      %p453 = por %p451, %p452
      %s455 = sadd.s32 %s454, 1
      %p458 = scmp.eq.s32.totalorder %s84, 1
      %p459 = scmp.ne.s32.totalorder %s454, %s456
      %p460 = scmp.eq.s32.totalorder %s84, 0
      %p461 = por %p459, %p460
      %p462 = scmp.ne.s32.totalorder %s454, %s456
      %p463 = scmp.eq.s32.totalorder %s89, 1
      %p464 = por %p462, %p463
      %p465 = scmp.ne.s32.totalorder %s456, %s457
      %p466 = scmp.eq.s32.totalorder %s89, 0
      %p467 = por %p465, %p466
      %p468 = scmp.ne.s32.totalorder %s456, %s457
      %p469 = scmp.eq.s32.totalorder %s90, 1
      %p470 = por %p468, %p469
      %p472 = scmp.ne.s32.totalorder %s457, %s471
      %p473 = scmp.eq.s32.totalorder %s90, 0
      %p474 = por %p472, %p473
      %s476 = sadd.s32 %s475, 1
      %p479 = scmp.eq.s32.totalorder %s84, 1
      %p480 = scmp.ne.s32.totalorder %s475, %s477
      %p481 = scmp.eq.s32.totalorder %s84, 0
      %p482 = por %p480, %p481
      %p483 = scmp.ne.s32.totalorder %s475, %s477
      %p484 = scmp.eq.s32.totalorder %s89, 1
      %p485 = por %p483, %p484
      %p486 = scmp.ne.s32.totalorder %s477, %s478
      %p487 = scmp.eq.s32.totalorder %s89, 0
      %p488 = por %p486, %p487
      %p489 = scmp.ne.s32.totalorder %s477, %s478
      %p490 = scmp.eq.s32.totalorder %s90, 1
      %p491 = por %p489, %p490
      %p493 = scmp.ne.s32.totalorder %s478, %s492
      %p494 = scmp.eq.s32.totalorder %s90, 0
      %p495 = por %p493, %p494
      %s497 = sadd.s32 %s496, 1
      %p500 = scmp.eq.s32.totalorder %s84, 1
      %p501 = scmp.ne.s32.totalorder %s496, %s498
      %p502 = scmp.eq.s32.totalorder %s84, 0
      %p503 = por %p501, %p502
      %p504 = scmp.ne.s32.totalorder %s496, %s498
      %p505 = scmp.eq.s32.totalorder %s89, 1
      %p506 = por %p504, %p505
      %p507 = scmp.ne.s32.totalorder %s498, %s499
      %p508 = scmp.eq.s32.totalorder %s89, 0
      %p509 = por %p507, %p508
      %p510 = scmp.ne.s32.totalorder %s498, %s499
      %p511 = scmp.eq.s32.totalorder %s90, 1
      %p512 = por %p510, %p511
      %p514 = scmp.ne.s32.totalorder %s499, %s513
      %p515 = scmp.eq.s32.totalorder %s90, 0
      %p516 = por %p514, %p515
      %s518 = sadd.s32 %s517, 1
      %p521 = scmp.eq.s32.totalorder %s84, 1
      %p522 = scmp.ne.s32.totalorder %s517, %s519
      %p523 = scmp.eq.s32.totalorder %s84, 0
      %p524 = por %p522, %p523
      %p525 = scmp.ne.s32.totalorder %s517, %s519
      %p526 = scmp.eq.s32.totalorder %s89, 1
      %p527 = por %p525, %p526
      %p528 = scmp.ne.s32.totalorder %s519, %s520
      %p529 = scmp.eq.s32.totalorder %s89, 0
      %p530 = por %p528, %p529
      %p531 = scmp.ne.s32.totalorder %s519, %s520
      %p532 = scmp.eq.s32.totalorder %s90, 1
      %p533 = por %p531, %p532
      %p535 = scmp.ne.s32.totalorder %s520, %s534
      %p536 = scmp.eq.s32.totalorder %s90, 0
      %p537 = por %p535, %p536
      %s539 = sadd.s32 %s538, 1
      %p542 = scmp.eq.s32.totalorder %s84, 1
      %p543 = scmp.ne.s32.totalorder %s538, %s540
      %p544 = scmp.eq.s32.totalorder %s84, 0
      %p545 = por %p543, %p544
      %p546 = scmp.ne.s32.totalorder %s538, %s540
      %p547 = scmp.eq.s32.totalorder %s89, 1
      %p548 = por %p546, %p547
      %p549 = scmp.ne.s32.totalorder %s540, %s541
      %p550 = scmp.eq.s32.totalorder %s89, 0
      %p551 = por %p549, %p550
      %p552 = scmp.ne.s32.totalorder %s540, %s541
      %p553 = scmp.eq.s32.totalorder %s90, 1
      %p554 = por %p552, %p553
      %p556 = scmp.ne.s32.totalorder %s541, %s555
      %p557 = scmp.eq.s32.totalorder %s90, 0
      %p558 = por %p556, %p557
      %s560 = sadd.s32 %s559, 1
      %p563 = scmp.eq.s32.totalorder %s84, 1
      %p564 = scmp.ne.s32.totalorder %s559, %s561
      %p565 = scmp.eq.s32.totalorder %s84, 0
      %p566 = por %p564, %p565
      %p567 = scmp.ne.s32.totalorder %s559, %s561
      %p568 = scmp.eq.s32.totalorder %s89, 1
      %p569 = por %p567, %p568
      %p570 = scmp.ne.s32.totalorder %s561, %s562
      %p571 = scmp.eq.s32.totalorder %s89, 0
      %p572 = por %p570, %p571
      %p573 = scmp.ne.s32.totalorder %s561, %s562
      %p574 = scmp.eq.s32.totalorder %s90, 1
      %p575 = por %p573, %p574
      %p577 = scmp.ne.s32.totalorder %s562, %s576
      %p578 = scmp.eq.s32.totalorder %s90, 0
      %p579 = por %p577, %p578
      %s581 = sadd.s32 %s580, 1
      %p584 = scmp.eq.s32.totalorder %s84, 1
      %p585 = scmp.ne.s32.totalorder %s580, %s582
      %p586 = scmp.eq.s32.totalorder %s84, 0
      %p587 = por %p585, %p586
      %p588 = scmp.ne.s32.totalorder %s580, %s582
      %p589 = scmp.eq.s32.totalorder %s89, 1
      %p590 = por %p588, %p589
      %p591 = scmp.ne.s32.totalorder %s582, %s583
      %p592 = scmp.eq.s32.totalorder %s89, 0
      %p593 = por %p591, %p592
      %p594 = scmp.ne.s32.totalorder %s582, %s583
      %p595 = scmp.eq.s32.totalorder %s90, 1
      %p596 = por %p594, %p595
      %p598 = scmp.ne.s32.totalorder %s583, %s597
      %p599 = scmp.eq.s32.totalorder %s90, 0
      %p600 = por %p598, %p599
      %s602 = sadd.s32 %s601, 1
      %p605 = scmp.eq.s32.totalorder %s84, 1
      %p606 = scmp.ne.s32.totalorder %s601, %s603
      %p607 = scmp.eq.s32.totalorder %s84, 0
      %p608 = por %p606, %p607
      %p609 = scmp.ne.s32.totalorder %s601, %s603
      %p610 = scmp.eq.s32.totalorder %s89, 1
      %p611 = por %p609, %p610
      %p612 = scmp.ne.s32.totalorder %s603, %s604
      %p613 = scmp.eq.s32.totalorder %s89, 0
      %p614 = por %p612, %p613
      %p615 = scmp.ne.s32.totalorder %s603, %s604
      %p616 = scmp.eq.s32.totalorder %s90, 1
      %p617 = por %p615, %p616
      %p619 = scmp.ne.s32.totalorder %s604, %s618
      %p620 = scmp.eq.s32.totalorder %s90, 0
      %p621 = por %p619, %p620
      %s623 = sadd.s32 %s622, 1
      %p626 = scmp.eq.s32.totalorder %s84, 1
      %p627 = scmp.ne.s32.totalorder %s622, %s624
      %p628 = scmp.eq.s32.totalorder %s84, 0
      %p629 = por %p627, %p628
      %p630 = scmp.ne.s32.totalorder %s622, %s624
      %p631 = scmp.eq.s32.totalorder %s89, 1
      %p632 = por %p630, %p631
      %p633 = scmp.ne.s32.totalorder %s624, %s625
      %p634 = scmp.eq.s32.totalorder %s89, 0
      %p635 = por %p633, %p634
      %p636 = scmp.ne.s32.totalorder %s624, %s625
      %p637 = scmp.eq.s32.totalorder %s90, 1
      %p638 = por %p636, %p637
      %p640 = scmp.ne.s32.totalorder %s625, %s639
      %p641 = scmp.eq.s32.totalorder %s90, 0
      %p642 = por %p640, %p641
      %s644 = sadd.s32 %s643, 1
      %p647 = scmp.eq.s32.totalorder %s84, 1
      %p648 = scmp.ne.s32.totalorder %s643, %s645
      %p649 = scmp.eq.s32.totalorder %s84, 0
      %p650 = por %p648, %p649
      %p651 = scmp.ne.s32.totalorder %s643, %s645
      %p652 = scmp.eq.s32.totalorder %s89, 1
      %p653 = por %p651, %p652
      %p654 = scmp.ne.s32.totalorder %s645, %s646
      %p655 = scmp.eq.s32.totalorder %s89, 0
      %p656 = por %p654, %p655
      %p657 = scmp.ne.s32.totalorder %s645, %s646
      %p658 = scmp.eq.s32.totalorder %s90, 1
      %p659 = por %p657, %p658
      %p661 = scmp.ne.s32.totalorder %s646, %s660
      %p662 = scmp.eq.s32.totalorder %s90, 0
      %p663 = por %p661, %p662
      %s665 = sadd.s32 %s664, 1
      %p668 = scmp.eq.s32.totalorder %s84, 1
      %p669 = scmp.ne.s32.totalorder %s664, %s666
      %p670 = scmp.eq.s32.totalorder %s84, 0
      %p671 = por %p669, %p670
      %p672 = scmp.ne.s32.totalorder %s664, %s666
      %p673 = scmp.eq.s32.totalorder %s89, 1
      %p674 = por %p672, %p673
      %p675 = scmp.ne.s32.totalorder %s666, %s667
      %p676 = scmp.eq.s32.totalorder %s89, 0
      %p677 = por %p675, %p676
      %p678 = scmp.ne.s32.totalorder %s666, %s667
      %p679 = scmp.eq.s32.totalorder %s90, 1
      %p680 = por %p678, %p679
      %p682 = scmp.ne.s32.totalorder %s667, %s681
      %p683 = scmp.eq.s32.totalorder %s90, 0
      %p684 = por %p682, %p683
      %s686 = sadd.s32 %s685, 1
      %p689 = scmp.eq.s32.totalorder %s84, 1
      %p690 = scmp.ne.s32.totalorder %s685, %s687
      %p691 = scmp.eq.s32.totalorder %s84, 0
      %p692 = por %p690, %p691
      %p693 = scmp.ne.s32.totalorder %s685, %s687
      %p694 = scmp.eq.s32.totalorder %s89, 1
      %p695 = por %p693, %p694
      %p696 = scmp.ne.s32.totalorder %s687, %s688
      %p697 = scmp.eq.s32.totalorder %s89, 0
      %p698 = por %p696, %p697
      %p699 = scmp.ne.s32.totalorder %s687, %s688
      %p700 = scmp.eq.s32.totalorder %s90, 1
      %p701 = por %p699, %p700
      %p703 = scmp.ne.s32.totalorder %s688, %s702
      %p704 = scmp.eq.s32.totalorder %s90, 0
      %p705 = por %p703, %p704
      %s707 = sadd.s32 %s706, 1
      %p710 = scmp.eq.s32.totalorder %s84, 1
      %p711 = scmp.ne.s32.totalorder %s706, %s708
      %p712 = scmp.eq.s32.totalorder %s84, 0
      %p713 = por %p711, %p712
      %p714 = scmp.ne.s32.totalorder %s706, %s708
      %p715 = scmp.eq.s32.totalorder %s89, 1
      %p716 = por %p714, %p715
      %p717 = scmp.ne.s32.totalorder %s708, %s709
      %p718 = scmp.eq.s32.totalorder %s89, 0
      %p719 = por %p717, %p718
      %p720 = scmp.ne.s32.totalorder %s708, %s709
      %p721 = scmp.eq.s32.totalorder %s90, 1
      %p722 = por %p720, %p721
      %p724 = scmp.ne.s32.totalorder %s709, %s723
      %p725 = scmp.eq.s32.totalorder %s90, 0
      %p726 = por %p724, %p725
      %s728 = sadd.s32 %s727, 1
      %p731 = scmp.eq.s32.totalorder %s84, 1
      %p732 = scmp.ne.s32.totalorder %s727, %s729
      %p733 = scmp.eq.s32.totalorder %s84, 0
      %p734 = por %p732, %p733
      %p735 = scmp.ne.s32.totalorder %s727, %s729
      %p736 = scmp.eq.s32.totalorder %s89, 1
      %p737 = por %p735, %p736
      %p738 = scmp.ne.s32.totalorder %s729, %s730
      %p739 = scmp.eq.s32.totalorder %s89, 0
      %p740 = por %p738, %p739
      %p741 = scmp.ne.s32.totalorder %s729, %s730
      %p742 = scmp.eq.s32.totalorder %s90, 1
      %p743 = por %p741, %p742
      %p745 = scmp.ne.s32.totalorder %s730, %s744
      %p746 = scmp.eq.s32.totalorder %s90, 0
      %p747 = por %p745, %p746
      %s749 = sadd.s32 %s748, 1
      %p752 = scmp.eq.s32.totalorder %s84, 1
      %p753 = scmp.ne.s32.totalorder %s748, %s750
      %p754 = scmp.eq.s32.totalorder %s84, 0
      %p755 = por %p753, %p754
      %p756 = scmp.ne.s32.totalorder %s748, %s750
      %p757 = scmp.eq.s32.totalorder %s89, 1
      %p758 = por %p756, %p757
      %p759 = scmp.ne.s32.totalorder %s750, %s751
      %p760 = scmp.eq.s32.totalorder %s89, 0
      %p761 = por %p759, %p760
      %p762 = scmp.ne.s32.totalorder %s750, %s751
      %p763 = scmp.eq.s32.totalorder %s90, 1
      %p764 = por %p762, %p763
      %p766 = scmp.ne.s32.totalorder %s751, %s765
      %p767 = scmp.eq.s32.totalorder %s90, 0
      %p768 = por %p766, %p767
      %s770 = sadd.s32 %s769, 1
      %p773 = scmp.eq.s32.totalorder %s84, 1
      %p774 = scmp.ne.s32.totalorder %s769, %s771
      %p775 = scmp.eq.s32.totalorder %s84, 0
      %p776 = por %p774, %p775
      %p777 = scmp.ne.s32.totalorder %s769, %s771
      %p778 = scmp.eq.s32.totalorder %s89, 1
      %p779 = por %p777, %p778
      %p780 = scmp.ne.s32.totalorder %s771, %s772
      %p781 = scmp.eq.s32.totalorder %s89, 0
      %p782 = por %p780, %p781
      %p783 = scmp.ne.s32.totalorder %s771, %s772
      %p784 = scmp.eq.s32.totalorder %s90, 1
      %p785 = por %p783, %p784
      %p787 = scmp.ne.s32.totalorder %s772, %s786
      %p788 = scmp.eq.s32.totalorder %s90, 0
      %p789 = por %p787, %p788
      %s790 = ssub.s32 %s84, %s91
      %p791 = scmp.eq.s32.totalorder %s790, 0
      %s793 = sadd.s32 %s792, 1
      %s794 = scalar_select %p791, %s792, %s793
      %p797 = pneg %p791
      %p798 = scmp.eq.s32.totalorder %s84, 1
      %p799 = por %p797, %p798
      %p800 = scmp.ne.s32.totalorder %s792, %s795
      %p801 = scmp.eq.s32.totalorder %s84, 0
      %p802 = por %p800, %p801
      %p803 = scmp.ne.s32.totalorder %s792, %s795
      %p804 = scmp.eq.s32.totalorder %s89, 1
      %p805 = por %p803, %p804
      %p806 = scmp.ne.s32.totalorder %s795, %s796
      %p807 = scmp.eq.s32.totalorder %s89, 0
      %p808 = por %p806, %p807
      %p809 = scmp.ne.s32.totalorder %s795, %s796
      %p810 = scmp.eq.s32.totalorder %s90, 1
      %p811 = por %p809, %p810
      %p813 = scmp.ne.s32.totalorder %s796, %s812
      %p814 = scmp.eq.s32.totalorder %s90, 0
      %p815 = por %p813, %p814
      %p816 = scmp.le.s32.totalorder 1, %s84
      %p817 = scmp.lt.s32.totalorder %s84, 3
      %p818 = pnand %p816, %p817
      %p819 = pneg %p818
      // Predicated region
      $region9: #{temporal_conv_static_e_forward.1} parent=5 // pred_check
        _
      $region10: #{temporal_conv_static_e_forward.1} parent=5 // pred_check_branch
        %821 = sbr.rel (%p818) target = $region12
      $region11: #{temporal_conv_static_e_forward.1} parent=5 // pred_region
        %s822 = ssub.s32 %s84, 1
        // Predicated region
        $region13: #{temporal_conv_static_e_forward.1} parent=11 // pred_check
          %p823 = pneg %p131
        $region14: #{temporal_conv_static_e_forward.1} parent=11 // pred_check_branch
          %825 = sbr.rel (%p823) target = $region16
        $region15: #{temporal_conv_static_e_forward.1} parent=11 // pred_region
          _
        $region16: #{temporal_conv_static_e_forward.1} parent=11 // pred_fallthru
          _
        // Predicated region
        $region17: #{temporal_conv_static_e_forward.1} parent=11 // pred_check
          %p826 = pneg %p152
        $region18: #{temporal_conv_static_e_forward.1} parent=11 // pred_check_branch
          %828 = sbr.rel (%p826) target = $region20
        $region19: #{temporal_conv_static_e_forward.1} parent=11 // pred_region
          _
        $region20: #{temporal_conv_static_e_forward.1} parent=11 // pred_fallthru
          _
        // Predicated region
        $region21: #{temporal_conv_static_e_forward.1} parent=11 // pred_check
          %p829 = pneg %p173
        $region22: #{temporal_conv_static_e_forward.1} parent=11 // pred_check_branch
          %831 = sbr.rel (%p829) target = $region24
        $region23: #{temporal_conv_static_e_forward.1} parent=11 // pred_region
          _
        $region24: #{temporal_conv_static_e_forward.1} parent=11 // pred_fallthru
          _
        // Predicated region
        $region25: #{temporal_conv_static_e_forward.1} parent=11 // pred_check
          %p832 = pneg %p194
        $region26: #{temporal_conv_static_e_forward.1} parent=11 // pred_check_branch
          %834 = sbr.rel (%p832) target = $region28
        $region27: #{temporal_conv_static_e_forward.1} parent=11 // pred_region
          %836 = vsyncadd [#allocation3], 0
          %s837 = sshll.u32 %s9, 4
          %s838 = int_to_ptr.hbm [resolvable:$true] %s837
          %s839 = sshll.u32 [#allocation2], 4
          %s840 = int_to_ptr.vmem [resolvable:$true] %s839
          %845 = dma.hbm_to_vmem [thread:$0]  %s838, 1024, %s840, [#allocation3], 64, 64, 4
        $region28: #{temporal_conv_static_e_forward.1} parent=11 // pred_fallthru
          _
        // Predicated region
        $region29: #{temporal_conv_static_e_forward.1} parent=11 // pred_check
          %p846 = pneg %p215
        $region30: #{temporal_conv_static_e_forward.1} parent=11 // pred_check_branch
          %848 = sbr.rel (%p846) target = $region32
        $region31: #{temporal_conv_static_e_forward.1} parent=11 // pred_region
          %850 = vsyncadd [#allocation5], 0
          %s851 = sshll.u32 %s11, 4
          %s852 = int_to_ptr.hbm [resolvable:$true] %s851
          %s853 = sshll.u32 [#allocation4], 4
          %s854 = int_to_ptr.vmem [resolvable:$true] %s853
          %859 = dma.hbm_to_vmem [thread:$0]  %s852, 1024, %s854, [#allocation5], 64, 64, 4
        $region32: #{temporal_conv_static_e_forward.1} parent=11 // pred_fallthru
          _
        // Predicated region
        $region33: #{temporal_conv_static_e_forward.1} parent=11 // pred_check
          %p860 = pneg %p236
        $region34: #{temporal_conv_static_e_forward.1} parent=11 // pred_check_branch
          %862 = sbr.rel (%p860) target = $region36
        $region35: #{temporal_conv_static_e_forward.1} parent=11 // pred_region
          _
        $region36: #{temporal_conv_static_e_forward.1} parent=11 // pred_fallthru
          _
        // Predicated region
        $region37: #{temporal_conv_static_e_forward.1} parent=11 // pred_check
          %p863 = pneg %p257
        $region38: #{temporal_conv_static_e_forward.1} parent=11 // pred_check_branch
          %865 = sbr.rel (%p863) target = $region40
        $region39: #{temporal_conv_static_e_forward.1} parent=11 // pred_region
          %867 = vsyncadd [#allocation5], 0
          %s868 = sshll.u32 %s15, 4
          %s869 = int_to_ptr.hbm [resolvable:$true] %s868
          %s870 = sshll.u32 [#allocation6], 4
          %s871 = int_to_ptr.vmem [resolvable:$true] %s870
          %876 = dma.hbm_to_vmem [thread:$0]  %s869, 1024, %s871, [#allocation5], 64, 64, 4
        $region40: #{temporal_conv_static_e_forward.1} parent=11 // pred_fallthru
          _
        // Predicated region
        $region41: #{temporal_conv_static_e_forward.1} parent=11 // pred_check
          %p877 = pneg %p278
        $region42: #{temporal_conv_static_e_forward.1} parent=11 // pred_check_branch
          %879 = sbr.rel (%p877) target = $region44
        $region43: #{temporal_conv_static_e_forward.1} parent=11 // pred_region
          _
        $region44: #{temporal_conv_static_e_forward.1} parent=11 // pred_fallthru
          _
        // Predicated region
        $region45: #{temporal_conv_static_e_forward.1} parent=11 // pred_check
          %p880 = pneg %p299
        $region46: #{temporal_conv_static_e_forward.1} parent=11 // pred_check_branch
          %882 = sbr.rel (%p880) target = $region48
        $region47: #{temporal_conv_static_e_forward.1} parent=11 // pred_region
          %884 = vsyncadd [#allocation8], 0
          %s885 = sshll.u32 %s19, 4
          %s886 = int_to_ptr.hbm [resolvable:$true] %s885
          %s887 = sshll.u32 [#allocation7], 4
          %s888 = int_to_ptr.vmem [resolvable:$true] %s887
          %893 = dma.hbm_to_vmem [thread:$0]  %s886, 1024, %s888, [#allocation8], 64, 64, 4
        $region48: #{temporal_conv_static_e_forward.1} parent=11 // pred_fallthru
          _
        // Predicated region
        $region49: #{temporal_conv_static_e_forward.1} parent=11 // pred_check
          %p894 = pneg %p320
        $region50: #{temporal_conv_static_e_forward.1} parent=11 // pred_check_branch
          %896 = sbr.rel (%p894) target = $region52
        $region51: #{temporal_conv_static_e_forward.1} parent=11 // pred_region
          %898 = vsyncadd [#allocation8], 0
          %s899 = sshll.u32 %s21, 4
          %s900 = int_to_ptr.hbm [resolvable:$true] %s899
          %s901 = sshll.u32 [#allocation9], 4
          %s902 = int_to_ptr.vmem [resolvable:$true] %s901
          %907 = dma.hbm_to_vmem [thread:$0]  %s900, 1024, %s902, [#allocation8], 64, 64, 4
        $region52: #{temporal_conv_static_e_forward.1} parent=11 // pred_fallthru
          _
        // Predicated region
        $region53: #{temporal_conv_static_e_forward.1} parent=11 // pred_check
          %p908 = pneg %p341
        $region54: #{temporal_conv_static_e_forward.1} parent=11 // pred_check_branch
          %910 = sbr.rel (%p908) target = $region56
        $region55: #{temporal_conv_static_e_forward.1} parent=11 // pred_region
          _
        $region56: #{temporal_conv_static_e_forward.1} parent=11 // pred_fallthru
          _
        // Predicated region
        $region57: #{temporal_conv_static_e_forward.1} parent=11 // pred_check
          %p911 = pneg %p362
        $region58: #{temporal_conv_static_e_forward.1} parent=11 // pred_check_branch
          %913 = sbr.rel (%p911) target = $region60
        $region59: #{temporal_conv_static_e_forward.1} parent=11 // pred_region
          %915 = vsyncadd [#allocation11], 0
          %s916 = sshll.u32 %s25, 4
          %s917 = int_to_ptr.hbm [resolvable:$true] %s916
          %s918 = sshll.u32 [#allocation10], 4
          %s919 = int_to_ptr.vmem [resolvable:$true] %s918
          %924 = dma.hbm_to_vmem [thread:$0]  %s917, 1024, %s919, [#allocation11], 64, 64, 4
        $region60: #{temporal_conv_static_e_forward.1} parent=11 // pred_fallthru
          _
        // Predicated region
        $region61: #{temporal_conv_static_e_forward.1} parent=11 // pred_check
          %p925 = pneg %p383
        $region62: #{temporal_conv_static_e_forward.1} parent=11 // pred_check_branch
          %927 = sbr.rel (%p925) target = $region64
        $region63: #{temporal_conv_static_e_forward.1} parent=11 // pred_region
          %929 = vsyncadd [#allocation11], 0
          %s930 = sshll.u32 %s27, 4
          %s931 = int_to_ptr.hbm [resolvable:$true] %s930
          %s932 = sshll.u32 [#allocation12], 4
          %s933 = int_to_ptr.vmem [resolvable:$true] %s932
          %938 = dma.hbm_to_vmem [thread:$0]  %s931, 1024, %s933, [#allocation11], 64, 64, 4
        $region64: #{temporal_conv_static_e_forward.1} parent=11 // pred_fallthru
          _
        // Predicated region
        $region65: #{temporal_conv_static_e_forward.1} parent=11 // pred_check
          %p939 = pneg %p404
        $region66: #{temporal_conv_static_e_forward.1} parent=11 // pred_check_branch
          %941 = sbr.rel (%p939) target = $region68
        $region67: #{temporal_conv_static_e_forward.1} parent=11 // pred_region
          _
        $region68: #{temporal_conv_static_e_forward.1} parent=11 // pred_fallthru
          _
        // Predicated region
        $region69: #{temporal_conv_static_e_forward.1} parent=11 // pred_check
          %p942 = pneg %p425
        $region70: #{temporal_conv_static_e_forward.1} parent=11 // pred_check_branch
          %944 = sbr.rel (%p942) target = $region72
        $region71: #{temporal_conv_static_e_forward.1} parent=11 // pred_region
          %946 = vsyncadd [#allocation14], 0
          %s947 = sshll.u32 %s31, 4
          %s948 = int_to_ptr.hbm [resolvable:$true] %s947
          %s949 = sshll.u32 [#allocation13], 4
          %s950 = int_to_ptr.vmem [resolvable:$true] %s949
          %955 = dma.hbm_to_vmem [thread:$0]  %s948, 1024, %s950, [#allocation14], 64, 64, 4
        $region72: #{temporal_conv_static_e_forward.1} parent=11 // pred_fallthru
          _
        // Predicated region
        $region73: #{temporal_conv_static_e_forward.1} parent=11 // pred_check
          %p956 = pneg %p446
        $region74: #{temporal_conv_static_e_forward.1} parent=11 // pred_check_branch
          %958 = sbr.rel (%p956) target = $region76
        $region75: #{temporal_conv_static_e_forward.1} parent=11 // pred_region
          %960 = vsyncadd [#allocation14], 0
          %s961 = sshll.u32 %s33, 4
          %s962 = int_to_ptr.hbm [resolvable:$true] %s961
          %s963 = sshll.u32 [#allocation15], 4
          %s964 = int_to_ptr.vmem [resolvable:$true] %s963
          %969 = dma.hbm_to_vmem [thread:$0]  %s962, 1024, %s964, [#allocation14], 64, 64, 4
        $region76: #{temporal_conv_static_e_forward.1} parent=11 // pred_fallthru
          _
        // Predicated region
        $region77: #{temporal_conv_static_e_forward.1} parent=11 // pred_check
          %p970 = pneg %p467
        $region78: #{temporal_conv_static_e_forward.1} parent=11 // pred_check_branch
          %972 = sbr.rel (%p970) target = $region80
        $region79: #{temporal_conv_static_e_forward.1} parent=11 // pred_region
          _
        $region80: #{temporal_conv_static_e_forward.1} parent=11 // pred_fallthru
          _
        // Predicated region
        $region81: #{temporal_conv_static_e_forward.1} parent=11 // pred_check
          %p973 = pneg %p488
        $region82: #{temporal_conv_static_e_forward.1} parent=11 // pred_check_branch
          %975 = sbr.rel (%p973) target = $region84
        $region83: #{temporal_conv_static_e_forward.1} parent=11 // pred_region
          %977 = vsyncadd [#allocation17], 0
          %s978 = sshll.u32 %s37, 4
          %s979 = int_to_ptr.hbm [resolvable:$true] %s978
          %s980 = sshll.u32 [#allocation16], 4
          %s981 = int_to_ptr.vmem [resolvable:$true] %s980
          %986 = dma.hbm_to_vmem [thread:$0]  %s979, 1024, %s981, [#allocation17], 64, 64, 4
        $region84: #{temporal_conv_static_e_forward.1} parent=11 // pred_fallthru
          _
        // Predicated region
        $region85: #{temporal_conv_static_e_forward.1} parent=11 // pred_check
          %p987 = pneg %p509
        $region86: #{temporal_conv_static_e_forward.1} parent=11 // pred_check_branch
          %989 = sbr.rel (%p987) target = $region88
        $region87: #{temporal_conv_static_e_forward.1} parent=11 // pred_region
          %991 = vsyncadd [#allocation17], 0
          %s992 = sshll.u32 %s39, 4
          %s993 = int_to_ptr.hbm [resolvable:$true] %s992
          %s994 = sshll.u32 [#allocation18], 4
          %s995 = int_to_ptr.vmem [resolvable:$true] %s994
          %1000 = dma.hbm_to_vmem [thread:$0]  %s993, 1024, %s995, [#allocation17], 64, 64, 4
        $region88: #{temporal_conv_static_e_forward.1} parent=11 // pred_fallthru
          _
        // Predicated region
        $region89: #{temporal_conv_static_e_forward.1} parent=11 // pred_check
          %p1001 = pneg %p530
        $region90: #{temporal_conv_static_e_forward.1} parent=11 // pred_check_branch
          %1003 = sbr.rel (%p1001) target = $region92
        $region91: #{temporal_conv_static_e_forward.1} parent=11 // pred_region
          _
        $region92: #{temporal_conv_static_e_forward.1} parent=11 // pred_fallthru
          _
        // Predicated region
        $region93: #{temporal_conv_static_e_forward.1} parent=11 // pred_check
          %p1004 = pneg %p551
        $region94: #{temporal_conv_static_e_forward.1} parent=11 // pred_check_branch
          %1006 = sbr.rel (%p1004) target = $region96
        $region95: #{temporal_conv_static_e_forward.1} parent=11 // pred_region
          %1008 = vsyncadd [#allocation20], 0
          %s1009 = sshll.u32 %s43, 4
          %s1010 = int_to_ptr.hbm [resolvable:$true] %s1009
          %s1011 = sshll.u32 [#allocation19], 4
          %s1012 = int_to_ptr.vmem [resolvable:$true] %s1011
          %1017 = dma.hbm_to_vmem [thread:$0]  %s1010, 1024, %s1012, [#allocation20], 64, 64, 4
        $region96: #{temporal_conv_static_e_forward.1} parent=11 // pred_fallthru
          _
        // Predicated region
        $region97: #{temporal_conv_static_e_forward.1} parent=11 // pred_check
          %p1018 = pneg %p572
        $region98: #{temporal_conv_static_e_forward.1} parent=11 // pred_check_branch
          %1020 = sbr.rel (%p1018) target = $region100
        $region99: #{temporal_conv_static_e_forward.1} parent=11 // pred_region
          %1022 = vsyncadd [#allocation20], 0
          %s1023 = sshll.u32 %s45, 4
          %s1024 = int_to_ptr.hbm [resolvable:$true] %s1023
          %s1025 = sshll.u32 [#allocation21], 4
          %s1026 = int_to_ptr.vmem [resolvable:$true] %s1025
          %1031 = dma.hbm_to_vmem [thread:$0]  %s1024, 1024, %s1026, [#allocation20], 64, 64, 4
        $region100: #{temporal_conv_static_e_forward.1} parent=11 // pred_fallthru
          _
        // Predicated region
        $region101: #{temporal_conv_static_e_forward.1} parent=11 // pred_check
          %p1032 = pneg %p593
        $region102: #{temporal_conv_static_e_forward.1} parent=11 // pred_check_branch
          %1034 = sbr.rel (%p1032) target = $region104
        $region103: #{temporal_conv_static_e_forward.1} parent=11 // pred_region
          _
        $region104: #{temporal_conv_static_e_forward.1} parent=11 // pred_fallthru
          _
        // Predicated region
        $region105: #{temporal_conv_static_e_forward.1} parent=11 // pred_check
          %p1035 = pneg %p614
        $region106: #{temporal_conv_static_e_forward.1} parent=11 // pred_check_branch
          %1037 = sbr.rel (%p1035) target = $region108
        $region107: #{temporal_conv_static_e_forward.1} parent=11 // pred_region
          %1039 = vsyncadd [#allocation23], 0
          %s1040 = sshll.u32 %s49, 4
          %s1041 = int_to_ptr.hbm [resolvable:$true] %s1040
          %s1042 = sshll.u32 [#allocation22], 4
          %s1043 = int_to_ptr.vmem [resolvable:$true] %s1042
          %1048 = dma.hbm_to_vmem [thread:$0]  %s1041, 1024, %s1043, [#allocation23], 64, 64, 4
        $region108: #{temporal_conv_static_e_forward.1} parent=11 // pred_fallthru
          _
        // Predicated region
        $region109: #{temporal_conv_static_e_forward.1} parent=11 // pred_check
          %p1049 = pneg %p635
        $region110: #{temporal_conv_static_e_forward.1} parent=11 // pred_check_branch
          %1051 = sbr.rel (%p1049) target = $region112
        $region111: #{temporal_conv_static_e_forward.1} parent=11 // pred_region
          %1053 = vsyncadd [#allocation23], 0
          %s1054 = sshll.u32 %s51, 4
          %s1055 = int_to_ptr.hbm [resolvable:$true] %s1054
          %s1056 = sshll.u32 [#allocation24], 4
          %s1057 = int_to_ptr.vmem [resolvable:$true] %s1056
          %1062 = dma.hbm_to_vmem [thread:$0]  %s1055, 1024, %s1057, [#allocation23], 64, 64, 4
        $region112: #{temporal_conv_static_e_forward.1} parent=11 // pred_fallthru
          _
        // Predicated region
        $region113: #{temporal_conv_static_e_forward.1} parent=11 // pred_check
          %p1063 = pneg %p656
        $region114: #{temporal_conv_static_e_forward.1} parent=11 // pred_check_branch
          %1065 = sbr.rel (%p1063) target = $region116
        $region115: #{temporal_conv_static_e_forward.1} parent=11 // pred_region
          _
        $region116: #{temporal_conv_static_e_forward.1} parent=11 // pred_fallthru
          _
        // Predicated region
        $region117: #{temporal_conv_static_e_forward.1} parent=11 // pred_check
          %p1066 = pneg %p677
        $region118: #{temporal_conv_static_e_forward.1} parent=11 // pred_check_branch
          %1068 = sbr.rel (%p1066) target = $region120
        $region119: #{temporal_conv_static_e_forward.1} parent=11 // pred_region
          %1070 = vsyncadd [#allocation26], 0
          %s1071 = sshll.u32 %s55, 4
          %s1072 = int_to_ptr.hbm [resolvable:$true] %s1071
          %s1073 = sshll.u32 [#allocation25], 4
          %s1074 = int_to_ptr.vmem [resolvable:$true] %s1073
          %1079 = dma.hbm_to_vmem [thread:$0]  %s1072, 1024, %s1074, [#allocation26], 64, 64, 4
        $region120: #{temporal_conv_static_e_forward.1} parent=11 // pred_fallthru
          _
        // Predicated region
        $region121: #{temporal_conv_static_e_forward.1} parent=11 // pred_check
          %p1080 = pneg %p698
        $region122: #{temporal_conv_static_e_forward.1} parent=11 // pred_check_branch
          %1082 = sbr.rel (%p1080) target = $region124
        $region123: #{temporal_conv_static_e_forward.1} parent=11 // pred_region
          %1084 = vsyncadd [#allocation26], 0
          %s1086 = sshll.u32 %s57, 4
          %s1087 = int_to_ptr.hbm [resolvable:$true] %s1086
          %s1088 = sshll.u32 [#allocation27], 4
          %s1089 = int_to_ptr.vmem [resolvable:$true] %s1088
          %1091 = dma.hbm_to_vmem [thread:$0]  %s1087, 16, %s1089, [#allocation26]
        $region124: #{temporal_conv_static_e_forward.1} parent=11 // pred_fallthru
          _
        // Predicated region
        $region125: #{temporal_conv_static_e_forward.1} parent=11 // pred_check
          %p1092 = pneg %p719
        $region126: #{temporal_conv_static_e_forward.1} parent=11 // pred_check_branch
          %1094 = sbr.rel (%p1092) target = $region128
        $region127: #{temporal_conv_static_e_forward.1} parent=11 // pred_region
          %1096 = vsyncadd [#allocation29], 0
          %s1097 = sshll.u32 %s59, 4
          %s1098 = int_to_ptr.hbm [resolvable:$true] %s1097
          %s1099 = sshll.u32 [#allocation28], 4
          %s1100 = int_to_ptr.vmem [resolvable:$true] %s1099
          %1105 = dma.hbm_to_vmem [thread:$0]  %s1098, 1024, %s1100, [#allocation29], 64, 64, 4
        $region128: #{temporal_conv_static_e_forward.1} parent=11 // pred_fallthru
          _
        // Predicated region
        $region129: #{temporal_conv_static_e_forward.1} parent=11 // pred_check
          %p1106 = pneg %p740
        $region130: #{temporal_conv_static_e_forward.1} parent=11 // pred_check_branch
          %1108 = sbr.rel (%p1106) target = $region132
        $region131: #{temporal_conv_static_e_forward.1} parent=11 // pred_region
          %1110 = vsyncadd [#allocation29], 0
          %s1112 = sshll.u32 %s61, 4
          %s1113 = int_to_ptr.hbm [resolvable:$true] %s1112
          %s1114 = sshll.u32 [#allocation30], 4
          %s1115 = int_to_ptr.vmem [resolvable:$true] %s1114
          %1117 = dma.hbm_to_vmem [thread:$0]  %s1113, 16, %s1115, [#allocation29]
        $region132: #{temporal_conv_static_e_forward.1} parent=11 // pred_fallthru
          _
        // Predicated region
        $region133: #{temporal_conv_static_e_forward.1} parent=11 // pred_check
          %p1118 = pneg %p761
        $region134: #{temporal_conv_static_e_forward.1} parent=11 // pred_check_branch
          %1120 = sbr.rel (%p1118) target = $region136
        $region135: #{temporal_conv_static_e_forward.1} parent=11 // pred_region
          %1122 = vsyncadd [#allocation32], 0
          %s1123 = sshll.u32 %s63, 4
          %s1124 = int_to_ptr.hbm [resolvable:$true] %s1123
          %s1125 = sshll.u32 [#allocation31], 4
          %s1126 = int_to_ptr.vmem [resolvable:$true] %s1125
          %1131 = dma.hbm_to_vmem [thread:$0]  %s1124, 1024, %s1126, [#allocation32], 64, 64, 4
        $region136: #{temporal_conv_static_e_forward.1} parent=11 // pred_fallthru
          _
        // Predicated region
        $region137: #{temporal_conv_static_e_forward.1} parent=11 // pred_check
          %p1132 = pneg %p782
        $region138: #{temporal_conv_static_e_forward.1} parent=11 // pred_check_branch
          %1134 = sbr.rel (%p1132) target = $region140
        $region139: #{temporal_conv_static_e_forward.1} parent=11 // pred_region
          %1136 = vsyncadd [#allocation32], 0
          %s1138 = sshll.u32 %s65, 4
          %s1139 = int_to_ptr.hbm [resolvable:$true] %s1138
          %s1140 = sshll.u32 [#allocation33], 4
          %s1141 = int_to_ptr.vmem [resolvable:$true] %s1140
          %1143 = dma.hbm_to_vmem [thread:$0]  %s1139, 16, %s1141, [#allocation32]
        $region140: #{temporal_conv_static_e_forward.1} parent=11 // pred_fallthru
          _
      $region12: #{temporal_conv_static_e_forward.1} parent=5 // pred_fallthru
        _
      %p1144 = scmp.lt.s32.totalorder %s84, 2
      // Predicated region
      $region141: #{temporal_conv_static_e_forward.1} parent=5 // pred_check
        %p1145 = pneg %p1144
      $region142: #{temporal_conv_static_e_forward.1} parent=5 // pred_check_branch
        %1147 = sbr.rel (%p1145) target = $region144
      $region143: #{temporal_conv_static_e_forward.1} parent=5 // pred_region
        // Predicated region
        $region145: #{temporal_conv_static_e_forward.1} parent=143 // pred_check
          %p1148 = pneg %p104
        $region146: #{temporal_conv_static_e_forward.1} parent=143 // pred_check_branch
          %1150 = sbr.rel (%p1148) target = $region148
        $region147: #{temporal_conv_static_e_forward.1} parent=143 // pred_region
          %p1151 = scmp.lt.s32.totalorder %s84, 1
          %s1152 = scalar_select %p1151, %s84, 1
          %s1153 = smul.addr %s1152, 2
          %s1154 = smul.addr %s1153, 4
          %s1155 = scalar_lea.vmem %s1, %s1154
        $region148: #{temporal_conv_static_e_forward.1} parent=143 // pred_fallthru
          _
      $region144: #{temporal_conv_static_e_forward.1} parent=5 // pred_fallthru
        _
      %p1156 = scmp.le.s32.totalorder 1, %s84
      %p1157 = scmp.lt.s32.totalorder %s84, 3
      %p1158 = pnand %p1156, %p1157
      %p1159 = pneg %p1158
      // Predicated region
      $region149: #{temporal_conv_static_e_forward.1} parent=5 // pred_check
        _
      $region150: #{temporal_conv_static_e_forward.1} parent=5 // pred_check_branch
        %1161 = sbr.rel (%p1158) target = $region152
      $region151: #{temporal_conv_static_e_forward.1} parent=5 // pred_region
        %s1162 = ssub.s32 %s84, 1
        // Predicated region
        $region153: #{temporal_conv_static_e_forward.1} parent=151 // pred_check
          %p1163 = pneg %p194
        $region154: #{temporal_conv_static_e_forward.1} parent=151 // pred_check_branch
          %1165 = sbr.rel (%p1163) target = $region156
        $region155: #{temporal_conv_static_e_forward.1} parent=151 // pred_region
          %1167 = dma.done [#allocation3], 1024
        $region156: #{temporal_conv_static_e_forward.1} parent=151 // pred_fallthru
          _
        // Predicated region
        $region157: #{temporal_conv_static_e_forward.1} parent=151 // pred_check
          %p1168 = pneg %p215
        $region158: #{temporal_conv_static_e_forward.1} parent=151 // pred_check_branch
          %1170 = sbr.rel (%p1168) target = $region160
        $region159: #{temporal_conv_static_e_forward.1} parent=151 // pred_region
          %1172 = dma.done [#allocation5], 1024
        $region160: #{temporal_conv_static_e_forward.1} parent=151 // pred_fallthru
          _
        // Predicated region
        $region161: #{temporal_conv_static_e_forward.1} parent=151 // pred_check
          %p1173 = pneg %p257
        $region162: #{temporal_conv_static_e_forward.1} parent=151 // pred_check_branch
          %1175 = sbr.rel (%p1173) target = $region164
        $region163: #{temporal_conv_static_e_forward.1} parent=151 // pred_region
          %1177 = dma.done [#allocation5], 1024
        $region164: #{temporal_conv_static_e_forward.1} parent=151 // pred_fallthru
          _
        // Predicated region
        $region165: #{temporal_conv_static_e_forward.1} parent=151 // pred_check
          %p1178 = pneg %p299
        $region166: #{temporal_conv_static_e_forward.1} parent=151 // pred_check_branch
          %1180 = sbr.rel (%p1178) target = $region168
        $region167: #{temporal_conv_static_e_forward.1} parent=151 // pred_region
          %1182 = dma.done [#allocation8], 1024
        $region168: #{temporal_conv_static_e_forward.1} parent=151 // pred_fallthru
          _
        // Predicated region
        $region169: #{temporal_conv_static_e_forward.1} parent=151 // pred_check
          %p1183 = pneg %p320
        $region170: #{temporal_conv_static_e_forward.1} parent=151 // pred_check_branch
          %1185 = sbr.rel (%p1183) target = $region172
        $region171: #{temporal_conv_static_e_forward.1} parent=151 // pred_region
          %1187 = dma.done [#allocation8], 1024
        $region172: #{temporal_conv_static_e_forward.1} parent=151 // pred_fallthru
          _
        // Predicated region
        $region173: #{temporal_conv_static_e_forward.1} parent=151 // pred_check
          %p1188 = pneg %p362
        $region174: #{temporal_conv_static_e_forward.1} parent=151 // pred_check_branch
          %1190 = sbr.rel (%p1188) target = $region176
        $region175: #{temporal_conv_static_e_forward.1} parent=151 // pred_region
          %1192 = dma.done [#allocation11], 1024
        $region176: #{temporal_conv_static_e_forward.1} parent=151 // pred_fallthru
          _
        // Predicated region
        $region177: #{temporal_conv_static_e_forward.1} parent=151 // pred_check
          %p1193 = pneg %p383
        $region178: #{temporal_conv_static_e_forward.1} parent=151 // pred_check_branch
          %1195 = sbr.rel (%p1193) target = $region180
        $region179: #{temporal_conv_static_e_forward.1} parent=151 // pred_region
          %1197 = dma.done [#allocation11], 1024
        $region180: #{temporal_conv_static_e_forward.1} parent=151 // pred_fallthru
          _
        // Predicated region
        $region181: #{temporal_conv_static_e_forward.1} parent=151 // pred_check
          %p1198 = pneg %p425
        $region182: #{temporal_conv_static_e_forward.1} parent=151 // pred_check_branch
          %1200 = sbr.rel (%p1198) target = $region184
        $region183: #{temporal_conv_static_e_forward.1} parent=151 // pred_region
          %1202 = dma.done [#allocation14], 1024
        $region184: #{temporal_conv_static_e_forward.1} parent=151 // pred_fallthru
          _
        // Predicated region
        $region185: #{temporal_conv_static_e_forward.1} parent=151 // pred_check
          %p1203 = pneg %p446
        $region186: #{temporal_conv_static_e_forward.1} parent=151 // pred_check_branch
          %1205 = sbr.rel (%p1203) target = $region188
        $region187: #{temporal_conv_static_e_forward.1} parent=151 // pred_region
          %1207 = dma.done [#allocation14], 1024
        $region188: #{temporal_conv_static_e_forward.1} parent=151 // pred_fallthru
          _
        // Predicated region
        $region189: #{temporal_conv_static_e_forward.1} parent=151 // pred_check
          %p1208 = pneg %p488
        $region190: #{temporal_conv_static_e_forward.1} parent=151 // pred_check_branch
          %1210 = sbr.rel (%p1208) target = $region192
        $region191: #{temporal_conv_static_e_forward.1} parent=151 // pred_region
          %1212 = dma.done [#allocation17], 1024
        $region192: #{temporal_conv_static_e_forward.1} parent=151 // pred_fallthru
          _
        // Predicated region
        $region193: #{temporal_conv_static_e_forward.1} parent=151 // pred_check
          %p1213 = pneg %p509
        $region194: #{temporal_conv_static_e_forward.1} parent=151 // pred_check_branch
          %1215 = sbr.rel (%p1213) target = $region196
        $region195: #{temporal_conv_static_e_forward.1} parent=151 // pred_region
          %1217 = dma.done [#allocation17], 1024
        $region196: #{temporal_conv_static_e_forward.1} parent=151 // pred_fallthru
          _
        // Predicated region
        $region197: #{temporal_conv_static_e_forward.1} parent=151 // pred_check
          %p1218 = pneg %p551
        $region198: #{temporal_conv_static_e_forward.1} parent=151 // pred_check_branch
          %1220 = sbr.rel (%p1218) target = $region200
        $region199: #{temporal_conv_static_e_forward.1} parent=151 // pred_region
          %1222 = dma.done [#allocation20], 1024
        $region200: #{temporal_conv_static_e_forward.1} parent=151 // pred_fallthru
          _
        // Predicated region
        $region201: #{temporal_conv_static_e_forward.1} parent=151 // pred_check
          %p1223 = pneg %p572
        $region202: #{temporal_conv_static_e_forward.1} parent=151 // pred_check_branch
          %1225 = sbr.rel (%p1223) target = $region204
        $region203: #{temporal_conv_static_e_forward.1} parent=151 // pred_region
          %1227 = dma.done [#allocation20], 1024
        $region204: #{temporal_conv_static_e_forward.1} parent=151 // pred_fallthru
          _
        // Predicated region
        $region205: #{temporal_conv_static_e_forward.1} parent=151 // pred_check
          %p1228 = pneg %p614
        $region206: #{temporal_conv_static_e_forward.1} parent=151 // pred_check_branch
          %1230 = sbr.rel (%p1228) target = $region208
        $region207: #{temporal_conv_static_e_forward.1} parent=151 // pred_region
          %1232 = dma.done [#allocation23], 1024
        $region208: #{temporal_conv_static_e_forward.1} parent=151 // pred_fallthru
          _
        // Predicated region
        $region209: #{temporal_conv_static_e_forward.1} parent=151 // pred_check
          %p1233 = pneg %p635
        $region210: #{temporal_conv_static_e_forward.1} parent=151 // pred_check_branch
          %1235 = sbr.rel (%p1233) target = $region212
        $region211: #{temporal_conv_static_e_forward.1} parent=151 // pred_region
          %1237 = dma.done [#allocation23], 1024
        $region212: #{temporal_conv_static_e_forward.1} parent=151 // pred_fallthru
          _
        // Predicated region
        $region213: #{temporal_conv_static_e_forward.1} parent=151 // pred_check
          %p1238 = pneg %p677
        $region214: #{temporal_conv_static_e_forward.1} parent=151 // pred_check_branch
          %1240 = sbr.rel (%p1238) target = $region216
        $region215: #{temporal_conv_static_e_forward.1} parent=151 // pred_region
          %1242 = dma.done [#allocation26], 1024
        $region216: #{temporal_conv_static_e_forward.1} parent=151 // pred_fallthru
          _
        // Predicated region
        $region217: #{temporal_conv_static_e_forward.1} parent=151 // pred_check
          %p1243 = pneg %p698
        $region218: #{temporal_conv_static_e_forward.1} parent=151 // pred_check_branch
          %1245 = sbr.rel (%p1243) target = $region220
        $region219: #{temporal_conv_static_e_forward.1} parent=151 // pred_region
          %1247 = dma.done [#allocation26], 16
        $region220: #{temporal_conv_static_e_forward.1} parent=151 // pred_fallthru
          _
        // Predicated region
        $region221: #{temporal_conv_static_e_forward.1} parent=151 // pred_check
          %p1248 = pneg %p719
        $region222: #{temporal_conv_static_e_forward.1} parent=151 // pred_check_branch
          %1250 = sbr.rel (%p1248) target = $region224
        $region223: #{temporal_conv_static_e_forward.1} parent=151 // pred_region
          %1252 = dma.done [#allocation29], 1024
        $region224: #{temporal_conv_static_e_forward.1} parent=151 // pred_fallthru
          _
        // Predicated region
        $region225: #{temporal_conv_static_e_forward.1} parent=151 // pred_check
          %p1253 = pneg %p740
        $region226: #{temporal_conv_static_e_forward.1} parent=151 // pred_check_branch
          %1255 = sbr.rel (%p1253) target = $region228
        $region227: #{temporal_conv_static_e_forward.1} parent=151 // pred_region
          %1257 = dma.done [#allocation29], 16
        $region228: #{temporal_conv_static_e_forward.1} parent=151 // pred_fallthru
          _
        // Predicated region
        $region229: #{temporal_conv_static_e_forward.1} parent=151 // pred_check
          %p1258 = pneg %p761
        $region230: #{temporal_conv_static_e_forward.1} parent=151 // pred_check_branch
          %1260 = sbr.rel (%p1258) target = $region232
        $region231: #{temporal_conv_static_e_forward.1} parent=151 // pred_region
          %1262 = dma.done [#allocation32], 1024
        $region232: #{temporal_conv_static_e_forward.1} parent=151 // pred_fallthru
          _
        // Predicated region
        $region233: #{temporal_conv_static_e_forward.1} parent=151 // pred_check
          %p1263 = pneg %p782
        $region234: #{temporal_conv_static_e_forward.1} parent=151 // pred_check_branch
          %1265 = sbr.rel (%p1263) target = $region236
        $region235: #{temporal_conv_static_e_forward.1} parent=151 // pred_region
          %1267 = dma.done [#allocation32], 16
        $region236: #{temporal_conv_static_e_forward.1} parent=151 // pred_fallthru
          _
        %p1268 = scmp.lt.s32.totalorder %s89, 1
        %s1269 = scalar_select %p1268, %s89, 1
        %s1270 = smul.addr %s1269, 2
        %s1271 = smul.addr %s1270, 4
        %s1272 = scalar_lea.vmem %s1, %s1271
        %p1273 = pneg %p110
        %p1274 = pneg %p107
        %p1275 = pneg %p131
        %p1276 = pneg %p128
        %p1277 = pneg %p152
        %p1278 = pneg %p149
        %p1279 = pneg %p173
        %p1280 = pneg %p170
        %p1281 = pneg %p194
        %p1282 = pneg %p191
        %p1283 = pneg %p215
        %p1284 = pneg %p212
        %p1285 = pneg %p236
        %p1286 = pneg %p233
        %p1287 = pneg %p257
        %p1288 = pneg %p254
        %p1289 = pneg %p278
        %p1290 = pneg %p275
        %p1291 = pneg %p299
        %p1292 = pneg %p296
        %p1293 = pneg %p320
        %p1294 = pneg %p317
        %p1295 = pneg %p341
        %p1296 = pneg %p338
        %p1297 = pneg %p362
        %p1298 = pneg %p359
        %p1299 = pneg %p383
        %p1300 = pneg %p380
        %p1301 = pneg %p404
        %p1302 = pneg %p401
        %p1303 = pneg %p425
        %p1304 = pneg %p422
        %p1305 = pneg %p446
        %p1306 = pneg %p443
        %p1307 = pneg %p467
        %p1308 = pneg %p464
        %p1309 = pneg %p488
        %p1310 = pneg %p485
        %p1311 = pneg %p509
        %p1312 = pneg %p506
        %p1313 = pneg %p530
        %p1314 = pneg %p527
        %p1315 = pneg %p551
        %p1316 = pneg %p548
        %p1317 = pneg %p572
        %p1318 = pneg %p569
        %p1319 = pneg %p593
        %p1320 = pneg %p590
        %p1321 = pneg %p614
        %p1322 = pneg %p611
        %p1323 = pneg %p635
        %p1324 = pneg %p632
        %p1325 = pneg %p656
        %p1326 = pneg %p653
        %p1327 = pneg %p677
        %p1328 = pneg %p674
        %p1329 = pneg %p698
        %p1330 = pneg %p695
        %p1331 = pneg %p719
        %p1332 = pneg %p716
        %p1333 = pneg %p740
        %p1334 = pneg %p737
        %p1335 = pneg %p761
        %p1336 = pneg %p758
        %p1337 = pneg %p782
        %p1338 = pneg %p779
        %p1339 = pneg %p808
        %p1340 = pneg %p805
        %p1341 = scmp.lt.s32.totalorder %s89, 1
        %s1342 = scalar_select %p1341, %s89, 1
        %s1343 = smul.addr %s1342, 2
        %s1344 = smul.addr %s1343, 8
        %s1345 = scalar_lea.vmem %s67, %s1344
        %p1346 = scmp.lt.s32.totalorder %s89, 1
        %s1347 = scalar_select %p1346, %s89, 1
        %s1348 = smul.addr %s1347, 2
        %s1349 = smul.addr %s1348, 4
        %s1350 = scalar_lea.vmem %s1, %s1349
        %p1351 = scmp.lt.s32.totalorder %s89, 1
        %s1352 = scalar_select %p1351, %s89, 1
        %s1353 = smul.addr %s1352, 2
        %s1354 = smul.addr %s1353, 8
        %s1355 = scalar_lea.vmem %s67, %s1354
        %v1356 = vld [vmem:[%s1350] sm:$0xf]
        %v1357 = vld [vmem:[%s1350 + $0x4] sm:$0xf]
        %v1358 = vld [vmem:[%s3] sm:$0xf]
        %v1359 = vld [vmem:[%s3 + $0x4] sm:$0xf]
        %v1360 = vld [vmem:[%s3 + $0x8] sm:$0xf]
        %v1361 = vld [vmem:[%s3 + $0xc] sm:$0xf]
        %v1362 = vld [vmem:[%s3 + $0x10] sm:$0xf]
        %v1363 = vld [vmem:[%s3 + $0x14] sm:$0xf]
        %v1364 = vld [vmem:[%s3 + $0x18] sm:$0xf]
        %v1365 = vld [vmem:[%s3 + $0x1c] sm:$0xf]
        %v1366 = vld [vmem:[%s3 + $0x20] sm:$0xf]
        %v1367 = vld [vmem:[%s3 + $0x24] sm:$0xf]
        %v1368 = vld [vmem:[%s3 + $0x28] sm:$0xf]
        %v1369 = vld [vmem:[%s3 + $0x2c] sm:$0xf]
        %v1370 = vld [vmem:[%s3 + $0x30] sm:$0xf]
        %v1371 = vld [vmem:[%s3 + $0x34] sm:$0xf]
        %v1372 = vld [vmem:[%s3 + $0x38] sm:$0xf]
        %v1373 = vld [vmem:[%s3 + $0x3c] sm:$0xf]
        %v1376 = vunpack.c.l.b16 %v1356
        %v1377 = vunpack.c.l.b16 %v1357
        %v1378 = vpack.c.b16 %v1377, %v1376
        %v1396 = vunpack.c.l.b16 %v1358
        %v1397 = vunpack.c.l.b16 %v1359
        %v1398 = vunpack.c.l.b16 %v1360
        %v1399 = vunpack.c.l.b16 %v1361
        %v1400 = vunpack.c.l.b16 %v1362
        %v1401 = vunpack.c.l.b16 %v1363
        %v1402 = vunpack.c.l.b16 %v1364
        %v1403 = vunpack.c.l.b16 %v1365
        %v1404 = vunpack.c.l.b16 %v1366
        %v1405 = vunpack.c.l.b16 %v1367
        %v1406 = vunpack.c.l.b16 %v1368
        %v1407 = vunpack.c.l.b16 %v1369
        %v1408 = vunpack.c.l.b16 %v1370
        %v1409 = vunpack.c.l.b16 %v1371
        %v1410 = vunpack.c.l.b16 %v1372
        %v1411 = vunpack.c.l.b16 %v1373
        %v1412 = vpack.c.b16 %v1397, %v1396
        %v1413 = vpack.c.b16 %v1399, %v1398
        %v1414 = vpack.c.b16 %v1401, %v1400
        %v1415 = vpack.c.b16 %v1403, %v1402
        %v1416 = vpack.c.b16 %v1405, %v1404
        %v1417 = vpack.c.b16 %v1407, %v1406
        %v1418 = vpack.c.b16 %v1409, %v1408
        %v1419 = vpack.c.b16 %v1411, %v1410
        %1428 = vmatpush.bf16.msra.mxu0 %v1419
        %1429 = vmatpush.bf16.msra.mxu0 %v1418
        %1430 = vmatpush.bf16.msra.mxu0 %v1417
        %1431 = vmatpush.bf16.msra.mxu0 %v1416
        %1432 = vmatpush.bf16.msra.mxu0 %v1415
        %1433 = vmatpush.bf16.msra.mxu0 %v1414
        %1434 = vmatpush.bf16.msra.mxu0 %v1413
        %1435 = vmatpush.bf16.msra.mxu0 %v1412
        %1436 = vmatmul.bf16.gmra.mxu0 %v1378
        %v1437 = vpop.f32.mrf.mxu0
        %v1438 = vadd.f32 0.0, %v1437
        %v1439 = vpop.f32.mrf.mxu0
        %v1440 = vadd.f32 0.0, %v1439
        %1441 = vdwg.mxu0
        %v1442 = vld [vmem:[%s5] sm:$0xf]
        %v1443 = vld [vmem:[%s5 + $0x4] sm:$0xf]
        %v1444 = vld [vmem:[%s5 + $0x8] sm:$0xf]
        %v1445 = vld [vmem:[%s5 + $0xc] sm:$0xf]
        %v1446 = vld [vmem:[%s5 + $0x10] sm:$0xf]
        %v1447 = vld [vmem:[%s5 + $0x14] sm:$0xf]
        %v1448 = vld [vmem:[%s5 + $0x18] sm:$0xf]
        %v1449 = vld [vmem:[%s5 + $0x1c] sm:$0xf]
        %v1450 = vld [vmem:[%s5 + $0x20] sm:$0xf]
        %v1451 = vld [vmem:[%s5 + $0x24] sm:$0xf]
        %v1452 = vld [vmem:[%s5 + $0x28] sm:$0xf]
        %v1453 = vld [vmem:[%s5 + $0x2c] sm:$0xf]
        %v1454 = vld [vmem:[%s5 + $0x30] sm:$0xf]
        %v1455 = vld [vmem:[%s5 + $0x34] sm:$0xf]
        %v1456 = vld [vmem:[%s5 + $0x38] sm:$0xf]
        %v1457 = vld [vmem:[%s5 + $0x3c] sm:$0xf]
        %v1474 = vunpack.c.l.b16 %v1442
        %v1475 = vunpack.c.l.b16 %v1443
        %v1476 = vunpack.c.l.b16 %v1444
        %v1477 = vunpack.c.l.b16 %v1445
        %v1478 = vunpack.c.l.b16 %v1446
        %v1479 = vunpack.c.l.b16 %v1447
        %v1480 = vunpack.c.l.b16 %v1448
        %v1481 = vunpack.c.l.b16 %v1449
        %v1482 = vunpack.c.l.b16 %v1450
        %v1483 = vunpack.c.l.b16 %v1451
        %v1484 = vunpack.c.l.b16 %v1452
        %v1485 = vunpack.c.l.b16 %v1453
        %v1486 = vunpack.c.l.b16 %v1454
        %v1487 = vunpack.c.l.b16 %v1455
        %v1488 = vunpack.c.l.b16 %v1456
        %v1489 = vunpack.c.l.b16 %v1457
        %v1490 = vpack.c.b16 %v1475, %v1474
        %v1491 = vpack.c.b16 %v1477, %v1476
        %v1492 = vpack.c.b16 %v1479, %v1478
        %v1493 = vpack.c.b16 %v1481, %v1480
        %v1494 = vpack.c.b16 %v1483, %v1482
        %v1495 = vpack.c.b16 %v1485, %v1484
        %v1496 = vpack.c.b16 %v1487, %v1486
        %v1497 = vpack.c.b16 %v1489, %v1488
        %1506 = vmatpush.bf16.msra.mxu0 %v1497
        %1507 = vmatpush.bf16.msra.mxu0 %v1496
        %1508 = vmatpush.bf16.msra.mxu0 %v1495
        %1509 = vmatpush.bf16.msra.mxu0 %v1494
        %1510 = vmatpush.bf16.msra.mxu0 %v1493
        %1511 = vmatpush.bf16.msra.mxu0 %v1492
        %1512 = vmatpush.bf16.msra.mxu0 %v1491
        %1513 = vmatpush.bf16.msra.mxu0 %v1490
        %1514 = vmatmul.bf16.gmra.mxu0 %v1378
        %v1515 = vpop.f32.mrf.mxu0
        %v1516 = vadd.f32 0.0, %v1515
        %v1517 = vpop.f32.mrf.mxu0
        %v1518 = vadd.f32 0.0, %v1517
        %1519 = vdwg.mxu0
        %v1520 = vrot.slane %v1438, 7
        %v1521 = vrot.slane %v1440, 7
        %v1522 = vlaneseq
        %v1523 = vshrl.u32 %v1522, 7
        %vm1524 = vcmp.lt.s32.totalorder %v1523, 1
        %v1525 = vsel %vm1524, %v1520, %v1521
        %v1526 = vsel %vm1524, %v1521, %v1520
        %v1527 = vadd.s32 %v1523, 8
        %vm1528 = vcmp.ge.s32.totalorder %v1523, 1
        %vm1529 = vcmp.ge.s32.totalorder %v1527, 1
        %v1530 = vsel %vm1528, %v1526, 0.0
        %v1531 = vsel %vm1529, %v1525, 0.0
        %v1532 = vadd.f32 %v1530, %v1516
        %v1533 = vadd.f32 %v1531, %v1518
        %v1534 = vld [vmem:[%s7] sm:$0x1]
        %v1536 = vperm.slane %v1534, 0
        %v1538 = vadd.f32 %v1532, %v1536
        %v1539 = vadd.f32 %v1533, %v1536
        %v1540 = vmax.f32 %v1538, 0.0
        %v1541 = vmax.f32 %v1539, 0.0
        %v1542 = vpack.c.bf16 %v1541, %v1540
        %v1543 = vld [vmem:[#allocation2] sm:$0xf]
        %v1544 = vld [vmem:[#allocation2 + $0x4] sm:$0xf]
        %v1545 = vld [vmem:[#allocation2 + $0x8] sm:$0xf]
        %v1546 = vld [vmem:[#allocation2 + $0xc] sm:$0xf]
        %v1547 = vld [vmem:[#allocation2 + $0x10] sm:$0xf]
        %v1548 = vld [vmem:[#allocation2 + $0x14] sm:$0xf]
        %v1549 = vld [vmem:[#allocation2 + $0x18] sm:$0xf]
        %v1550 = vld [vmem:[#allocation2 + $0x1c] sm:$0xf]
        %v1551 = vld [vmem:[#allocation2 + $0x20] sm:$0xf]
        %v1552 = vld [vmem:[#allocation2 + $0x24] sm:$0xf]
        %v1553 = vld [vmem:[#allocation2 + $0x28] sm:$0xf]
        %v1554 = vld [vmem:[#allocation2 + $0x2c] sm:$0xf]
        %v1555 = vld [vmem:[#allocation2 + $0x30] sm:$0xf]
        %v1556 = vld [vmem:[#allocation2 + $0x34] sm:$0xf]
        %v1557 = vld [vmem:[#allocation2 + $0x38] sm:$0xf]
        %v1558 = vld [vmem:[#allocation2 + $0x3c] sm:$0xf]
        %v1575 = vunpack.c.l.b16 %v1543
        %v1576 = vunpack.c.l.b16 %v1544
        %v1577 = vunpack.c.l.b16 %v1545
        %v1578 = vunpack.c.l.b16 %v1546
        %v1579 = vunpack.c.l.b16 %v1547
        %v1580 = vunpack.c.l.b16 %v1548
        %v1581 = vunpack.c.l.b16 %v1549
        %v1582 = vunpack.c.l.b16 %v1550
        %v1583 = vunpack.c.l.b16 %v1551
        %v1584 = vunpack.c.l.b16 %v1552
        %v1585 = vunpack.c.l.b16 %v1553
        %v1586 = vunpack.c.l.b16 %v1554
        %v1587 = vunpack.c.l.b16 %v1555
        %v1588 = vunpack.c.l.b16 %v1556
        %v1589 = vunpack.c.l.b16 %v1557
        %v1590 = vunpack.c.l.b16 %v1558
        %v1591 = vpack.c.b16 %v1576, %v1575
        %v1592 = vpack.c.b16 %v1578, %v1577
        %v1593 = vpack.c.b16 %v1580, %v1579
        %v1594 = vpack.c.b16 %v1582, %v1581
        %v1595 = vpack.c.b16 %v1584, %v1583
        %v1596 = vpack.c.b16 %v1586, %v1585
        %v1597 = vpack.c.b16 %v1588, %v1587
        %v1598 = vpack.c.b16 %v1590, %v1589
        %1607 = vmatpush.bf16.msra.mxu0 %v1598
        %1608 = vmatpush.bf16.msra.mxu0 %v1597
        %1609 = vmatpush.bf16.msra.mxu0 %v1596
        %1610 = vmatpush.bf16.msra.mxu0 %v1595
        %1611 = vmatpush.bf16.msra.mxu0 %v1594
        %1612 = vmatpush.bf16.msra.mxu0 %v1593
        %1613 = vmatpush.bf16.msra.mxu0 %v1592
        %1614 = vmatpush.bf16.msra.mxu0 %v1591
        %1615 = vmatmul.bf16.gmra.mxu0 %v1542
        %v1616 = vpop.f32.mrf.mxu0
        %v1617 = vadd.f32 0.0, %v1616
        %v1618 = vpop.f32.mrf.mxu0
        %v1619 = vadd.f32 0.0, %v1618
        %1620 = vdwg.mxu0
        %v1621 = vld [vmem:[#allocation4] sm:$0xf]
        %v1622 = vld [vmem:[#allocation4 + $0x4] sm:$0xf]
        %v1623 = vld [vmem:[#allocation4 + $0x8] sm:$0xf]
        %v1624 = vld [vmem:[#allocation4 + $0xc] sm:$0xf]
        %v1625 = vld [vmem:[#allocation4 + $0x10] sm:$0xf]
        %v1626 = vld [vmem:[#allocation4 + $0x14] sm:$0xf]
        %v1627 = vld [vmem:[#allocation4 + $0x18] sm:$0xf]
        %v1628 = vld [vmem:[#allocation4 + $0x1c] sm:$0xf]
        %v1629 = vld [vmem:[#allocation4 + $0x20] sm:$0xf]
        %v1630 = vld [vmem:[#allocation4 + $0x24] sm:$0xf]
        %v1631 = vld [vmem:[#allocation4 + $0x28] sm:$0xf]
        %v1632 = vld [vmem:[#allocation4 + $0x2c] sm:$0xf]
        %v1633 = vld [vmem:[#allocation4 + $0x30] sm:$0xf]
        %v1634 = vld [vmem:[#allocation4 + $0x34] sm:$0xf]
        %v1635 = vld [vmem:[#allocation4 + $0x38] sm:$0xf]
        %v1636 = vld [vmem:[#allocation4 + $0x3c] sm:$0xf]
        %v1653 = vunpack.c.l.b16 %v1621
        %v1654 = vunpack.c.l.b16 %v1622
        %v1655 = vunpack.c.l.b16 %v1623
        %v1656 = vunpack.c.l.b16 %v1624
        %v1657 = vunpack.c.l.b16 %v1625
        %v1658 = vunpack.c.l.b16 %v1626
        %v1659 = vunpack.c.l.b16 %v1627
        %v1660 = vunpack.c.l.b16 %v1628
        %v1661 = vunpack.c.l.b16 %v1629
        %v1662 = vunpack.c.l.b16 %v1630
        %v1663 = vunpack.c.l.b16 %v1631
        %v1664 = vunpack.c.l.b16 %v1632
        %v1665 = vunpack.c.l.b16 %v1633
        %v1666 = vunpack.c.l.b16 %v1634
        %v1667 = vunpack.c.l.b16 %v1635
        %v1668 = vunpack.c.l.b16 %v1636
        %v1669 = vpack.c.b16 %v1654, %v1653
        %v1670 = vpack.c.b16 %v1656, %v1655
        %v1671 = vpack.c.b16 %v1658, %v1657
        %v1672 = vpack.c.b16 %v1660, %v1659
        %v1673 = vpack.c.b16 %v1662, %v1661
        %v1674 = vpack.c.b16 %v1664, %v1663
        %v1675 = vpack.c.b16 %v1666, %v1665
        %v1676 = vpack.c.b16 %v1668, %v1667
        %1685 = vmatpush.bf16.msra.mxu0 %v1676
        %1686 = vmatpush.bf16.msra.mxu0 %v1675
        %1687 = vmatpush.bf16.msra.mxu0 %v1674
        %1688 = vmatpush.bf16.msra.mxu0 %v1673
        %1689 = vmatpush.bf16.msra.mxu0 %v1672
        %1690 = vmatpush.bf16.msra.mxu0 %v1671
        %1691 = vmatpush.bf16.msra.mxu0 %v1670
        %1692 = vmatpush.bf16.msra.mxu0 %v1669
        %1693 = vmatmul.bf16.gmra.mxu0 %v1542
        %v1694 = vpop.f32.mrf.mxu0
        %v1695 = vadd.f32 0.0, %v1694
        %v1696 = vpop.f32.mrf.mxu0
        %v1697 = vadd.f32 0.0, %v1696
        %1698 = vdwg.mxu0
        %v1699 = vrot.slane %v1617, 7
        %v1700 = vrot.slane %v1619, 7
        %v1701 = vsel %vm1524, %v1699, %v1700
        %v1702 = vsel %vm1524, %v1700, %v1699
        %v1703 = vsel %vm1528, %v1702, 0.0
        %v1704 = vsel %vm1529, %v1701, 0.0
        %v1705 = vadd.f32 %v1703, %v1695
        %v1706 = vadd.f32 %v1704, %v1697
        %v1707 = vld [vmem:[%s13] sm:$0x1]
        %v1709 = vperm.slane %v1707, 0
        %v1711 = vadd.f32 %v1705, %v1709
        %v1712 = vadd.f32 %v1706, %v1709
        %v1713 = vmax.f32 %v1711, 0.0
        %v1714 = vmax.f32 %v1712, 0.0
        %v1715 = vld [vmem:[#allocation6] sm:$0xf]
        %v1716 = vld [vmem:[#allocation6 + $0x4] sm:$0xf]
        %v1717 = vld [vmem:[#allocation6 + $0x8] sm:$0xf]
        %v1718 = vld [vmem:[#allocation6 + $0xc] sm:$0xf]
        %v1719 = vld [vmem:[#allocation6 + $0x10] sm:$0xf]
        %v1720 = vld [vmem:[#allocation6 + $0x14] sm:$0xf]
        %v1721 = vld [vmem:[#allocation6 + $0x18] sm:$0xf]
        %v1722 = vld [vmem:[#allocation6 + $0x1c] sm:$0xf]
        %v1723 = vld [vmem:[#allocation6 + $0x20] sm:$0xf]
        %v1724 = vld [vmem:[#allocation6 + $0x24] sm:$0xf]
        %v1725 = vld [vmem:[#allocation6 + $0x28] sm:$0xf]
        %v1726 = vld [vmem:[#allocation6 + $0x2c] sm:$0xf]
        %v1727 = vld [vmem:[#allocation6 + $0x30] sm:$0xf]
        %v1728 = vld [vmem:[#allocation6 + $0x34] sm:$0xf]
        %v1729 = vld [vmem:[#allocation6 + $0x38] sm:$0xf]
        %v1730 = vld [vmem:[#allocation6 + $0x3c] sm:$0xf]
        %v1731 = vld [vmem:[%s17] sm:$0x1]
        %v1733 = vperm.slane %v1731, 0
        %v1751 = vunpack.c.l.b16 %v1715
        %v1752 = vunpack.c.l.b16 %v1716
        %v1753 = vunpack.c.l.b16 %v1717
        %v1754 = vunpack.c.l.b16 %v1718
        %v1755 = vunpack.c.l.b16 %v1719
        %v1756 = vunpack.c.l.b16 %v1720
        %v1757 = vunpack.c.l.b16 %v1721
        %v1758 = vunpack.c.l.b16 %v1722
        %v1759 = vunpack.c.l.b16 %v1723
        %v1760 = vunpack.c.l.b16 %v1724
        %v1761 = vunpack.c.l.b16 %v1725
        %v1762 = vunpack.c.l.b16 %v1726
        %v1763 = vunpack.c.l.b16 %v1727
        %v1764 = vunpack.c.l.b16 %v1728
        %v1765 = vunpack.c.l.b16 %v1729
        %v1766 = vunpack.c.l.b16 %v1730
        %v1767 = vpack.c.b16 %v1752, %v1751
        %v1768 = vpack.c.b16 %v1754, %v1753
        %v1769 = vpack.c.b16 %v1756, %v1755
        %v1770 = vpack.c.b16 %v1758, %v1757
        %v1771 = vpack.c.b16 %v1760, %v1759
        %v1772 = vpack.c.b16 %v1762, %v1761
        %v1773 = vpack.c.b16 %v1764, %v1763
        %v1774 = vpack.c.b16 %v1766, %v1765
        %1783 = vmatpush.bf16.msra.mxu0 %v1774
        %1784 = vmatpush.bf16.msra.mxu0 %v1773
        %1785 = vmatpush.bf16.msra.mxu0 %v1772
        %1786 = vmatpush.bf16.msra.mxu0 %v1771
        %1787 = vmatpush.bf16.msra.mxu0 %v1770
        %1788 = vmatpush.bf16.msra.mxu0 %v1769
        %1789 = vmatpush.bf16.msra.mxu0 %v1768
        %1790 = vmatpush.bf16.msra.mxu0 %v1767
        %1791 = vmatmul.bf16.gmra.mxu0 %v1378
        %v1792 = vpop.f32.mrf.mxu0
        %v1793 = vadd.f32 %v1733, %v1792
        %v1794 = vpop.f32.mrf.mxu0
        %v1795 = vadd.f32 %v1733, %v1794
        %1796 = vdwg.mxu0
        %v1797 = vadd.f32 %v1713, %v1793
        %v1798 = vadd.f32 %v1714, %v1795
        %v1799 = vmax.f32 %v1797, 0.0
        %v1800 = vmax.f32 %v1798, 0.0
        %v1801 = vpack.c.bf16 %v1799, %v1799
        %v1802 = vpack.c.bf16 %v1800, %v1800
        %v1803 = vld [vmem:[#allocation7] sm:$0xf]
        %v1804 = vld [vmem:[#allocation7 + $0x4] sm:$0xf]
        %v1805 = vld [vmem:[#allocation7 + $0x8] sm:$0xf]
        %v1806 = vld [vmem:[#allocation7 + $0xc] sm:$0xf]
        %v1807 = vld [vmem:[#allocation7 + $0x10] sm:$0xf]
        %v1808 = vld [vmem:[#allocation7 + $0x14] sm:$0xf]
        %v1809 = vld [vmem:[#allocation7 + $0x18] sm:$0xf]
        %v1810 = vld [vmem:[#allocation7 + $0x1c] sm:$0xf]
        %v1811 = vld [vmem:[#allocation7 + $0x20] sm:$0xf]
        %v1812 = vld [vmem:[#allocation7 + $0x24] sm:$0xf]
        %v1813 = vld [vmem:[#allocation7 + $0x28] sm:$0xf]
        %v1814 = vld [vmem:[#allocation7 + $0x2c] sm:$0xf]
        %v1815 = vld [vmem:[#allocation7 + $0x30] sm:$0xf]
        %v1816 = vld [vmem:[#allocation7 + $0x34] sm:$0xf]
        %v1817 = vld [vmem:[#allocation7 + $0x38] sm:$0xf]
        %v1818 = vld [vmem:[#allocation7 + $0x3c] sm:$0xf]
        %v1821 = vunpack.c.l.b16 %v1801
        %v1822 = vunpack.c.l.b16 %v1802
        %v1823 = vpack.c.b16 %v1822, %v1821
        %v1841 = vunpack.c.l.b16 %v1803
        %v1842 = vunpack.c.l.b16 %v1804
        %v1843 = vunpack.c.l.b16 %v1805
        %v1844 = vunpack.c.l.b16 %v1806
        %v1845 = vunpack.c.l.b16 %v1807
        %v1846 = vunpack.c.l.b16 %v1808
        %v1847 = vunpack.c.l.b16 %v1809
        %v1848 = vunpack.c.l.b16 %v1810
        %v1849 = vunpack.c.l.b16 %v1811
        %v1850 = vunpack.c.l.b16 %v1812
        %v1851 = vunpack.c.l.b16 %v1813
        %v1852 = vunpack.c.l.b16 %v1814
        %v1853 = vunpack.c.l.b16 %v1815
        %v1854 = vunpack.c.l.b16 %v1816
        %v1855 = vunpack.c.l.b16 %v1817
        %v1856 = vunpack.c.l.b16 %v1818
        %v1857 = vpack.c.b16 %v1842, %v1841
        %v1858 = vpack.c.b16 %v1844, %v1843
        %v1859 = vpack.c.b16 %v1846, %v1845
        %v1860 = vpack.c.b16 %v1848, %v1847
        %v1861 = vpack.c.b16 %v1850, %v1849
        %v1862 = vpack.c.b16 %v1852, %v1851
        %v1863 = vpack.c.b16 %v1854, %v1853
        %v1864 = vpack.c.b16 %v1856, %v1855
        %1873 = vmatpush.bf16.msra.mxu0 %v1864
        %1874 = vmatpush.bf16.msra.mxu0 %v1863
        %1875 = vmatpush.bf16.msra.mxu0 %v1862
        %1876 = vmatpush.bf16.msra.mxu0 %v1861
        %1877 = vmatpush.bf16.msra.mxu0 %v1860
        %1878 = vmatpush.bf16.msra.mxu0 %v1859
        %1879 = vmatpush.bf16.msra.mxu0 %v1858
        %1880 = vmatpush.bf16.msra.mxu0 %v1857
        %1881 = vmatmul.bf16.gmra.mxu0 %v1823
        %v1882 = vpop.f32.mrf.mxu0
        %v1883 = vadd.f32 0.0, %v1882
        %v1884 = vpop.f32.mrf.mxu0
        %v1885 = vadd.f32 0.0, %v1884
        %1886 = vdwg.mxu0
        %v1887 = vld [vmem:[#allocation9] sm:$0xf]
        %v1888 = vld [vmem:[#allocation9 + $0x4] sm:$0xf]
        %v1889 = vld [vmem:[#allocation9 + $0x8] sm:$0xf]
        %v1890 = vld [vmem:[#allocation9 + $0xc] sm:$0xf]
        %v1891 = vld [vmem:[#allocation9 + $0x10] sm:$0xf]
        %v1892 = vld [vmem:[#allocation9 + $0x14] sm:$0xf]
        %v1893 = vld [vmem:[#allocation9 + $0x18] sm:$0xf]
        %v1894 = vld [vmem:[#allocation9 + $0x1c] sm:$0xf]
        %v1895 = vld [vmem:[#allocation9 + $0x20] sm:$0xf]
        %v1896 = vld [vmem:[#allocation9 + $0x24] sm:$0xf]
        %v1897 = vld [vmem:[#allocation9 + $0x28] sm:$0xf]
        %v1898 = vld [vmem:[#allocation9 + $0x2c] sm:$0xf]
        %v1899 = vld [vmem:[#allocation9 + $0x30] sm:$0xf]
        %v1900 = vld [vmem:[#allocation9 + $0x34] sm:$0xf]
        %v1901 = vld [vmem:[#allocation9 + $0x38] sm:$0xf]
        %v1902 = vld [vmem:[#allocation9 + $0x3c] sm:$0xf]
        %v1919 = vunpack.c.l.b16 %v1887
        %v1920 = vunpack.c.l.b16 %v1888
        %v1921 = vunpack.c.l.b16 %v1889
        %v1922 = vunpack.c.l.b16 %v1890
        %v1923 = vunpack.c.l.b16 %v1891
        %v1924 = vunpack.c.l.b16 %v1892
        %v1925 = vunpack.c.l.b16 %v1893
        %v1926 = vunpack.c.l.b16 %v1894
        %v1927 = vunpack.c.l.b16 %v1895
        %v1928 = vunpack.c.l.b16 %v1896
        %v1929 = vunpack.c.l.b16 %v1897
        %v1930 = vunpack.c.l.b16 %v1898
        %v1931 = vunpack.c.l.b16 %v1899
        %v1932 = vunpack.c.l.b16 %v1900
        %v1933 = vunpack.c.l.b16 %v1901
        %v1934 = vunpack.c.l.b16 %v1902
        %v1935 = vpack.c.b16 %v1920, %v1919
        %v1936 = vpack.c.b16 %v1922, %v1921
        %v1937 = vpack.c.b16 %v1924, %v1923
        %v1938 = vpack.c.b16 %v1926, %v1925
        %v1939 = vpack.c.b16 %v1928, %v1927
        %v1940 = vpack.c.b16 %v1930, %v1929
        %v1941 = vpack.c.b16 %v1932, %v1931
        %v1942 = vpack.c.b16 %v1934, %v1933
        %1951 = vmatpush.bf16.msra.mxu0 %v1942
        %1952 = vmatpush.bf16.msra.mxu0 %v1941
        %1953 = vmatpush.bf16.msra.mxu0 %v1940
        %1954 = vmatpush.bf16.msra.mxu0 %v1939
        %1955 = vmatpush.bf16.msra.mxu0 %v1938
        %1956 = vmatpush.bf16.msra.mxu0 %v1937
        %1957 = vmatpush.bf16.msra.mxu0 %v1936
        %1958 = vmatpush.bf16.msra.mxu0 %v1935
        %1959 = vmatmul.bf16.gmra.mxu0 %v1823
        %v1960 = vpop.f32.mrf.mxu0
        %v1961 = vadd.f32 0.0, %v1960
        %v1962 = vpop.f32.mrf.mxu0
        %v1963 = vadd.f32 0.0, %v1962
        %1964 = vdwg.mxu0
        %v1965 = vrot.slane %v1883, 6
        %v1966 = vrot.slane %v1885, 6
        %vm1967 = vcmp.lt.s32.totalorder %v1523, 2
        %v1968 = vsel %vm1967, %v1965, %v1966
        %v1969 = vsel %vm1967, %v1966, %v1965
        %vm1970 = vcmp.ge.s32.totalorder %v1523, 2
        %vm1971 = vcmp.ge.s32.totalorder %v1527, 2
        %v1972 = vsel %vm1970, %v1969, 0.0
        %v1973 = vsel %vm1971, %v1968, 0.0
        %v1974 = vadd.f32 %v1972, %v1961
        %v1975 = vadd.f32 %v1973, %v1963
        %v1976 = vld [vmem:[%s23] sm:$0x1]
        %v1978 = vperm.slane %v1976, 0
        %v1980 = vadd.f32 %v1974, %v1978
        %v1981 = vadd.f32 %v1975, %v1978
        %v1982 = vmax.f32 %v1980, 0.0
        %v1983 = vmax.f32 %v1981, 0.0
        %v1984 = vpack.c.bf16 %v1983, %v1982
        %v1985 = vld [vmem:[#allocation10] sm:$0xf]
        %v1986 = vld [vmem:[#allocation10 + $0x4] sm:$0xf]
        %v1987 = vld [vmem:[#allocation10 + $0x8] sm:$0xf]
        %v1988 = vld [vmem:[#allocation10 + $0xc] sm:$0xf]
        %v1989 = vld [vmem:[#allocation10 + $0x10] sm:$0xf]
        %v1990 = vld [vmem:[#allocation10 + $0x14] sm:$0xf]
        %v1991 = vld [vmem:[#allocation10 + $0x18] sm:$0xf]
        %v1992 = vld [vmem:[#allocation10 + $0x1c] sm:$0xf]
        %v1993 = vld [vmem:[#allocation10 + $0x20] sm:$0xf]
        %v1994 = vld [vmem:[#allocation10 + $0x24] sm:$0xf]
        %v1995 = vld [vmem:[#allocation10 + $0x28] sm:$0xf]
        %v1996 = vld [vmem:[#allocation10 + $0x2c] sm:$0xf]
        %v1997 = vld [vmem:[#allocation10 + $0x30] sm:$0xf]
        %v1998 = vld [vmem:[#allocation10 + $0x34] sm:$0xf]
        %v1999 = vld [vmem:[#allocation10 + $0x38] sm:$0xf]
        %v2000 = vld [vmem:[#allocation10 + $0x3c] sm:$0xf]
        %v2017 = vunpack.c.l.b16 %v1985
        %v2018 = vunpack.c.l.b16 %v1986
        %v2019 = vunpack.c.l.b16 %v1987
        %v2020 = vunpack.c.l.b16 %v1988
        %v2021 = vunpack.c.l.b16 %v1989
        %v2022 = vunpack.c.l.b16 %v1990
        %v2023 = vunpack.c.l.b16 %v1991
        %v2024 = vunpack.c.l.b16 %v1992
        %v2025 = vunpack.c.l.b16 %v1993
        %v2026 = vunpack.c.l.b16 %v1994
        %v2027 = vunpack.c.l.b16 %v1995
        %v2028 = vunpack.c.l.b16 %v1996
        %v2029 = vunpack.c.l.b16 %v1997
        %v2030 = vunpack.c.l.b16 %v1998
        %v2031 = vunpack.c.l.b16 %v1999
        %v2032 = vunpack.c.l.b16 %v2000
        %v2033 = vpack.c.b16 %v2018, %v2017
        %v2034 = vpack.c.b16 %v2020, %v2019
        %v2035 = vpack.c.b16 %v2022, %v2021
        %v2036 = vpack.c.b16 %v2024, %v2023
        %v2037 = vpack.c.b16 %v2026, %v2025
        %v2038 = vpack.c.b16 %v2028, %v2027
        %v2039 = vpack.c.b16 %v2030, %v2029
        %v2040 = vpack.c.b16 %v2032, %v2031
        %2049 = vmatpush.bf16.msra.mxu0 %v2040
        %2050 = vmatpush.bf16.msra.mxu0 %v2039
        %2051 = vmatpush.bf16.msra.mxu0 %v2038
        %2052 = vmatpush.bf16.msra.mxu0 %v2037
        %2053 = vmatpush.bf16.msra.mxu0 %v2036
        %2054 = vmatpush.bf16.msra.mxu0 %v2035
        %2055 = vmatpush.bf16.msra.mxu0 %v2034
        %2056 = vmatpush.bf16.msra.mxu0 %v2033
        %2057 = vmatmul.bf16.gmra.mxu0 %v1984
        %v2058 = vpop.f32.mrf.mxu0
        %v2059 = vadd.f32 0.0, %v2058
        %v2060 = vpop.f32.mrf.mxu0
        %v2061 = vadd.f32 0.0, %v2060
        %2062 = vdwg.mxu0
        %v2063 = vld [vmem:[#allocation12] sm:$0xf]
        %v2064 = vld [vmem:[#allocation12 + $0x4] sm:$0xf]
        %v2065 = vld [vmem:[#allocation12 + $0x8] sm:$0xf]
        %v2066 = vld [vmem:[#allocation12 + $0xc] sm:$0xf]
        %v2067 = vld [vmem:[#allocation12 + $0x10] sm:$0xf]
        %v2068 = vld [vmem:[#allocation12 + $0x14] sm:$0xf]
        %v2069 = vld [vmem:[#allocation12 + $0x18] sm:$0xf]
        %v2070 = vld [vmem:[#allocation12 + $0x1c] sm:$0xf]
        %v2071 = vld [vmem:[#allocation12 + $0x20] sm:$0xf]
        %v2072 = vld [vmem:[#allocation12 + $0x24] sm:$0xf]
        %v2073 = vld [vmem:[#allocation12 + $0x28] sm:$0xf]
        %v2074 = vld [vmem:[#allocation12 + $0x2c] sm:$0xf]
        %v2075 = vld [vmem:[#allocation12 + $0x30] sm:$0xf]
        %v2076 = vld [vmem:[#allocation12 + $0x34] sm:$0xf]
        %v2077 = vld [vmem:[#allocation12 + $0x38] sm:$0xf]
        %v2078 = vld [vmem:[#allocation12 + $0x3c] sm:$0xf]
        %v2095 = vunpack.c.l.b16 %v2063
        %v2096 = vunpack.c.l.b16 %v2064
        %v2097 = vunpack.c.l.b16 %v2065
        %v2098 = vunpack.c.l.b16 %v2066
        %v2099 = vunpack.c.l.b16 %v2067
        %v2100 = vunpack.c.l.b16 %v2068
        %v2101 = vunpack.c.l.b16 %v2069
        %v2102 = vunpack.c.l.b16 %v2070
        %v2103 = vunpack.c.l.b16 %v2071
        %v2104 = vunpack.c.l.b16 %v2072
        %v2105 = vunpack.c.l.b16 %v2073
        %v2106 = vunpack.c.l.b16 %v2074
        %v2107 = vunpack.c.l.b16 %v2075
        %v2108 = vunpack.c.l.b16 %v2076
        %v2109 = vunpack.c.l.b16 %v2077
        %v2110 = vunpack.c.l.b16 %v2078
        %v2111 = vpack.c.b16 %v2096, %v2095
        %v2112 = vpack.c.b16 %v2098, %v2097
        %v2113 = vpack.c.b16 %v2100, %v2099
        %v2114 = vpack.c.b16 %v2102, %v2101
        %v2115 = vpack.c.b16 %v2104, %v2103
        %v2116 = vpack.c.b16 %v2106, %v2105
        %v2117 = vpack.c.b16 %v2108, %v2107
        %v2118 = vpack.c.b16 %v2110, %v2109
        %2127 = vmatpush.bf16.msra.mxu0 %v2118
        %2128 = vmatpush.bf16.msra.mxu0 %v2117
        %2129 = vmatpush.bf16.msra.mxu0 %v2116
        %2130 = vmatpush.bf16.msra.mxu0 %v2115
        %2131 = vmatpush.bf16.msra.mxu0 %v2114
        %2132 = vmatpush.bf16.msra.mxu0 %v2113
        %2133 = vmatpush.bf16.msra.mxu0 %v2112
        %2134 = vmatpush.bf16.msra.mxu0 %v2111
        %2135 = vmatmul.bf16.gmra.mxu0 %v1984
        %v2136 = vpop.f32.mrf.mxu0
        %v2137 = vadd.f32 0.0, %v2136
        %v2138 = vpop.f32.mrf.mxu0
        %v2139 = vadd.f32 0.0, %v2138
        %2140 = vdwg.mxu0
        %v2141 = vrot.slane %v2059, 6
        %v2142 = vrot.slane %v2061, 6
        %v2143 = vsel %vm1967, %v2141, %v2142
        %v2144 = vsel %vm1967, %v2142, %v2141
        %v2145 = vsel %vm1970, %v2144, 0.0
        %v2146 = vsel %vm1971, %v2143, 0.0
        %v2147 = vadd.f32 %v2145, %v2137
        %v2148 = vadd.f32 %v2146, %v2139
        %v2149 = vld [vmem:[%s29] sm:$0x1]
        %v2151 = vperm.slane %v2149, 0
        %v2153 = vadd.f32 %v2147, %v2151
        %v2154 = vadd.f32 %v2148, %v2151
        %v2155 = vmax.f32 %v2153, 0.0
        %v2156 = vmax.f32 %v2154, 0.0
        %v2157 = vunpack.c.l.bf16 %v1801
        %v2158 = vunpack.c.l.bf16 %v1802
        %v2159 = vadd.f32 %v2155, %v2157
        %v2160 = vadd.f32 %v2156, %v2158
        %v2161 = vmax.f32 %v2159, 0.0
        %v2162 = vmax.f32 %v2160, 0.0
        %v2163 = vpack.c.bf16 %v2161, %v2161
        %v2164 = vpack.c.bf16 %v2162, %v2162
        %v2165 = vld [vmem:[#allocation13] sm:$0xf]
        %v2166 = vld [vmem:[#allocation13 + $0x4] sm:$0xf]
        %v2167 = vld [vmem:[#allocation13 + $0x8] sm:$0xf]
        %v2168 = vld [vmem:[#allocation13 + $0xc] sm:$0xf]
        %v2169 = vld [vmem:[#allocation13 + $0x10] sm:$0xf]
        %v2170 = vld [vmem:[#allocation13 + $0x14] sm:$0xf]
        %v2171 = vld [vmem:[#allocation13 + $0x18] sm:$0xf]
        %v2172 = vld [vmem:[#allocation13 + $0x1c] sm:$0xf]
        %v2173 = vld [vmem:[#allocation13 + $0x20] sm:$0xf]
        %v2174 = vld [vmem:[#allocation13 + $0x24] sm:$0xf]
        %v2175 = vld [vmem:[#allocation13 + $0x28] sm:$0xf]
        %v2176 = vld [vmem:[#allocation13 + $0x2c] sm:$0xf]
        %v2177 = vld [vmem:[#allocation13 + $0x30] sm:$0xf]
        %v2178 = vld [vmem:[#allocation13 + $0x34] sm:$0xf]
        %v2179 = vld [vmem:[#allocation13 + $0x38] sm:$0xf]
        %v2180 = vld [vmem:[#allocation13 + $0x3c] sm:$0xf]
        %v2183 = vunpack.c.l.b16 %v2163
        %v2184 = vunpack.c.l.b16 %v2164
        %v2185 = vpack.c.b16 %v2184, %v2183
        %v2203 = vunpack.c.l.b16 %v2165
        %v2204 = vunpack.c.l.b16 %v2166
        %v2205 = vunpack.c.l.b16 %v2167
        %v2206 = vunpack.c.l.b16 %v2168
        %v2207 = vunpack.c.l.b16 %v2169
        %v2208 = vunpack.c.l.b16 %v2170
        %v2209 = vunpack.c.l.b16 %v2171
        %v2210 = vunpack.c.l.b16 %v2172
        %v2211 = vunpack.c.l.b16 %v2173
        %v2212 = vunpack.c.l.b16 %v2174
        %v2213 = vunpack.c.l.b16 %v2175
        %v2214 = vunpack.c.l.b16 %v2176
        %v2215 = vunpack.c.l.b16 %v2177
        %v2216 = vunpack.c.l.b16 %v2178
        %v2217 = vunpack.c.l.b16 %v2179
        %v2218 = vunpack.c.l.b16 %v2180
        %v2219 = vpack.c.b16 %v2204, %v2203
        %v2220 = vpack.c.b16 %v2206, %v2205
        %v2221 = vpack.c.b16 %v2208, %v2207
        %v2222 = vpack.c.b16 %v2210, %v2209
        %v2223 = vpack.c.b16 %v2212, %v2211
        %v2224 = vpack.c.b16 %v2214, %v2213
        %v2225 = vpack.c.b16 %v2216, %v2215
        %v2226 = vpack.c.b16 %v2218, %v2217
        %2235 = vmatpush.bf16.msra.mxu0 %v2226
        %2236 = vmatpush.bf16.msra.mxu0 %v2225
        %2237 = vmatpush.bf16.msra.mxu0 %v2224
        %2238 = vmatpush.bf16.msra.mxu0 %v2223
        %2239 = vmatpush.bf16.msra.mxu0 %v2222
        %2240 = vmatpush.bf16.msra.mxu0 %v2221
        %2241 = vmatpush.bf16.msra.mxu0 %v2220
        %2242 = vmatpush.bf16.msra.mxu0 %v2219
        %2243 = vmatmul.bf16.gmra.mxu0 %v2185
        %v2244 = vpop.f32.mrf.mxu0
        %v2245 = vadd.f32 0.0, %v2244
        %v2246 = vpop.f32.mrf.mxu0
        %v2247 = vadd.f32 0.0, %v2246
        %2248 = vdwg.mxu0
        %v2249 = vld [vmem:[#allocation15] sm:$0xf]
        %v2250 = vld [vmem:[#allocation15 + $0x4] sm:$0xf]
        %v2251 = vld [vmem:[#allocation15 + $0x8] sm:$0xf]
        %v2252 = vld [vmem:[#allocation15 + $0xc] sm:$0xf]
        %v2253 = vld [vmem:[#allocation15 + $0x10] sm:$0xf]
        %v2254 = vld [vmem:[#allocation15 + $0x14] sm:$0xf]
        %v2255 = vld [vmem:[#allocation15 + $0x18] sm:$0xf]
        %v2256 = vld [vmem:[#allocation15 + $0x1c] sm:$0xf]
        %v2257 = vld [vmem:[#allocation15 + $0x20] sm:$0xf]
        %v2258 = vld [vmem:[#allocation15 + $0x24] sm:$0xf]
        %v2259 = vld [vmem:[#allocation15 + $0x28] sm:$0xf]
        %v2260 = vld [vmem:[#allocation15 + $0x2c] sm:$0xf]
        %v2261 = vld [vmem:[#allocation15 + $0x30] sm:$0xf]
        %v2262 = vld [vmem:[#allocation15 + $0x34] sm:$0xf]
        %v2263 = vld [vmem:[#allocation15 + $0x38] sm:$0xf]
        %v2264 = vld [vmem:[#allocation15 + $0x3c] sm:$0xf]
        %v2281 = vunpack.c.l.b16 %v2249
        %v2282 = vunpack.c.l.b16 %v2250
        %v2283 = vunpack.c.l.b16 %v2251
        %v2284 = vunpack.c.l.b16 %v2252
        %v2285 = vunpack.c.l.b16 %v2253
        %v2286 = vunpack.c.l.b16 %v2254
        %v2287 = vunpack.c.l.b16 %v2255
        %v2288 = vunpack.c.l.b16 %v2256
        %v2289 = vunpack.c.l.b16 %v2257
        %v2290 = vunpack.c.l.b16 %v2258
        %v2291 = vunpack.c.l.b16 %v2259
        %v2292 = vunpack.c.l.b16 %v2260
        %v2293 = vunpack.c.l.b16 %v2261
        %v2294 = vunpack.c.l.b16 %v2262
        %v2295 = vunpack.c.l.b16 %v2263
        %v2296 = vunpack.c.l.b16 %v2264
        %v2297 = vpack.c.b16 %v2282, %v2281
        %v2298 = vpack.c.b16 %v2284, %v2283
        %v2299 = vpack.c.b16 %v2286, %v2285
        %v2300 = vpack.c.b16 %v2288, %v2287
        %v2301 = vpack.c.b16 %v2290, %v2289
        %v2302 = vpack.c.b16 %v2292, %v2291
        %v2303 = vpack.c.b16 %v2294, %v2293
        %v2304 = vpack.c.b16 %v2296, %v2295
        %2313 = vmatpush.bf16.msra.mxu0 %v2304
        %2314 = vmatpush.bf16.msra.mxu0 %v2303
        %2315 = vmatpush.bf16.msra.mxu0 %v2302
        %2316 = vmatpush.bf16.msra.mxu0 %v2301
        %2317 = vmatpush.bf16.msra.mxu0 %v2300
        %2318 = vmatpush.bf16.msra.mxu0 %v2299
        %2319 = vmatpush.bf16.msra.mxu0 %v2298
        %2320 = vmatpush.bf16.msra.mxu0 %v2297
        %2321 = vmatmul.bf16.gmra.mxu0 %v2185
        %v2322 = vpop.f32.mrf.mxu0
        %v2323 = vadd.f32 0.0, %v2322
        %v2324 = vpop.f32.mrf.mxu0
        %v2325 = vadd.f32 0.0, %v2324
        %2326 = vdwg.mxu0
        %v2327 = vrot.slane %v2245, 4
        %v2328 = vrot.slane %v2247, 4
        %vm2329 = vcmp.lt.s32.totalorder %v1523, 4
        %v2330 = vsel %vm2329, %v2327, %v2328
        %v2331 = vsel %vm2329, %v2328, %v2327
        %vm2332 = vcmp.ge.s32.totalorder %v1523, 4
        %vm2333 = vcmp.ge.s32.totalorder %v1527, 4
        %v2334 = vsel %vm2332, %v2331, 0.0
        %v2335 = vsel %vm2333, %v2330, 0.0
        %v2336 = vadd.f32 %v2334, %v2323
        %v2337 = vadd.f32 %v2335, %v2325
        %v2338 = vld [vmem:[%s35] sm:$0x1]
        %v2340 = vperm.slane %v2338, 0
        %v2342 = vadd.f32 %v2336, %v2340
        %v2343 = vadd.f32 %v2337, %v2340
        %v2344 = vmax.f32 %v2342, 0.0
        %v2345 = vmax.f32 %v2343, 0.0
        %v2346 = vpack.c.bf16 %v2345, %v2344
        %v2347 = vld [vmem:[#allocation16] sm:$0xf]
        %v2348 = vld [vmem:[#allocation16 + $0x4] sm:$0xf]
        %v2349 = vld [vmem:[#allocation16 + $0x8] sm:$0xf]
        %v2350 = vld [vmem:[#allocation16 + $0xc] sm:$0xf]
        %v2351 = vld [vmem:[#allocation16 + $0x10] sm:$0xf]
        %v2352 = vld [vmem:[#allocation16 + $0x14] sm:$0xf]
        %v2353 = vld [vmem:[#allocation16 + $0x18] sm:$0xf]
        %v2354 = vld [vmem:[#allocation16 + $0x1c] sm:$0xf]
        %v2355 = vld [vmem:[#allocation16 + $0x20] sm:$0xf]
        %v2356 = vld [vmem:[#allocation16 + $0x24] sm:$0xf]
        %v2357 = vld [vmem:[#allocation16 + $0x28] sm:$0xf]
        %v2358 = vld [vmem:[#allocation16 + $0x2c] sm:$0xf]
        %v2359 = vld [vmem:[#allocation16 + $0x30] sm:$0xf]
        %v2360 = vld [vmem:[#allocation16 + $0x34] sm:$0xf]
        %v2361 = vld [vmem:[#allocation16 + $0x38] sm:$0xf]
        %v2362 = vld [vmem:[#allocation16 + $0x3c] sm:$0xf]
        %v2379 = vunpack.c.l.b16 %v2347
        %v2380 = vunpack.c.l.b16 %v2348
        %v2381 = vunpack.c.l.b16 %v2349
        %v2382 = vunpack.c.l.b16 %v2350
        %v2383 = vunpack.c.l.b16 %v2351
        %v2384 = vunpack.c.l.b16 %v2352
        %v2385 = vunpack.c.l.b16 %v2353
        %v2386 = vunpack.c.l.b16 %v2354
        %v2387 = vunpack.c.l.b16 %v2355
        %v2388 = vunpack.c.l.b16 %v2356
        %v2389 = vunpack.c.l.b16 %v2357
        %v2390 = vunpack.c.l.b16 %v2358
        %v2391 = vunpack.c.l.b16 %v2359
        %v2392 = vunpack.c.l.b16 %v2360
        %v2393 = vunpack.c.l.b16 %v2361
        %v2394 = vunpack.c.l.b16 %v2362
        %v2395 = vpack.c.b16 %v2380, %v2379
        %v2396 = vpack.c.b16 %v2382, %v2381
        %v2397 = vpack.c.b16 %v2384, %v2383
        %v2398 = vpack.c.b16 %v2386, %v2385
        %v2399 = vpack.c.b16 %v2388, %v2387
        %v2400 = vpack.c.b16 %v2390, %v2389
        %v2401 = vpack.c.b16 %v2392, %v2391
        %v2402 = vpack.c.b16 %v2394, %v2393
        %2411 = vmatpush.bf16.msra.mxu0 %v2402
        %2412 = vmatpush.bf16.msra.mxu0 %v2401
        %2413 = vmatpush.bf16.msra.mxu0 %v2400
        %2414 = vmatpush.bf16.msra.mxu0 %v2399
        %2415 = vmatpush.bf16.msra.mxu0 %v2398
        %2416 = vmatpush.bf16.msra.mxu0 %v2397
        %2417 = vmatpush.bf16.msra.mxu0 %v2396
        %2418 = vmatpush.bf16.msra.mxu0 %v2395
        %2419 = vmatmul.bf16.gmra.mxu0 %v2346
        %v2420 = vpop.f32.mrf.mxu0
        %v2421 = vadd.f32 0.0, %v2420
        %v2422 = vpop.f32.mrf.mxu0
        %v2423 = vadd.f32 0.0, %v2422
        %2424 = vdwg.mxu0
        %v2425 = vld [vmem:[#allocation18] sm:$0xf]
        %v2426 = vld [vmem:[#allocation18 + $0x4] sm:$0xf]
        %v2427 = vld [vmem:[#allocation18 + $0x8] sm:$0xf]
        %v2428 = vld [vmem:[#allocation18 + $0xc] sm:$0xf]
        %v2429 = vld [vmem:[#allocation18 + $0x10] sm:$0xf]
        %v2430 = vld [vmem:[#allocation18 + $0x14] sm:$0xf]
        %v2431 = vld [vmem:[#allocation18 + $0x18] sm:$0xf]
        %v2432 = vld [vmem:[#allocation18 + $0x1c] sm:$0xf]
        %v2433 = vld [vmem:[#allocation18 + $0x20] sm:$0xf]
        %v2434 = vld [vmem:[#allocation18 + $0x24] sm:$0xf]
        %v2435 = vld [vmem:[#allocation18 + $0x28] sm:$0xf]
        %v2436 = vld [vmem:[#allocation18 + $0x2c] sm:$0xf]
        %v2437 = vld [vmem:[#allocation18 + $0x30] sm:$0xf]
        %v2438 = vld [vmem:[#allocation18 + $0x34] sm:$0xf]
        %v2439 = vld [vmem:[#allocation18 + $0x38] sm:$0xf]
        %v2440 = vld [vmem:[#allocation18 + $0x3c] sm:$0xf]
        %v2457 = vunpack.c.l.b16 %v2425
        %v2458 = vunpack.c.l.b16 %v2426
        %v2459 = vunpack.c.l.b16 %v2427
        %v2460 = vunpack.c.l.b16 %v2428
        %v2461 = vunpack.c.l.b16 %v2429
        %v2462 = vunpack.c.l.b16 %v2430
        %v2463 = vunpack.c.l.b16 %v2431
        %v2464 = vunpack.c.l.b16 %v2432
        %v2465 = vunpack.c.l.b16 %v2433
        %v2466 = vunpack.c.l.b16 %v2434
        %v2467 = vunpack.c.l.b16 %v2435
        %v2468 = vunpack.c.l.b16 %v2436
        %v2469 = vunpack.c.l.b16 %v2437
        %v2470 = vunpack.c.l.b16 %v2438
        %v2471 = vunpack.c.l.b16 %v2439
        %v2472 = vunpack.c.l.b16 %v2440
        %v2473 = vpack.c.b16 %v2458, %v2457
        %v2474 = vpack.c.b16 %v2460, %v2459
        %v2475 = vpack.c.b16 %v2462, %v2461
        %v2476 = vpack.c.b16 %v2464, %v2463
        %v2477 = vpack.c.b16 %v2466, %v2465
        %v2478 = vpack.c.b16 %v2468, %v2467
        %v2479 = vpack.c.b16 %v2470, %v2469
        %v2480 = vpack.c.b16 %v2472, %v2471
        %2489 = vmatpush.bf16.msra.mxu0 %v2480
        %2490 = vmatpush.bf16.msra.mxu0 %v2479
        %2491 = vmatpush.bf16.msra.mxu0 %v2478
        %2492 = vmatpush.bf16.msra.mxu0 %v2477
        %2493 = vmatpush.bf16.msra.mxu0 %v2476
        %2494 = vmatpush.bf16.msra.mxu0 %v2475
        %2495 = vmatpush.bf16.msra.mxu0 %v2474
        %2496 = vmatpush.bf16.msra.mxu0 %v2473
        %2497 = vmatmul.bf16.gmra.mxu0 %v2346
        %v2498 = vpop.f32.mrf.mxu0
        %v2499 = vadd.f32 0.0, %v2498
        %v2500 = vpop.f32.mrf.mxu0
        %v2501 = vadd.f32 0.0, %v2500
        %2502 = vdwg.mxu0
        %v2503 = vrot.slane %v2421, 4
        %v2504 = vrot.slane %v2423, 4
        %v2505 = vsel %vm2329, %v2503, %v2504
        %v2506 = vsel %vm2329, %v2504, %v2503
        %v2507 = vsel %vm2332, %v2506, 0.0
        %v2508 = vsel %vm2333, %v2505, 0.0
        %v2509 = vadd.f32 %v2507, %v2499
        %v2510 = vadd.f32 %v2508, %v2501
        %v2511 = vld [vmem:[%s41] sm:$0x1]
        %v2513 = vperm.slane %v2511, 0
        %v2515 = vadd.f32 %v2509, %v2513
        %v2516 = vadd.f32 %v2510, %v2513
        %v2517 = vmax.f32 %v2515, 0.0
        %v2518 = vmax.f32 %v2516, 0.0
        %v2519 = vunpack.c.l.bf16 %v2163
        %v2520 = vunpack.c.l.bf16 %v2164
        %v2521 = vadd.f32 %v2517, %v2519
        %v2522 = vadd.f32 %v2518, %v2520
        %v2523 = vmax.f32 %v2521, 0.0
        %v2524 = vmax.f32 %v2522, 0.0
        %v2525 = vpack.c.bf16 %v2523, %v2523
        %v2526 = vpack.c.bf16 %v2524, %v2524
        %v2527 = vld [vmem:[#allocation19] sm:$0xf]
        %v2528 = vld [vmem:[#allocation19 + $0x4] sm:$0xf]
        %v2529 = vld [vmem:[#allocation19 + $0x8] sm:$0xf]
        %v2530 = vld [vmem:[#allocation19 + $0xc] sm:$0xf]
        %v2531 = vld [vmem:[#allocation19 + $0x10] sm:$0xf]
        %v2532 = vld [vmem:[#allocation19 + $0x14] sm:$0xf]
        %v2533 = vld [vmem:[#allocation19 + $0x18] sm:$0xf]
        %v2534 = vld [vmem:[#allocation19 + $0x1c] sm:$0xf]
        %v2535 = vld [vmem:[#allocation19 + $0x20] sm:$0xf]
        %v2536 = vld [vmem:[#allocation19 + $0x24] sm:$0xf]
        %v2537 = vld [vmem:[#allocation19 + $0x28] sm:$0xf]
        %v2538 = vld [vmem:[#allocation19 + $0x2c] sm:$0xf]
        %v2539 = vld [vmem:[#allocation19 + $0x30] sm:$0xf]
        %v2540 = vld [vmem:[#allocation19 + $0x34] sm:$0xf]
        %v2541 = vld [vmem:[#allocation19 + $0x38] sm:$0xf]
        %v2542 = vld [vmem:[#allocation19 + $0x3c] sm:$0xf]
        %v2545 = vunpack.c.l.b16 %v2525
        %v2546 = vunpack.c.l.b16 %v2526
        %v2547 = vpack.c.b16 %v2546, %v2545
        %v2565 = vunpack.c.l.b16 %v2527
        %v2566 = vunpack.c.l.b16 %v2528
        %v2567 = vunpack.c.l.b16 %v2529
        %v2568 = vunpack.c.l.b16 %v2530
        %v2569 = vunpack.c.l.b16 %v2531
        %v2570 = vunpack.c.l.b16 %v2532
        %v2571 = vunpack.c.l.b16 %v2533
        %v2572 = vunpack.c.l.b16 %v2534
        %v2573 = vunpack.c.l.b16 %v2535
        %v2574 = vunpack.c.l.b16 %v2536
        %v2575 = vunpack.c.l.b16 %v2537
        %v2576 = vunpack.c.l.b16 %v2538
        %v2577 = vunpack.c.l.b16 %v2539
        %v2578 = vunpack.c.l.b16 %v2540
        %v2579 = vunpack.c.l.b16 %v2541
        %v2580 = vunpack.c.l.b16 %v2542
        %v2581 = vpack.c.b16 %v2566, %v2565
        %v2582 = vpack.c.b16 %v2568, %v2567
        %v2583 = vpack.c.b16 %v2570, %v2569
        %v2584 = vpack.c.b16 %v2572, %v2571
        %v2585 = vpack.c.b16 %v2574, %v2573
        %v2586 = vpack.c.b16 %v2576, %v2575
        %v2587 = vpack.c.b16 %v2578, %v2577
        %v2588 = vpack.c.b16 %v2580, %v2579
        %2597 = vmatpush.bf16.msra.mxu0 %v2588
        %2598 = vmatpush.bf16.msra.mxu0 %v2587
        %2599 = vmatpush.bf16.msra.mxu0 %v2586
        %2600 = vmatpush.bf16.msra.mxu0 %v2585
        %2601 = vmatpush.bf16.msra.mxu0 %v2584
        %2602 = vmatpush.bf16.msra.mxu0 %v2583
        %2603 = vmatpush.bf16.msra.mxu0 %v2582
        %2604 = vmatpush.bf16.msra.mxu0 %v2581
        %2605 = vmatmul.bf16.gmra.mxu0 %v2547
        %v2606 = vpop.f32.mrf.mxu0
        %v2607 = vadd.f32 0.0, %v2606
        %v2608 = vpop.f32.mrf.mxu0
        %v2609 = vadd.f32 0.0, %v2608
        %2610 = vdwg.mxu0
        %v2611 = vld [vmem:[#allocation21] sm:$0xf]
        %v2612 = vld [vmem:[#allocation21 + $0x4] sm:$0xf]
        %v2613 = vld [vmem:[#allocation21 + $0x8] sm:$0xf]
        %v2614 = vld [vmem:[#allocation21 + $0xc] sm:$0xf]
        %v2615 = vld [vmem:[#allocation21 + $0x10] sm:$0xf]
        %v2616 = vld [vmem:[#allocation21 + $0x14] sm:$0xf]
        %v2617 = vld [vmem:[#allocation21 + $0x18] sm:$0xf]
        %v2618 = vld [vmem:[#allocation21 + $0x1c] sm:$0xf]
        %v2619 = vld [vmem:[#allocation21 + $0x20] sm:$0xf]
        %v2620 = vld [vmem:[#allocation21 + $0x24] sm:$0xf]
        %v2621 = vld [vmem:[#allocation21 + $0x28] sm:$0xf]
        %v2622 = vld [vmem:[#allocation21 + $0x2c] sm:$0xf]
        %v2623 = vld [vmem:[#allocation21 + $0x30] sm:$0xf]
        %v2624 = vld [vmem:[#allocation21 + $0x34] sm:$0xf]
        %v2625 = vld [vmem:[#allocation21 + $0x38] sm:$0xf]
        %v2626 = vld [vmem:[#allocation21 + $0x3c] sm:$0xf]
        %v2643 = vunpack.c.l.b16 %v2611
        %v2644 = vunpack.c.l.b16 %v2612
        %v2645 = vunpack.c.l.b16 %v2613
        %v2646 = vunpack.c.l.b16 %v2614
        %v2647 = vunpack.c.l.b16 %v2615
        %v2648 = vunpack.c.l.b16 %v2616
        %v2649 = vunpack.c.l.b16 %v2617
        %v2650 = vunpack.c.l.b16 %v2618
        %v2651 = vunpack.c.l.b16 %v2619
        %v2652 = vunpack.c.l.b16 %v2620
        %v2653 = vunpack.c.l.b16 %v2621
        %v2654 = vunpack.c.l.b16 %v2622
        %v2655 = vunpack.c.l.b16 %v2623
        %v2656 = vunpack.c.l.b16 %v2624
        %v2657 = vunpack.c.l.b16 %v2625
        %v2658 = vunpack.c.l.b16 %v2626
        %v2659 = vpack.c.b16 %v2644, %v2643
        %v2660 = vpack.c.b16 %v2646, %v2645
        %v2661 = vpack.c.b16 %v2648, %v2647
        %v2662 = vpack.c.b16 %v2650, %v2649
        %v2663 = vpack.c.b16 %v2652, %v2651
        %v2664 = vpack.c.b16 %v2654, %v2653
        %v2665 = vpack.c.b16 %v2656, %v2655
        %v2666 = vpack.c.b16 %v2658, %v2657
        %2675 = vmatpush.bf16.msra.mxu0 %v2666
        %2676 = vmatpush.bf16.msra.mxu0 %v2665
        %2677 = vmatpush.bf16.msra.mxu0 %v2664
        %2678 = vmatpush.bf16.msra.mxu0 %v2663
        %2679 = vmatpush.bf16.msra.mxu0 %v2662
        %2680 = vmatpush.bf16.msra.mxu0 %v2661
        %2681 = vmatpush.bf16.msra.mxu0 %v2660
        %2682 = vmatpush.bf16.msra.mxu0 %v2659
        %2683 = vmatmul.bf16.gmra.mxu0 %v2547
        %v2684 = vpop.f32.mrf.mxu0
        %v2685 = vadd.f32 0.0, %v2684
        %v2686 = vpop.f32.mrf.mxu0
        %v2687 = vadd.f32 0.0, %v2686
        %2688 = vdwg.mxu0
        %vm2689 = vcmp.ge.s32.totalorder %v1523, 8
        %vm2690 = vcmp.ge.s32.totalorder %v1527, 8
        %v2691 = vsel %vm2689, %v2609, 0.0
        %v2692 = vsel %vm2690, %v2607, 0.0
        %v2693 = vadd.f32 %v2691, %v2685
        %v2694 = vadd.f32 %v2692, %v2687
        %v2695 = vld [vmem:[%s47] sm:$0x1]
        %v2697 = vperm.slane %v2695, 0
        %v2699 = vadd.f32 %v2693, %v2697
        %v2700 = vadd.f32 %v2694, %v2697
        %v2701 = vmax.f32 %v2699, 0.0
        %v2702 = vmax.f32 %v2700, 0.0
        %v2703 = vpack.c.bf16 %v2702, %v2701
        %v2704 = vld [vmem:[#allocation22] sm:$0xf]
        %v2705 = vld [vmem:[#allocation22 + $0x4] sm:$0xf]
        %v2706 = vld [vmem:[#allocation22 + $0x8] sm:$0xf]
        %v2707 = vld [vmem:[#allocation22 + $0xc] sm:$0xf]
        %v2708 = vld [vmem:[#allocation22 + $0x10] sm:$0xf]
        %v2709 = vld [vmem:[#allocation22 + $0x14] sm:$0xf]
        %v2710 = vld [vmem:[#allocation22 + $0x18] sm:$0xf]
        %v2711 = vld [vmem:[#allocation22 + $0x1c] sm:$0xf]
        %v2712 = vld [vmem:[#allocation22 + $0x20] sm:$0xf]
        %v2713 = vld [vmem:[#allocation22 + $0x24] sm:$0xf]
        %v2714 = vld [vmem:[#allocation22 + $0x28] sm:$0xf]
        %v2715 = vld [vmem:[#allocation22 + $0x2c] sm:$0xf]
        %v2716 = vld [vmem:[#allocation22 + $0x30] sm:$0xf]
        %v2717 = vld [vmem:[#allocation22 + $0x34] sm:$0xf]
        %v2718 = vld [vmem:[#allocation22 + $0x38] sm:$0xf]
        %v2719 = vld [vmem:[#allocation22 + $0x3c] sm:$0xf]
        %v2736 = vunpack.c.l.b16 %v2704
        %v2737 = vunpack.c.l.b16 %v2705
        %v2738 = vunpack.c.l.b16 %v2706
        %v2739 = vunpack.c.l.b16 %v2707
        %v2740 = vunpack.c.l.b16 %v2708
        %v2741 = vunpack.c.l.b16 %v2709
        %v2742 = vunpack.c.l.b16 %v2710
        %v2743 = vunpack.c.l.b16 %v2711
        %v2744 = vunpack.c.l.b16 %v2712
        %v2745 = vunpack.c.l.b16 %v2713
        %v2746 = vunpack.c.l.b16 %v2714
        %v2747 = vunpack.c.l.b16 %v2715
        %v2748 = vunpack.c.l.b16 %v2716
        %v2749 = vunpack.c.l.b16 %v2717
        %v2750 = vunpack.c.l.b16 %v2718
        %v2751 = vunpack.c.l.b16 %v2719
        %v2752 = vpack.c.b16 %v2737, %v2736
        %v2753 = vpack.c.b16 %v2739, %v2738
        %v2754 = vpack.c.b16 %v2741, %v2740
        %v2755 = vpack.c.b16 %v2743, %v2742
        %v2756 = vpack.c.b16 %v2745, %v2744
        %v2757 = vpack.c.b16 %v2747, %v2746
        %v2758 = vpack.c.b16 %v2749, %v2748
        %v2759 = vpack.c.b16 %v2751, %v2750
        %2768 = vmatpush.bf16.msra.mxu0 %v2759
        %2769 = vmatpush.bf16.msra.mxu0 %v2758
        %2770 = vmatpush.bf16.msra.mxu0 %v2757
        %2771 = vmatpush.bf16.msra.mxu0 %v2756
        %2772 = vmatpush.bf16.msra.mxu0 %v2755
        %2773 = vmatpush.bf16.msra.mxu0 %v2754
        %2774 = vmatpush.bf16.msra.mxu0 %v2753
        %2775 = vmatpush.bf16.msra.mxu0 %v2752
        %2776 = vmatmul.bf16.gmra.mxu0 %v2703
        %v2777 = vpop.f32.mrf.mxu0
        %v2778 = vadd.f32 0.0, %v2777
        %v2779 = vpop.f32.mrf.mxu0
        %v2780 = vadd.f32 0.0, %v2779
        %2781 = vdwg.mxu0
        %v2782 = vld [vmem:[#allocation24] sm:$0xf]
        %v2783 = vld [vmem:[#allocation24 + $0x4] sm:$0xf]
        %v2784 = vld [vmem:[#allocation24 + $0x8] sm:$0xf]
        %v2785 = vld [vmem:[#allocation24 + $0xc] sm:$0xf]
        %v2786 = vld [vmem:[#allocation24 + $0x10] sm:$0xf]
        %v2787 = vld [vmem:[#allocation24 + $0x14] sm:$0xf]
        %v2788 = vld [vmem:[#allocation24 + $0x18] sm:$0xf]
        %v2789 = vld [vmem:[#allocation24 + $0x1c] sm:$0xf]
        %v2790 = vld [vmem:[#allocation24 + $0x20] sm:$0xf]
        %v2791 = vld [vmem:[#allocation24 + $0x24] sm:$0xf]
        %v2792 = vld [vmem:[#allocation24 + $0x28] sm:$0xf]
        %v2793 = vld [vmem:[#allocation24 + $0x2c] sm:$0xf]
        %v2794 = vld [vmem:[#allocation24 + $0x30] sm:$0xf]
        %v2795 = vld [vmem:[#allocation24 + $0x34] sm:$0xf]
        %v2796 = vld [vmem:[#allocation24 + $0x38] sm:$0xf]
        %v2797 = vld [vmem:[#allocation24 + $0x3c] sm:$0xf]
        %v2814 = vunpack.c.l.b16 %v2782
        %v2815 = vunpack.c.l.b16 %v2783
        %v2816 = vunpack.c.l.b16 %v2784
        %v2817 = vunpack.c.l.b16 %v2785
        %v2818 = vunpack.c.l.b16 %v2786
        %v2819 = vunpack.c.l.b16 %v2787
        %v2820 = vunpack.c.l.b16 %v2788
        %v2821 = vunpack.c.l.b16 %v2789
        %v2822 = vunpack.c.l.b16 %v2790
        %v2823 = vunpack.c.l.b16 %v2791
        %v2824 = vunpack.c.l.b16 %v2792
        %v2825 = vunpack.c.l.b16 %v2793
        %v2826 = vunpack.c.l.b16 %v2794
        %v2827 = vunpack.c.l.b16 %v2795
        %v2828 = vunpack.c.l.b16 %v2796
        %v2829 = vunpack.c.l.b16 %v2797
        %v2830 = vpack.c.b16 %v2815, %v2814
        %v2831 = vpack.c.b16 %v2817, %v2816
        %v2832 = vpack.c.b16 %v2819, %v2818
        %v2833 = vpack.c.b16 %v2821, %v2820
        %v2834 = vpack.c.b16 %v2823, %v2822
        %v2835 = vpack.c.b16 %v2825, %v2824
        %v2836 = vpack.c.b16 %v2827, %v2826
        %v2837 = vpack.c.b16 %v2829, %v2828
        %2846 = vmatpush.bf16.msra.mxu0 %v2837
        %2847 = vmatpush.bf16.msra.mxu0 %v2836
        %2848 = vmatpush.bf16.msra.mxu0 %v2835
        %2849 = vmatpush.bf16.msra.mxu0 %v2834
        %2850 = vmatpush.bf16.msra.mxu0 %v2833
        %2851 = vmatpush.bf16.msra.mxu0 %v2832
        %2852 = vmatpush.bf16.msra.mxu0 %v2831
        %2853 = vmatpush.bf16.msra.mxu0 %v2830
        %2854 = vmatmul.bf16.gmra.mxu0 %v2703
        %v2855 = vpop.f32.mrf.mxu0
        %v2856 = vadd.f32 0.0, %v2855
        %v2857 = vpop.f32.mrf.mxu0
        %v2858 = vadd.f32 0.0, %v2857
        %2859 = vdwg.mxu0
        %v2860 = vsel %vm2689, %v2780, 0.0
        %v2861 = vsel %vm2690, %v2778, 0.0
        %v2862 = vadd.f32 %v2860, %v2856
        %v2863 = vadd.f32 %v2861, %v2858
        %v2864 = vld [vmem:[%s53] sm:$0x1]
        %v2866 = vperm.slane %v2864, 0
        %v2868 = vadd.f32 %v2862, %v2866
        %v2869 = vadd.f32 %v2863, %v2866
        %v2870 = vmax.f32 %v2868, 0.0
        %v2871 = vmax.f32 %v2869, 0.0
        %v2872 = vunpack.c.l.bf16 %v2525
        %v2873 = vunpack.c.l.bf16 %v2526
        %v2874 = vadd.f32 %v2870, %v2872
        %v2875 = vadd.f32 %v2871, %v2873
        %v2876 = vmax.f32 %v2874, 0.0
        %v2877 = vmax.f32 %v2875, 0.0
        %v2878 = vpack.c.bf16 %v2877, %v2876
        %v2879 = vld [vmem:[#allocation25] sm:$0xf]
        %v2880 = vld [vmem:[#allocation25 + $0x4] sm:$0xf]
        %v2881 = vld [vmem:[#allocation25 + $0x8] sm:$0xf]
        %v2882 = vld [vmem:[#allocation25 + $0xc] sm:$0xf]
        %v2883 = vld [vmem:[#allocation25 + $0x10] sm:$0xf]
        %v2884 = vld [vmem:[#allocation25 + $0x14] sm:$0xf]
        %v2885 = vld [vmem:[#allocation25 + $0x18] sm:$0xf]
        %v2886 = vld [vmem:[#allocation25 + $0x1c] sm:$0xf]
        %v2887 = vld [vmem:[#allocation25 + $0x20] sm:$0xf]
        %v2888 = vld [vmem:[#allocation25 + $0x24] sm:$0xf]
        %v2889 = vld [vmem:[#allocation25 + $0x28] sm:$0xf]
        %v2890 = vld [vmem:[#allocation25 + $0x2c] sm:$0xf]
        %v2891 = vld [vmem:[#allocation25 + $0x30] sm:$0xf]
        %v2892 = vld [vmem:[#allocation25 + $0x34] sm:$0xf]
        %v2893 = vld [vmem:[#allocation25 + $0x38] sm:$0xf]
        %v2894 = vld [vmem:[#allocation25 + $0x3c] sm:$0xf]
        %v2895 = vld [vmem:[#allocation27] sm:$0x1]
        %v2897 = vperm.slane %v2895, 0
        %v2915 = vunpack.c.l.b16 %v2879
        %v2916 = vunpack.c.l.b16 %v2880
        %v2917 = vunpack.c.l.b16 %v2881
        %v2918 = vunpack.c.l.b16 %v2882
        %v2919 = vunpack.c.l.b16 %v2883
        %v2920 = vunpack.c.l.b16 %v2884
        %v2921 = vunpack.c.l.b16 %v2885
        %v2922 = vunpack.c.l.b16 %v2886
        %v2923 = vunpack.c.l.b16 %v2887
        %v2924 = vunpack.c.l.b16 %v2888
        %v2925 = vunpack.c.l.b16 %v2889
        %v2926 = vunpack.c.l.b16 %v2890
        %v2927 = vunpack.c.l.b16 %v2891
        %v2928 = vunpack.c.l.b16 %v2892
        %v2929 = vunpack.c.l.b16 %v2893
        %v2930 = vunpack.c.l.b16 %v2894
        %v2931 = vpack.c.b16 %v2916, %v2915
        %v2932 = vpack.c.b16 %v2918, %v2917
        %v2933 = vpack.c.b16 %v2920, %v2919
        %v2934 = vpack.c.b16 %v2922, %v2921
        %v2935 = vpack.c.b16 %v2924, %v2923
        %v2936 = vpack.c.b16 %v2926, %v2925
        %v2937 = vpack.c.b16 %v2928, %v2927
        %v2938 = vpack.c.b16 %v2930, %v2929
        %2947 = vmatpush.bf16.msra.mxu0 %v2938
        %2948 = vmatpush.bf16.msra.mxu0 %v2937
        %2949 = vmatpush.bf16.msra.mxu0 %v2936
        %2950 = vmatpush.bf16.msra.mxu0 %v2935
        %2951 = vmatpush.bf16.msra.mxu0 %v2934
        %2952 = vmatpush.bf16.msra.mxu0 %v2933
        %2953 = vmatpush.bf16.msra.mxu0 %v2932
        %2954 = vmatpush.bf16.msra.mxu0 %v2931
        %2955 = vmatmul.bf16.gmra.mxu0 %v2878
        %v2956 = vpop.f32.mrf.mxu0
        %v2957 = vadd.f32 %v2897, %v2956
        %v2958 = vpop.f32.mrf.mxu0
        %v2959 = vadd.f32 %v2897, %v2958
        %2960 = vdwg.mxu0
        %v2961 = vmax.f32 %v2957, 0.0
        %v2962 = vmax.f32 %v2959, 0.0
        %v2963 = vpack.c.bf16 %v2962, %v2961
        %v2964 = vld [vmem:[#allocation28] sm:$0xf]
        %v2965 = vld [vmem:[#allocation28 + $0x4] sm:$0xf]
        %v2966 = vld [vmem:[#allocation28 + $0x8] sm:$0xf]
        %v2967 = vld [vmem:[#allocation28 + $0xc] sm:$0xf]
        %v2968 = vld [vmem:[#allocation28 + $0x10] sm:$0xf]
        %v2969 = vld [vmem:[#allocation28 + $0x14] sm:$0xf]
        %v2970 = vld [vmem:[#allocation28 + $0x18] sm:$0xf]
        %v2971 = vld [vmem:[#allocation28 + $0x1c] sm:$0xf]
        %v2972 = vld [vmem:[#allocation28 + $0x20] sm:$0xf]
        %v2973 = vld [vmem:[#allocation28 + $0x24] sm:$0xf]
        %v2974 = vld [vmem:[#allocation28 + $0x28] sm:$0xf]
        %v2975 = vld [vmem:[#allocation28 + $0x2c] sm:$0xf]
        %v2976 = vld [vmem:[#allocation28 + $0x30] sm:$0xf]
        %v2977 = vld [vmem:[#allocation28 + $0x34] sm:$0xf]
        %v2978 = vld [vmem:[#allocation28 + $0x38] sm:$0xf]
        %v2979 = vld [vmem:[#allocation28 + $0x3c] sm:$0xf]
        %v2980 = vld [vmem:[#allocation30] sm:$0x1]
        %v2982 = vperm.slane %v2980, 0
        %v3000 = vunpack.c.l.b16 %v2964
        %v3001 = vunpack.c.l.b16 %v2965
        %v3002 = vunpack.c.l.b16 %v2966
        %v3003 = vunpack.c.l.b16 %v2967
        %v3004 = vunpack.c.l.b16 %v2968
        %v3005 = vunpack.c.l.b16 %v2969
        %v3006 = vunpack.c.l.b16 %v2970
        %v3007 = vunpack.c.l.b16 %v2971
        %v3008 = vunpack.c.l.b16 %v2972
        %v3009 = vunpack.c.l.b16 %v2973
        %v3010 = vunpack.c.l.b16 %v2974
        %v3011 = vunpack.c.l.b16 %v2975
        %v3012 = vunpack.c.l.b16 %v2976
        %v3013 = vunpack.c.l.b16 %v2977
        %v3014 = vunpack.c.l.b16 %v2978
        %v3015 = vunpack.c.l.b16 %v2979
        %v3016 = vpack.c.b16 %v3001, %v3000
        %v3017 = vpack.c.b16 %v3003, %v3002
        %v3018 = vpack.c.b16 %v3005, %v3004
        %v3019 = vpack.c.b16 %v3007, %v3006
        %v3020 = vpack.c.b16 %v3009, %v3008
        %v3021 = vpack.c.b16 %v3011, %v3010
        %v3022 = vpack.c.b16 %v3013, %v3012
        %v3023 = vpack.c.b16 %v3015, %v3014
        %3032 = vmatpush.bf16.msra.mxu0 %v3023
        %3033 = vmatpush.bf16.msra.mxu0 %v3022
        %3034 = vmatpush.bf16.msra.mxu0 %v3021
        %3035 = vmatpush.bf16.msra.mxu0 %v3020
        %3036 = vmatpush.bf16.msra.mxu0 %v3019
        %3037 = vmatpush.bf16.msra.mxu0 %v3018
        %3038 = vmatpush.bf16.msra.mxu0 %v3017
        %3039 = vmatpush.bf16.msra.mxu0 %v3016
        %3040 = vmatmul.bf16.gmra.mxu0 %v2963
        %v3041 = vpop.f32.mrf.mxu0
        %v3042 = vadd.f32 %v2982, %v3041
        %v3043 = vpop.f32.mrf.mxu0
        %v3044 = vadd.f32 %v2982, %v3043
        %3045 = vdwg.mxu0
        %v3046 = vmax.f32 %v3042, 0.0
        %v3047 = vmax.f32 %v3044, 0.0
        %v3048 = vpack.c.bf16 %v3047, %v3046
        %v3049 = vld [vmem:[#allocation31] sm:$0xf]
        %v3050 = vld [vmem:[#allocation31 + $0x4] sm:$0xf]
        %v3051 = vld [vmem:[#allocation31 + $0x8] sm:$0xf]
        %v3052 = vld [vmem:[#allocation31 + $0xc] sm:$0xf]
        %v3053 = vld [vmem:[#allocation31 + $0x10] sm:$0xf]
        %v3054 = vld [vmem:[#allocation31 + $0x14] sm:$0xf]
        %v3055 = vld [vmem:[#allocation31 + $0x18] sm:$0xf]
        %v3056 = vld [vmem:[#allocation31 + $0x1c] sm:$0xf]
        %v3057 = vld [vmem:[#allocation31 + $0x20] sm:$0xf]
        %v3058 = vld [vmem:[#allocation31 + $0x24] sm:$0xf]
        %v3059 = vld [vmem:[#allocation31 + $0x28] sm:$0xf]
        %v3060 = vld [vmem:[#allocation31 + $0x2c] sm:$0xf]
        %v3061 = vld [vmem:[#allocation31 + $0x30] sm:$0xf]
        %v3062 = vld [vmem:[#allocation31 + $0x34] sm:$0xf]
        %v3063 = vld [vmem:[#allocation31 + $0x38] sm:$0xf]
        %v3064 = vld [vmem:[#allocation31 + $0x3c] sm:$0xf]
        %v3065 = vld [vmem:[#allocation33] sm:$0x1]
        %v3067 = vperm.slane %v3065, 0
        %v3085 = vunpack.c.l.b16 %v3049
        %v3086 = vunpack.c.l.b16 %v3050
        %v3087 = vunpack.c.l.b16 %v3051
        %v3088 = vunpack.c.l.b16 %v3052
        %v3089 = vunpack.c.l.b16 %v3053
        %v3090 = vunpack.c.l.b16 %v3054
        %v3091 = vunpack.c.l.b16 %v3055
        %v3092 = vunpack.c.l.b16 %v3056
        %v3093 = vunpack.c.l.b16 %v3057
        %v3094 = vunpack.c.l.b16 %v3058
        %v3095 = vunpack.c.l.b16 %v3059
        %v3096 = vunpack.c.l.b16 %v3060
        %v3097 = vunpack.c.l.b16 %v3061
        %v3098 = vunpack.c.l.b16 %v3062
        %v3099 = vunpack.c.l.b16 %v3063
        %v3100 = vunpack.c.l.b16 %v3064
        %v3101 = vpack.c.b16 %v3086, %v3085
        %v3102 = vpack.c.b16 %v3088, %v3087
        %v3103 = vpack.c.b16 %v3090, %v3089
        %v3104 = vpack.c.b16 %v3092, %v3091
        %v3105 = vpack.c.b16 %v3094, %v3093
        %v3106 = vpack.c.b16 %v3096, %v3095
        %v3107 = vpack.c.b16 %v3098, %v3097
        %v3108 = vpack.c.b16 %v3100, %v3099
        %3117 = vmatpush.bf16.msra.mxu0 %v3108
        %3118 = vmatpush.bf16.msra.mxu0 %v3107
        %3119 = vmatpush.bf16.msra.mxu0 %v3106
        %3120 = vmatpush.bf16.msra.mxu0 %v3105
        %3121 = vmatpush.bf16.msra.mxu0 %v3104
        %3122 = vmatpush.bf16.msra.mxu0 %v3103
        %3123 = vmatpush.bf16.msra.mxu0 %v3102
        %3124 = vmatpush.bf16.msra.mxu0 %v3101
        %3125 = vmatmul.bf16.gmra.mxu0 %v3048
        %v3126 = vpop.f32.mrf.mxu0
        %v3127 = vadd.f32 %v3067, %v3126
        %v3128 = vpop.f32.mrf.mxu0
        %v3129 = vadd.f32 %v3067, %v3128
        %3130 = vdwg.mxu0
        %3131 = vst [vmem:[%s1355] sm:$0xff] %v3127
        %3132 = vst [vmem:[%s1355 + $0x8] sm:$0xff] %v3129
        %p3133 = scmp.lt.s32.totalorder %s89, 1
        %s3134 = scalar_select %p3133, %s89, 1
        %s3135 = smul.addr %s3134, 2
        %s3136 = smul.addr %s3135, 8
        %s3137 = scalar_lea.vmem %s67, %s3136
        // Predicated region
        $region237: #{temporal_conv_static_e_forward.1} parent=151 // pred_check
          %p3138 = pneg %p805
        $region238: #{temporal_conv_static_e_forward.1} parent=151 // pred_check_branch
          %3140 = sbr.rel (%p3138) target = $region240
        $region239: #{temporal_conv_static_e_forward.1} parent=151 // pred_region
          _
        $region240: #{temporal_conv_static_e_forward.1} parent=151 // pred_fallthru
          _
      $region152: #{temporal_conv_static_e_forward.1} parent=5 // pred_fallthru
        _
      %p3141 = scmp.le.s32.totalorder 2, %s84
      // Predicated region
      $region241: #{temporal_conv_static_e_forward.1} parent=5 // pred_check
        %p3142 = pneg %p3141
      $region242: #{temporal_conv_static_e_forward.1} parent=5 // pred_check_branch
        %3144 = sbr.rel (%p3142) target = $region244
      $region243: #{temporal_conv_static_e_forward.1} parent=5 // pred_region
        %s3145 = ssub.s32 %s84, 2
        // Predicated region
        $region245: #{temporal_conv_static_e_forward.1} parent=243 // pred_check
          %p3146 = pneg %p811
        $region246: #{temporal_conv_static_e_forward.1} parent=243 // pred_check_branch
          %3148 = sbr.rel (%p3146) target = $region248
        $region247: #{temporal_conv_static_e_forward.1} parent=243 // pred_region
          %p3149 = scmp.lt.s32.totalorder %s90, 1
          %s3150 = scalar_select %p3149, %s90, 1
          %s3151 = smul.addr %s3150, 2
          %s3152 = smul.addr %s3151, 8
          %s3153 = scalar_lea.vmem %s67, %s3152
        $region248: #{temporal_conv_static_e_forward.1} parent=243 // pred_fallthru
          _
      $region244: #{temporal_conv_static_e_forward.1} parent=5 // pred_fallthru
        _
    $region6: #{temporal_conv_static_e_forward.1} parent=1 // loop_footer
      %s88 = sadd.s32 1, %s84
    $region7: #{temporal_conv_static_e_forward.1} parent=1 // loop_footer_branch
      %83 = sbr.rel target = $region3
    $region8: #{temporal_conv_static_e_forward.1} parent=1 // loop_exit
      _
    %3154 = vsyncpa [#allocation3], 1
    %s3155 = scalar_lea.sflag [#allocation3], 1
    %3156 = vsyncpa %s3155, 1
    %3157 = vsyncpa [#allocation5], 1
    %3158 = vsyncpa [#allocation8], 1
    %3159 = vsyncpa [#allocation11], 1
    %3160 = vsyncpa [#allocation14], 1
    %3161 = vsyncpa [#allocation17], 1
    %3162 = vsyncpa [#allocation20], 1
    %3163 = vsyncpa [#allocation23], 1
    %3164 = vsyncpa [#allocation26], 1
    %3165 = vsyncpa [#allocation29], 1
    %3166 = vsyncpa [#allocation32], 1

</llo_original>
